<compile_context>
chip_gen: v7x
topology: tpu7x:2x2x1
jax: 0.10.0
libtpu: 0.0.40
codegen_flags: <defaults>
</compile_context>

<pallas_src>
import functools
import math

import jax
import jax.numpy as jnp
from jax.experimental import pallas as pl
from jax.experimental.pallas import tpu as pltpu

F32 = jnp.float32
BF16 = jnp.bfloat16


# ------------------------------ device helpers --------------------------------

def _device_kind():
    try:
        return jax.devices()[0].device_kind.lower()
    except Exception:
        return ""


def _vmem_limit_bytes():
    kind = _device_kind()
    if "v7" in kind or "7x" in kind:
        return 48 * 1024 * 1024       # v7x: 64 MiB physical VMEM -- leave headroom
    if "v5" in kind or "v6" in kind:
        return 100 * 1024 * 1024      # v5e/v6e: 128 MiB physical VMEM
    return 32 * 1024 * 1024           # conservative default on older chips


def _num_batch_blocks(batch, seq):
    """Split batch across TensorCores only on 2-TC chips (v7x); on 1-TC chips splitting
    would just re-stream the per-layer weights once per block for no gain."""
    kind = _device_kind()
    two_tc = ("v7" in kind) or ("7x" in kind)
    if two_tc and batch % 2 == 0 and ((batch // 2) * seq) % 8 == 0:
        return 2
    return 1


# ----------------------------- in-kernel helpers -------------------------------

def _layer_norm(x, g, b, eps=1e-5):
    mu = jnp.mean(x, axis=-1, keepdims=True)
    var = jnp.mean(jnp.square(x - mu), axis=-1, keepdims=True)
    return (x - mu) * jax.lax.rsqrt(var + eps) * g + b


def _matmul(x_f32, w_bf16, b_f32):
    """bf16 MXU matmul with f32 accumulation, f32 bias add."""
    return jnp.dot(x_f32.astype(BF16), w_bf16,
                   preferred_element_type=F32) + b_f32


def _split_heads(t2d, B, S, H, hd):
    """(B*S, H*hd) -> (H*B, S, hd), heads taken from contiguous column blocks."""
    if hd % 128 == 0:
        # Lane-aligned head dim: single loop-free layout transform (cheap relayout).
        t3 = t2d.reshape(B * S, H, hd)
        t3 = pltpu.einshape("mhd->hmd", t3)           # (H, B*S, hd)
        return t3.reshape(H * B, S, hd)
    # Sub-lane head dim (demo shapes): explicit column slices + row-stack.
    cols = [t2d[:, h * hd:(h + 1) * hd] for h in range(H)]
    return jnp.concatenate(cols, axis=0).reshape(H * B, S, hd)


def _merge_heads(o3, B, S, H, hd):
    """(H*B, S, hd) -> (B*S, H*hd)."""
    if hd % 128 == 0:
        t3 = o3.reshape(H, B * S, hd)
        t3 = pltpu.einshape("hmd->mhd", t3)           # (B*S, H, hd)
        return t3.reshape(B * S, H * hd)
    o2 = o3.reshape(H * B * S, hd)
    heads = [o2[h * B * S:(h + 1) * B * S, :] for h in range(H)]
    return jnp.concatenate(heads, axis=-1)


def _attention(q2d, k2d, v2d, seq, nhead):
    """Head-batched attention on 2-D (rows, D) slabs: one QK^T einsum and one PV einsum
    over all (batch, head) pairs -- no per-head matmul loop."""
    BS, D = q2d.shape
    B = BS // seq
    hd = D // nhead
    scale = 1.0 / math.sqrt(hd)

    # Fold the softmax scale into q (small slab) instead of the (H*B, S, S) scores.
    qh = _split_heads(q2d * scale, B, seq, nhead, hd).astype(BF16)
    kh = _split_heads(k2d, B, seq, nhead, hd).astype(BF16)
    vh = _split_heads(v2d, B, seq, nhead, hd).astype(BF16)

    # TODO(synk): kv-tiled online softmax (flash) for long sequences.
    s = jnp.einsum('bqd,bkd->bqk', qh, kh, preferred_element_type=F32)   # (H*B, S, S)
    m = jnp.max(s, axis=-1, keepdims=True)
    e = jnp.exp(s - m)
    p = e * pl.reciprocal(jnp.sum(e, axis=-1, keepdims=True), approx=True)
    o = jnp.einsum('bqk,bkd->bqd', p.astype(BF16), vh,
                   preferred_element_type=F32)                            # (H*B, S, hd)
    return _merge_heads(o, B, seq, nhead, hd)                             # (B*S, D) f32


def _ffn(x, w1_ref, b1_ref, w2_ref, b2_ref, chunk):
    """relu FFN chunked over dff so the live (rows, dff) intermediate stays small."""
    rows = x.shape[0]
    d_out = w2_ref.shape[-1]
    dff = w1_ref.shape[-1]
    x_bf = x.astype(BF16)
    acc = jnp.zeros((rows, d_out), F32)
    for c in range(dff // chunk):                     # static, lane/sublane-aligned slices
        lo = c * chunk
        h = jnp.maximum(
            jnp.dot(x_bf, w1_ref[0, :, lo:lo + chunk], preferred_element_type=F32)
            + b1_ref[0, :, lo:lo + chunk], 0.0)
        acc = acc + jnp.dot(h.astype(BF16), w2_ref[0, lo:lo + chunk, :],
                            preferred_element_type=F32)
    return acc + b2_ref[0]


# --------------------------------- kernels -------------------------------------

def decoder_stack_kernel(x_emb_ref, cos_ref, sin_ref,
                         sa_wqkv_ref, sa_bqkv_ref, sa_wo_ref, sa_bo_ref,
                         ln1_g_ref, ln1_b_ref,
                         ca_wq_ref, ca_bq_ref, ca_wkv_ref, ca_bkv_ref,
                         ca_wo_ref, ca_bo_ref,
                         ln2_g_ref, ln2_b_ref,
                         ff_w1_ref, ff_b1_ref, ff_w2_ref, ff_b2_ref,
                         ln3_g_ref, ln3_b_ref,
                         out_ref, x_sc, mem_sc, *, seq, nhead, dff_chunk):
    """Grid = (batch_block ["parallel"], layer ["arbitrary"]).

    One grid step = one decoder layer for one batch block.  RoPE is computed once at
    layer 0; the residual stream (x_sc) and the cross-attention memory (mem_sc) live in
    VMEM scratch across all layers of the block -- no per-layer HBM round trips."""
    layer = pl.program_id(1)

    @pl.when(layer == 0)
    def _():
        x0 = x_emb_ref[...]                           # (rows, D) f32 embedding
        d = x0.shape[-1]
        half = d // 2
        if d % 128 == 0:
            rot = pltpu.roll(x0, half, axis=-1)       # XLU rotation, lane-aligned
        else:
            rot = jnp.concatenate([x0[:, half:], x0[:, :half]], axis=-1)
        # rotate_half's sign is folded into the precomputed sin table.
        r = x0 * cos_ref[...] + rot * sin_ref[...]
        x_sc[...] = r
        mem_sc[...] = r

    x = x_sc[...]                                     # residual stream (rows, D) f32
    mem = mem_sc[...]                                 # cross-attn memory == RoPE output
    D = x.shape[-1]

    # --- self-attention (fused QKV projection), post-norm ---
    qkv = _matmul(x, sa_wqkv_ref[0], sa_bqkv_ref[0])                  # (rows, 3D)
    sa = _attention(qkv[:, :D], qkv[:, D:2 * D], qkv[:, 2 * D:], seq, nhead)
    sa = _matmul(sa, sa_wo_ref[0], sa_bo_ref[0])
    x = _layer_norm(x + sa, ln1_g_ref[0], ln1_b_ref[0])

    # --- cross-attention (memory = RoPE output), fused K/V projection ---
    q = _matmul(x, ca_wq_ref[0], ca_bq_ref[0])
    kv = _matmul(mem, ca_wkv_ref[0], ca_bkv_ref[0])                   # (rows, 2D)
    ca = _attention(q, kv[:, :D], kv[:, D:], seq, nhead)
    ca = _matmul(ca, ca_wo_ref[0], ca_bo_ref[0])
    x = _layer_norm(x + ca, ln2_g_ref[0], ln2_b_ref[0])

    # --- feed-forward (relu), dff-chunked ---
    f = _ffn(x, ff_w1_ref, ff_b1_ref, ff_w2_ref, ff_b2_ref, dff_chunk)
    x = _layer_norm(x + f, ln3_g_ref[0], ln3_b_ref[0])

    x_sc[...] = x

    @pl.when(layer == pl.num_programs(1) - 1)
    def _():
        out_ref[...] = x


def fc_out_kernel(x_ref, w_ref, b_ref, o_ref):
    # x: (BS, D) f32 resident; w: (D, vt) bf16 streamed once; b: (1, vt) f32.
    o_ref[...] = jnp.dot(x_ref[...].astype(BF16), w_ref[...],
                         preferred_element_type=F32) + b_ref[...]


# ------------------------------ pallas wrappers --------------------------------

def decoder_stack(x_emb, cos, sin, sp, seq, nhead, d_model, dff):
    """Single pallas_call over (batch_blocks, num_layers); weights indexed per layer,
    residual + memory resident in VMEM scratch."""
    L = sp['sa_wqkv'].shape[0]
    BS = x_emb.shape[0]
    B = BS // seq

    NB = _num_batch_blocks(B, seq)              # 2 on v7x (both TensorCores), else 1
    rows = BS // NB

    def act_spec(a):
        return pl.BlockSpec((rows, a.shape[-1]), lambda b, l: (b, 0))

    def per_layer(a):
        return pl.BlockSpec((1,) + a.shape[1:], lambda b, l: (l, 0, 0))
    # TODO(synk): if xprof shows exposed DMA on ff_w1/ff_w2, set pipeline_mode=pl.Buffered(3)
    #             on just those two specs.

    weights = (sp['sa_wqkv'], sp['sa_bqkv'], sp['sa_wo'], sp['sa_bo'],
               sp['ln1_g'], sp['ln1_b'],
               sp['ca_wq'], sp['ca_bq'], sp['ca_wkv'], sp['ca_bkv'],
               sp['ca_wo'], sp['ca_bo'],
               sp['ln2_g'], sp['ln2_b'],
               sp['ff_w1'], sp['ff_b1'], sp['ff_w2'], sp['ff_b2'],
               sp['ln3_g'], sp['ln3_b'])
    args = (x_emb, cos, sin) + weights
    in_specs = [act_spec(x_emb), act_spec(cos), act_spec(sin)] \
        + [per_layer(a) for a in weights]

    dff_chunk = 512 if (dff % 512 == 0 and dff > 512) else dff

    D, S = d_model, seq
    attn_flops = 4 * B * S * S * D
    flops_layer = (2 * BS * D * 3 * D + attn_flops + 2 * BS * D * D      # self-attn
                   + 2 * BS * D * D + 2 * BS * D * 2 * D                 # cross q + kv proj
                   + attn_flops + 2 * BS * D * D                         # cross attn + out
                   + 4 * BS * D * dff)                                   # ffn
    cost = pl.CostEstimate(
        flops=int(L * flops_layer),
        transcendentals=int(L * 2 * B * nhead * S * S),
        bytes_accessed=int(NB * sum(w.size * w.dtype.itemsize for w in weights)
                           + 4 * BS * D * 4))

    return pl.pallas_call(
        functools.partial(decoder_stack_kernel, seq=seq, nhead=nhead,
                          dff_chunk=dff_chunk),
        out_shape=jax.ShapeDtypeStruct((BS, d_model), F32),
        grid_spec=pltpu.PrefetchScalarGridSpec(
            num_scalar_prefetch=0,
            grid=(NB, L),
            in_specs=in_specs,
            out_specs=pl.BlockSpec((rows, d_model), lambda b, l: (b, 0)),
            scratch_shapes=[pltpu.VMEM((rows, d_model), F32),    # residual stream
                            pltpu.VMEM((rows, d_model), F32)]),  # cross-attn memory
        compiler_params=pltpu.CompilerParams(
            dimension_semantics=("parallel", "arbitrary"),
            vmem_limit_bytes=_vmem_limit_bytes()),
        cost_estimate=cost,
    )(*args)


def fc_out(x2d, w_bf16, b_f32):
    """Grid only over lane-dense vocab tiles: activation block covers all rows and stays
    resident, so the (D, vocab) weight is streamed from HBM exactly once."""
    BS, D = x2d.shape
    Vp = w_bf16.shape[-1]
    vt = 512 if Vp % 512 == 0 else (256 if Vp % 256 == 0 else 128)
    # TODO(synk): for very large BS (activation block > ~16 MiB) add a row-tile axis
    #             (rows innermost so the weight block index stays constant).
    cost = pl.CostEstimate(
        flops=int(2 * BS * D * Vp), transcendentals=0,
        bytes_accessed=int(x2d.size * 4 + w_bf16.size * 2 + b_f32.size * 4 + BS * Vp * 4))
    return pl.pallas_call(
        fc_out_kernel,
        out_shape=jax.ShapeDtypeStruct((BS, Vp), F32),
        grid_spec=pltpu.PrefetchScalarGridSpec(
            num_scalar_prefetch=0,
            grid=(Vp // vt,),
            in_specs=[pl.BlockSpec((BS, D), lambda j: (0, 0)),
                      pl.BlockSpec((D, vt), lambda j: (0, j)),
                      pl.BlockSpec((1, vt), lambda j: (0, j))],
            out_specs=pl.BlockSpec((BS, vt), lambda j: (0, j))),
        compiler_params=pltpu.CompilerParams(
            dimension_semantics=("parallel",),
            vmem_limit_bytes=_vmem_limit_bytes()),
        cost_estimate=cost,
    )(x2d, w_bf16, b_f32)


# ---------------------------- params & full forward ----------------------------

def rope_tables(seq_len, dim, batch):
    inv_freq = 1.0 / (10000.0 ** (jnp.arange(0, dim, 2, dtype=F32) / dim))
    t = jnp.arange(seq_len, dtype=F32)
    freqs = jnp.einsum('i,j->ij', t, inv_freq)           # (S, D/2)
    emb = jnp.concatenate([freqs, freqs], axis=-1)       # (S, D)
    cos = jnp.cos(emb)
    # fold rotate_half's sign ([-x2, x1]) into the sin table
    sign = jnp.concatenate([-jnp.ones((dim // 2,), F32), jnp.ones((dim // 2,), F32)])
    sin = jnp.sin(emb) * sign
    return jnp.tile(cos, (batch, 1)), jnp.tile(sin, (batch, 1))   # (B*S, D)


def init_params(key, vocab_size, d_model, num_layers, dff):
    kE, kF, kL = jax.random.split(key, 3)
    layer_keys = jax.random.split(kL, num_layers)
    s = 0.02

    def one_layer(k):
        ks = jax.random.split(k, 6)
        return dict(
            sa_wqkv=jax.random.normal(ks[0], (d_model, 3 * d_model), F32) * s,
            sa_bqkv=jnp.zeros((1, 3 * d_model), F32),
            sa_wo=jax.random.normal(ks[1], (d_model, d_model), F32) * s,
            sa_bo=jnp.zeros((1, d_model), F32),
            ln1_g=jnp.ones((1, d_model), F32), ln1_b=jnp.zeros((1, d_model), F32),
            ca_wqkv=jax.random.normal(ks[2], (d_model, 3 * d_model), F32) * s,
            ca_bqkv=jnp.zeros((1, 3 * d_model), F32),
            ca_wo=jax.random.normal(ks[3], (d_model, d_model), F32) * s,
            ca_bo=jnp.zeros((1, d_model), F32),
            ln2_g=jnp.ones((1, d_model), F32), ln2_b=jnp.zeros((1, d_model), F32),
            ff_w1=jax.random.normal(ks[4], (d_model, dff), F32) * s,
            ff_b1=jnp.zeros((1, dff), F32),
            ff_w2=jax.random.normal(ks[5], (dff, d_model), F32) * s,
            ff_b2=jnp.zeros((1, d_model), F32),
            ln3_g=jnp.ones((1, d_model), F32), ln3_b=jnp.zeros((1, d_model), F32),
        )

    layers = [one_layer(k) for k in layer_keys]

    def stack(name):
        return jnp.stack([lp[name] for lp in layers])

    D = d_model
    stacked = dict(
        sa_wqkv=stack('sa_wqkv').astype(BF16), sa_bqkv=stack('sa_bqkv'),
        sa_wo=stack('sa_wo').astype(BF16), sa_bo=stack('sa_bo'),
        ln1_g=stack('ln1_g'), ln1_b=stack('ln1_b'),
        # cross-attn in_proj split into q / fused kv (avoids in-kernel weight column slices)
        ca_wq=stack('ca_wqkv')[:, :, :D].astype(BF16),
        ca_bq=stack('ca_bqkv')[:, :, :D],
        ca_wkv=stack('ca_wqkv')[:, :, D:].astype(BF16),
        ca_bkv=stack('ca_bqkv')[:, :, D:],
        ca_wo=stack('ca_wo').astype(BF16), ca_bo=stack('ca_bo'),
        ln2_g=stack('ln2_g'), ln2_b=stack('ln2_b'),
        ff_w1=stack('ff_w1').astype(BF16), ff_b1=stack('ff_b1'),
        ff_w2=stack('ff_w2').astype(BF16), ff_b2=stack('ff_b2'),
        ln3_g=stack('ln3_g'), ln3_b=stack('ln3_b'),
    )

    # lane-dense fc_out: pad vocab to a multiple of 256 with zero columns
    vocab_pad = ((vocab_size + 255) // 256) * 256
    fc_w = jax.random.normal(kF, (d_model, vocab_size), F32) * s
    fc_w_pad = jnp.zeros((d_model, vocab_pad), F32).at[:, :vocab_size].set(fc_w)

    return dict(
        embedding=jax.random.normal(kE, (vocab_size, d_model), F32) * s,
        fc_w=fc_w_pad.astype(BF16),
        fc_b=jnp.zeros((1, vocab_pad), F32),
        layers=stacked,
    )


def decoder_only_transformer(tokens, params, nhead, dff, vocab_size):
    B, S = tokens.shape
    # embedding lookup: data-dependent gather kept in plain JAX
    x = params['embedding'][tokens]                      # (B, S, D)
    D = x.shape[-1]
    x2d = x.reshape(B * S, D).astype(F32)                # 2-D slab for all kernels
    cos, sin = rope_tables(S, D, B)
    out2d = decoder_stack(x2d, cos, sin, params['layers'], S, nhead, D, dff)
    logits = fc_out(out2d, params['fc_w'], params['fc_b'])           # (B*S, Vpad)
    return logits[:, :vocab_size].reshape(B, S, vocab_size)


# ----------------------------------- main ---------------------------------------

if __name__ == "__main__":
    vocab_size = 64
    d_model = 32
    nhead = 4
    num_layers = 2
    max_seq_len = 16
    dff = 2048          # PyTorch nn.TransformerDecoderLayer default dim_feedforward

    batch, seq = 2, 8
    key = jax.random.PRNGKey(0)
    pkey, dkey = jax.random.split(key)

    params = init_params(pkey, vocab_size, d_model, num_layers, dff)
    tokens = jax.random.randint(dkey, (batch, seq), 0, vocab_size, dtype=jnp.int32)

    out = decoder_only_transformer(tokens, params, nhead, dff, vocab_size)
    out = jax.block_until_ready(out)
    assert out.shape == (batch, seq, vocab_size), out.shape
    assert out.dtype == jnp.float32
    assert bool(jnp.all(jnp.isfinite(out)))
    print("KERNEL_OK")
</pallas_src>

<mosaic_0001>
module attributes {stable_mosaic.version = 11 : i64} {
  func.func @decoder_stack_kernel(%arg0: i32, %arg1: i32, %arg2: memref<16x32xf32, #tpu.memory_space<vmem>>, %arg3: memref<16x32xf32, #tpu.memory_space<vmem>>, %arg4: memref<16x32xf32, #tpu.memory_space<vmem>>, %arg5: memref<1x32x96xbf16, #tpu.memory_space<vmem>>, %arg6: memref<1x1x96xf32, #tpu.memory_space<vmem>>, %arg7: memref<1x32x32xbf16, #tpu.memory_space<vmem>>, %arg8: memref<1x1x32xf32, #tpu.memory_space<vmem>>, %arg9: memref<1x1x32xf32, #tpu.memory_space<vmem>>, %arg10: memref<1x1x32xf32, #tpu.memory_space<vmem>>, %arg11: memref<1x32x32xbf16, #tpu.memory_space<vmem>>, %arg12: memref<1x1x32xf32, #tpu.memory_space<vmem>>, %arg13: memref<1x32x64xbf16, #tpu.memory_space<vmem>>, %arg14: memref<1x1x64xf32, #tpu.memory_space<vmem>>, %arg15: memref<1x32x32xbf16, #tpu.memory_space<vmem>>, %arg16: memref<1x1x32xf32, #tpu.memory_space<vmem>>, %arg17: memref<1x1x32xf32, #tpu.memory_space<vmem>>, %arg18: memref<1x1x32xf32, #tpu.memory_space<vmem>>, %arg19: memref<1x32x2048xbf16, #tpu.memory_space<vmem>>, %arg20: memref<1x1x2048xf32, #tpu.memory_space<vmem>>, %arg21: memref<1x2048x32xbf16, #tpu.memory_space<vmem>>, %arg22: memref<1x1x32xf32, #tpu.memory_space<vmem>>, %arg23: memref<1x1x32xf32, #tpu.memory_space<vmem>>, %arg24: memref<1x1x32xf32, #tpu.memory_space<vmem>>, %arg25: memref<16x32xf32, #tpu.memory_space<vmem>>, %arg26: memref<16x32xf32, #tpu.memory_space<vmem>>, %arg27: memref<16x32xf32, #tpu.memory_space<vmem>>) attributes {dimension_semantics = [#tpu.dimension_semantics<parallel>, #tpu.dimension_semantics<arbitrary>], iteration_bounds = array<i64: 1, 2>, scalar_prefetch = 0 : i64, scratch_operands = 2 : i64, tpu.core_type = #tpu.core_type<tc>, window_params = [{transform_indices = @transform_0, window_bounds = array<i64: 16, 32>}, {transform_indices = @transform_1, window_bounds = array<i64: 16, 32>}, {transform_indices = @transform_2, window_bounds = array<i64: 16, 32>}, {transform_indices = @transform_3, window_bounds = array<i64: 1, 32, 96>}, {transform_indices = @transform_4, window_bounds = array<i64: 1, 1, 96>}, {transform_indices = @transform_5, window_bounds = array<i64: 1, 32, 32>}, {transform_indices = @transform_6, window_bounds = array<i64: 1, 1, 32>}, {transform_indices = @transform_7, window_bounds = array<i64: 1, 1, 32>}, {transform_indices = @transform_8, window_bounds = array<i64: 1, 1, 32>}, {transform_indices = @transform_9, window_bounds = array<i64: 1, 32, 32>}, {transform_indices = @transform_10, window_bounds = array<i64: 1, 1, 32>}, {transform_indices = @transform_11, window_bounds = array<i64: 1, 32, 64>}, {transform_indices = @transform_12, window_bounds = array<i64: 1, 1, 64>}, {transform_indices = @transform_13, window_bounds = array<i64: 1, 32, 32>}, {transform_indices = @transform_14, window_bounds = array<i64: 1, 1, 32>}, {transform_indices = @transform_15, window_bounds = array<i64: 1, 1, 32>}, {transform_indices = @transform_16, window_bounds = array<i64: 1, 1, 32>}, {transform_indices = @transform_17, window_bounds = array<i64: 1, 32, 2048>}, {transform_indices = @transform_18, window_bounds = array<i64: 1, 1, 2048>}, {transform_indices = @transform_19, window_bounds = array<i64: 1, 2048, 32>}, {transform_indices = @transform_20, window_bounds = array<i64: 1, 1, 32>}, {transform_indices = @transform_21, window_bounds = array<i64: 1, 1, 32>}, {transform_indices = @transform_22, window_bounds = array<i64: 1, 1, 32>}, {transform_indices = @transform_23, window_bounds = array<i64: 16, 32>}]} {
    %c0_i32 = arith.constant 0 : i32
    %0 = arith.cmpi eq, %arg1, %c0_i32 : i32
    %1 = arith.extui %0 : i1 to i32
    %c0_i32_0 = arith.constant 0 : i32
    %2 = arith.cmpi ne, %1, %c0_i32_0 : i32
    scf.if %2 {
      %c0_133 = arith.constant 0 : index
      %c0_134 = arith.constant 0 : index
      %281 = vector.load %arg2[%c0_133, %c0_134] : memref<16x32xf32, #tpu.memory_space<vmem>>, vector<16x32xf32>
      %282 = vector.extract_strided_slice %281 {offsets = [0, 16], sizes = [16, 16], strides = [1, 1]} : vector<16x32xf32> to vector<16x16xf32>
      %283 = vector.extract_strided_slice %281 {offsets = [0, 0], sizes = [16, 16], strides = [1, 1]} : vector<16x32xf32> to vector<16x16xf32>
      %284 = tpu.concatenate %282, %283 in 1 : vector<16x16xf32>, vector<16x16xf32> -> vector<16x32xf32>
      %c0_135 = arith.constant 0 : index
      %c0_136 = arith.constant 0 : index
      %285 = vector.load %arg3[%c0_135, %c0_136] : memref<16x32xf32, #tpu.memory_space<vmem>>, vector<16x32xf32>
      %286 = arith.mulf %281, %285 : vector<16x32xf32>
      %c0_137 = arith.constant 0 : index
      %c0_138 = arith.constant 0 : index
      %287 = vector.load %arg4[%c0_137, %c0_138] : memref<16x32xf32, #tpu.memory_space<vmem>>, vector<16x32xf32>
      %288 = arith.mulf %284, %287 : vector<16x32xf32>
      %289 = arith.addf %286, %288 : vector<16x32xf32>
      %c0_139 = arith.constant 0 : index
      %c0_140 = arith.constant 0 : index
      %290 = vector.load %arg26[%c0_139, %c0_140] : memref<16x32xf32, #tpu.memory_space<vmem>>, vector<16x32xf32>
      tpu.vector_store %arg26[%c0_139, %c0_140], %289 {strides = array<i32>} : memref<16x32xf32, #tpu.memory_space<vmem>>, vector<16x32xf32>,
      %c0_141 = arith.constant 0 : index
      %c0_142 = arith.constant 0 : index
      %291 = vector.load %arg27[%c0_141, %c0_142] : memref<16x32xf32, #tpu.memory_space<vmem>>, vector<16x32xf32>
      tpu.vector_store %arg27[%c0_141, %c0_142], %289 {strides = array<i32>} : memref<16x32xf32, #tpu.memory_space<vmem>>, vector<16x32xf32>,
    } else {
    }
    %c0 = arith.constant 0 : index
    %c0_1 = arith.constant 0 : index
    %3 = vector.load %arg26[%c0, %c0_1] : memref<16x32xf32, #tpu.memory_space<vmem>>, vector<16x32xf32>
    %c0_2 = arith.constant 0 : index
    %c0_3 = arith.constant 0 : index
    %4 = vector.load %arg27[%c0_2, %c0_3] : memref<16x32xf32, #tpu.memory_space<vmem>>, vector<16x32xf32>
    %c0_4 = arith.constant 0 : index
    %c0_5 = arith.constant 0 : index
    %c0_6 = arith.constant 0 : index
    %5 = vector.load %arg5[%c0_4, %c0_5, %c0_6] : memref<1x32x96xbf16, #tpu.memory_space<vmem>>, vector<1x32x96xbf16>
    %6 = vector.shape_cast %5 : vector<1x32x96xbf16> to vector<32x96xbf16>
    %c0_7 = arith.constant 0 : index
    %c0_8 = arith.constant 0 : index
    %c0_9 = arith.constant 0 : index
    %7 = vector.load %arg6[%c0_7, %c0_8, %c0_9] : memref<1x1x96xf32, #tpu.memory_space<vmem>>, vector<1x1x96xf32>
    %8 = vector.shape_cast %7 : vector<1x1x96xf32> to vector<1x96xf32>
    %9 = arith.truncf %3 : vector<16x32xf32> to vector<16x32xbf16>
    %cst = arith.constant dense<0.000000e+00> : vector<16x96xf32>
    %10 = tpu.matmul %9, %6, %cst {dimension_numbers = #tpu.dot_dimension_numbers<[1], [0], [0], [1], [0, 0, 1, 1], [], []>} : vector<16x32xbf16>, vector<32x96xbf16>, vector<16x96xf32> -> vector<16x96xf32>
    %11 = vector.broadcast %8 : vector<1x96xf32> to vector<16x96xf32>
    %12 = arith.addf %10, %11 : vector<16x96xf32>
    %13 = vector.extract_strided_slice %12 {offsets = [0, 0], sizes = [16, 32], strides = [1, 1]} : vector<16x96xf32> to vector<16x32xf32>
    %14 = vector.extract_strided_slice %12 {offsets = [0, 32], sizes = [16, 32], strides = [1, 1]} : vector<16x96xf32> to vector<16x32xf32>
    %15 = vector.extract_strided_slice %12 {offsets = [0, 64], sizes = [16, 32], strides = [1, 1]} : vector<16x96xf32> to vector<16x32xf32>
    %cst_10 = arith.constant 0.353553385 : f32
    %16 = vector.broadcast %cst_10 : f32 to vector<16x32xf32>
    %17 = arith.mulf %13, %16 : vector<16x32xf32>
    %18 = vector.extract_strided_slice %17 {offsets = [0, 0], sizes = [16, 8], strides = [1, 1]} : vector<16x32xf32> to vector<16x8xf32>
    %19 = vector.extract_strided_slice %17 {offsets = [0, 8], sizes = [16, 8], strides = [1, 1]} : vector<16x32xf32> to vector<16x8xf32>
    %20 = vector.extract_strided_slice %17 {offsets = [0, 16], sizes = [16, 8], strides = [1, 1]} : vector<16x32xf32> to vector<16x8xf32>
    %21 = vector.extract_strided_slice %17 {offsets = [0, 24], sizes = [16, 8], strides = [1, 1]} : vector<16x32xf32> to vector<16x8xf32>
    %22 = tpu.concatenate %18, %19, %20, %21 in 0 : vector<16x8xf32>, vector<16x8xf32>, vector<16x8xf32>, vector<16x8xf32> -> vector<64x8xf32>
    %23 = vector.shape_cast %22 : vector<64x8xf32> to vector<8x8x8xf32>
    %24 = arith.truncf %23 : vector<8x8x8xf32> to vector<8x8x8xbf16>
    %25 = vector.extract_strided_slice %14 {offsets = [0, 0], sizes = [16, 8], strides = [1, 1]} : vector<16x32xf32> to vector<16x8xf32>
    %26 = vector.extract_strided_slice %14 {offsets = [0, 8], sizes = [16, 8], strides = [1, 1]} : vector<16x32xf32> to vector<16x8xf32>
    %27 = vector.extract_strided_slice %14 {offsets = [0, 16], sizes = [16, 8], strides = [1, 1]} : vector<16x32xf32> to vector<16x8xf32>
    %28 = vector.extract_strided_slice %14 {offsets = [0, 24], sizes = [16, 8], strides = [1, 1]} : vector<16x32xf32> to vector<16x8xf32>
    %29 = tpu.concatenate %25, %26, %27, %28 in 0 : vector<16x8xf32>, vector<16x8xf32>, vector<16x8xf32>, vector<16x8xf32> -> vector<64x8xf32>
    %30 = vector.shape_cast %29 : vector<64x8xf32> to vector<8x8x8xf32>
    %31 = arith.truncf %30 : vector<8x8x8xf32> to vector<8x8x8xbf16>
    %32 = vector.extract_strided_slice %15 {offsets = [0, 0], sizes = [16, 8], strides = [1, 1]} : vector<16x32xf32> to vector<16x8xf32>
    %33 = vector.extract_strided_slice %15 {offsets = [0, 8], sizes = [16, 8], strides = [1, 1]} : vector<16x32xf32> to vector<16x8xf32>
    %34 = vector.extract_strided_slice %15 {offsets = [0, 16], sizes = [16, 8], strides = [1, 1]} : vector<16x32xf32> to vector<16x8xf32>
    %35 = vector.extract_strided_slice %15 {offsets = [0, 24], sizes = [16, 8], strides = [1, 1]} : vector<16x32xf32> to vector<16x8xf32>
    %36 = tpu.concatenate %32, %33, %34, %35 in 0 : vector<16x8xf32>, vector<16x8xf32>, vector<16x8xf32>, vector<16x8xf32> -> vector<64x8xf32>
    %37 = vector.shape_cast %36 : vector<64x8xf32> to vector<8x8x8xf32>
    %38 = arith.truncf %37 : vector<8x8x8xf32> to vector<8x8x8xbf16>
    "tpu.trace_start"() <{level = 10 : i32, message = "bqd,bkd->bqk"}> : () -> ()
    %cst_11 = arith.constant dense<0.000000e+00> : vector<8x8x8xf32>
    %39 = tpu.matmul %24, %31, %cst_11 {dimension_numbers = #tpu.dot_dimension_numbers<[2], [2], [1], [1], [0, 0, 0, 1, 1, 1], [0], [0]>} : vector<8x8x8xbf16>, vector<8x8x8xbf16>, vector<8x8x8xf32> -> vector<8x8x8xf32>
    "tpu.trace_stop"() : () -> ()
    %cst_12 = arith.constant dense<0xFF800000> : vector<8x8xf32>
    %40 = vector.multi_reduction <maximumf>, %39, %cst_12 [2] : vector<8x8x8xf32> to vector<8x8xf32>
    %41 = vector.shape_cast %40 : vector<8x8xf32> to vector<8x8x1xf32>
    %42 = vector.broadcast %41 : vector<8x8x1xf32> to vector<8x8x8xf32>
    %43 = arith.subf %39, %42 : vector<8x8x8xf32>
    %44 = math.exp %43 : vector<8x8x8xf32>
    %cst_13 = arith.constant dense<0.000000e+00> : vector<8x8xf32>
    %45 = vector.multi_reduction <add>, %44, %cst_13 [2] : vector<8x8x8xf32> to vector<8x8xf32>
    %46 = vector.shape_cast %45 : vector<8x8xf32> to vector<8x8x1xf32>
    %47 = tpu.reciprocal %46 {approx = true} : vector<8x8x1xf32> -> vector<8x8x1xf32>
    %48 = vector.broadcast %47 : vector<8x8x1xf32> to vector<8x8x8xf32>
    %49 = arith.mulf %44, %48 : vector<8x8x8xf32>
    %50 = arith.truncf %49 : vector<8x8x8xf32> to vector<8x8x8xbf16>
    "tpu.trace_start"() <{level = 10 : i32, message = "bqk,bkd->bqd"}> : () -> ()
    %cst_14 = arith.constant dense<0.000000e+00> : vector<8x8x8xf32>
    %51 = tpu.matmul %50, %38, %cst_14 {dimension_numbers = #tpu.dot_dimension_numbers<[2], [1], [1], [2], [0, 0, 0, 1, 1, 2], [0], [0]>} : vector<8x8x8xbf16>, vector<8x8x8xbf16>, vector<8x8x8xf32> -> vector<8x8x8xf32>
    "tpu.trace_stop"() : () -> ()
    %52 = vector.shape_cast %51 : vector<8x8x8xf32> to vector<64x8xf32>
    %53 = vector.extract_strided_slice %52 {offsets = [0, 0], sizes = [16, 8], strides = [1, 1]} : vector<64x8xf32> to vector<16x8xf32>
    %54 = vector.extract_strided_slice %52 {offsets = [16, 0], sizes = [16, 8], strides = [1, 1]} : vector<64x8xf32> to vector<16x8xf32>
    %55 = vector.extract_strided_slice %52 {offsets = [32, 0], sizes = [16, 8], strides = [1, 1]} : vector<64x8xf32> to vector<16x8xf32>
    %56 = vector.extract_strided_slice %52 {offsets = [48, 0], sizes = [16, 8], strides = [1, 1]} : vector<64x8xf32> to vector<16x8xf32>
    %57 = tpu.concatenate %53, %54, %55, %56 in 1 : vector<16x8xf32>, vector<16x8xf32>, vector<16x8xf32>, vector<16x8xf32> -> vector<16x32xf32>
    %c0_15 = arith.constant 0 : index
    %c0_16 = arith.constant 0 : index
    %c0_17 = arith.constant 0 : index
    %58 = vector.load %arg7[%c0_15, %c0_16, %c0_17] : memref<1x32x32xbf16, #tpu.memory_space<vmem>>, vector<1x32x32xbf16>
    %59 = vector.shape_cast %58 : vector<1x32x32xbf16> to vector<32x32xbf16>
    %c0_18 = arith.constant 0 : index
    %c0_19 = arith.constant 0 : index
    %c0_20 = arith.constant 0 : index
    %60 = vector.load %arg8[%c0_18, %c0_19, %c0_20] : memref<1x1x32xf32, #tpu.memory_space<vmem>>, vector<1x1x32xf32>
    %61 = vector.shape_cast %60 : vector<1x1x32xf32> to vector<1x32xf32>
    %62 = arith.truncf %57 : vector<16x32xf32> to vector<16x32xbf16>
    %cst_21 = arith.constant dense<0.000000e+00> : vector<16x32xf32>
    %63 = tpu.matmul %62, %59, %cst_21 {dimension_numbers = #tpu.dot_dimension_numbers<[1], [0], [0], [1], [0, 0, 1, 1], [], []>} : vector<16x32xbf16>, vector<32x32xbf16>, vector<16x32xf32> -> vector<16x32xf32>
    %64 = vector.broadcast %61 : vector<1x32xf32> to vector<16x32xf32>
    %65 = arith.addf %63, %64 : vector<16x32xf32>
    %66 = arith.addf %3, %65 : vector<16x32xf32>
    %c0_22 = arith.constant 0 : index
    %c0_23 = arith.constant 0 : index
    %c0_24 = arith.constant 0 : index
    %67 = vector.load %arg9[%c0_22, %c0_23, %c0_24] : memref<1x1x32xf32, #tpu.memory_space<vmem>>, vector<1x1x32xf32>
    %68 = vector.shape_cast %67 : vector<1x1x32xf32> to vector<1x32xf32>
    %c0_25 = arith.constant 0 : index
    %c0_26 = arith.constant 0 : index
    %c0_27 = arith.constant 0 : index
    %69 = vector.load %arg10[%c0_25, %c0_26, %c0_27] : memref<1x1x32xf32, #tpu.memory_space<vmem>>, vector<1x1x32xf32>
    %70 = vector.shape_cast %69 : vector<1x1x32xf32> to vector<1x32xf32>
    %cst_28 = arith.constant dense<0.000000e+00> : vector<16xf32>
    %71 = vector.multi_reduction <add>, %66, %cst_28 [1] : vector<16x32xf32> to vector<16xf32>
    %72 = vector.shape_cast %71 : vector<16xf32> to vector<16x1xf32>
    %cst_29 = arith.constant 3.200000e+01 : f32
    %73 = vector.broadcast %cst_29 : f32 to vector<16x1xf32>
    %74 = arith.divf %72, %73 : vector<16x1xf32>
    %75 = vector.broadcast %74 : vector<16x1xf32> to vector<16x32xf32>
    %76 = arith.subf %66, %75 : vector<16x32xf32>
    %77 = arith.mulf %76, %76 : vector<16x32xf32>
    %cst_30 = arith.constant dense<0.000000e+00> : vector<16xf32>
    %78 = vector.multi_reduction <add>, %77, %cst_30 [1] : vector<16x32xf32> to vector<16xf32>
    %79 = vector.shape_cast %78 : vector<16xf32> to vector<16x1xf32>
    %cst_31 = arith.constant 3.200000e+01 : f32
    %80 = vector.broadcast %cst_31 : f32 to vector<16x1xf32>
    %81 = arith.divf %79, %80 : vector<16x1xf32>
    %82 = vector.broadcast %74 : vector<16x1xf32> to vector<16x32xf32>
    %83 = arith.subf %66, %82 : vector<16x32xf32>
    %cst_32 = arith.constant 9.99999974E-6 : f32
    %84 = vector.broadcast %cst_32 : f32 to vector<16x1xf32>
    %85 = arith.addf %81, %84 : vector<16x1xf32>
    %86 = math.rsqrt %85 : vector<16x1xf32>
    %87 = vector.broadcast %86 : vector<16x1xf32> to vector<16x32xf32>
    %88 = arith.mulf %83, %87 : vector<16x32xf32>
    %89 = vector.broadcast %68 : vector<1x32xf32> to vector<16x32xf32>
    %90 = arith.mulf %88, %89 : vector<16x32xf32>
    %91 = vector.broadcast %70 : vector<1x32xf32> to vector<16x32xf32>
    %92 = arith.addf %90, %91 : vector<16x32xf32>
    %c0_33 = arith.constant 0 : index
    %c0_34 = arith.constant 0 : index
    %c0_35 = arith.constant 0 : index
    %93 = vector.load %arg11[%c0_33, %c0_34, %c0_35] : memref<1x32x32xbf16, #tpu.memory_space<vmem>>, vector<1x32x32xbf16>
    %94 = vector.shape_cast %93 : vector<1x32x32xbf16> to vector<32x32xbf16>
    %c0_36 = arith.constant 0 : index
    %c0_37 = arith.constant 0 : index
    %c0_38 = arith.constant 0 : index
    %95 = vector.load %arg12[%c0_36, %c0_37, %c0_38] : memref<1x1x32xf32, #tpu.memory_space<vmem>>, vector<1x1x32xf32>
    %96 = vector.shape_cast %95 : vector<1x1x32xf32> to vector<1x32xf32>
    %97 = arith.truncf %92 : vector<16x32xf32> to vector<16x32xbf16>
    %cst_39 = arith.constant dense<0.000000e+00> : vector<16x32xf32>
    %98 = tpu.matmul %97, %94, %cst_39 {dimension_numbers = #tpu.dot_dimension_numbers<[1], [0], [0], [1], [0, 0, 1, 1], [], []>} : vector<16x32xbf16>, vector<32x32xbf16>, vector<16x32xf32> -> vector<16x32xf32>
    %99 = vector.broadcast %96 : vector<1x32xf32> to vector<16x32xf32>
    %100 = arith.addf %98, %99 : vector<16x32xf32>
    %c0_40 = arith.constant 0 : index
    %c0_41 = arith.constant 0 : index
    %c0_42 = arith.constant 0 : index
    %101 = vector.load %arg13[%c0_40, %c0_41, %c0_42] : memref<1x32x64xbf16, #tpu.memory_space<vmem>>, vector<1x32x64xbf16>
    %102 = vector.shape_cast %101 : vector<1x32x64xbf16> to vector<32x64xbf16>
    %c0_43 = arith.constant 0 : index
    %c0_44 = arith.constant 0 : index
    %c0_45 = arith.constant 0 : index
    %103 = vector.load %arg14[%c0_43, %c0_44, %c0_45] : memref<1x1x64xf32, #tpu.memory_space<vmem>>, vector<1x1x64xf32>
    %104 = vector.shape_cast %103 : vector<1x1x64xf32> to vector<1x64xf32>
    %105 = arith.truncf %4 : vector<16x32xf32> to vector<16x32xbf16>
    %cst_46 = arith.constant dense<0.000000e+00> : vector<16x64xf32>
    %106 = tpu.matmul %105, %102, %cst_46 {dimension_numbers = #tpu.dot_dimension_numbers<[1], [0], [0], [1], [0, 0, 1, 1], [], []>} : vector<16x32xbf16>, vector<32x64xbf16>, vector<16x64xf32> -> vector<16x64xf32>
    %107 = vector.broadcast %104 : vector<1x64xf32> to vector<16x64xf32>
    %108 = arith.addf %106, %107 : vector<16x64xf32>
    %109 = vector.extract_strided_slice %108 {offsets = [0, 0], sizes = [16, 32], strides = [1, 1]} : vector<16x64xf32> to vector<16x32xf32>
    %110 = vector.extract_strided_slice %108 {offsets = [0, 32], sizes = [16, 32], strides = [1, 1]} : vector<16x64xf32> to vector<16x32xf32>
    %cst_47 = arith.constant 0.353553385 : f32
    %111 = vector.broadcast %cst_47 : f32 to vector<16x32xf32>
    %112 = arith.mulf %100, %111 : vector<16x32xf32>
    %113 = vector.extract_strided_slice %112 {offsets = [0, 0], sizes = [16, 8], strides = [1, 1]} : vector<16x32xf32> to vector<16x8xf32>
    %114 = vector.extract_strided_slice %112 {offsets = [0, 8], sizes = [16, 8], strides = [1, 1]} : vector<16x32xf32> to vector<16x8xf32>
    %115 = vector.extract_strided_slice %112 {offsets = [0, 16], sizes = [16, 8], strides = [1, 1]} : vector<16x32xf32> to vector<16x8xf32>
    %116 = vector.extract_strided_slice %112 {offsets = [0, 24], sizes = [16, 8], strides = [1, 1]} : vector<16x32xf32> to vector<16x8xf32>
    %117 = tpu.concatenate %113, %114, %115, %116 in 0 : vector<16x8xf32>, vector<16x8xf32>, vector<16x8xf32>, vector<16x8xf32> -> vector<64x8xf32>
    %118 = vector.shape_cast %117 : vector<64x8xf32> to vector<8x8x8xf32>
    %119 = arith.truncf %118 : vector<8x8x8xf32> to vector<8x8x8xbf16>
    %120 = vector.extract_strided_slice %109 {offsets = [0, 0], sizes = [16, 8], strides = [1, 1]} : vector<16x32xf32> to vector<16x8xf32>
    %121 = vector.extract_strided_slice %109 {offsets = [0, 8], sizes = [16, 8], strides = [1, 1]} : vector<16x32xf32> to vector<16x8xf32>
    %122 = vector.extract_strided_slice %109 {offsets = [0, 16], sizes = [16, 8], strides = [1, 1]} : vector<16x32xf32> to vector<16x8xf32>
    %123 = vector.extract_strided_slice %109 {offsets = [0, 24], sizes = [16, 8], strides = [1, 1]} : vector<16x32xf32> to vector<16x8xf32>
    %124 = tpu.concatenate %120, %121, %122, %123 in 0 : vector<16x8xf32>, vector<16x8xf32>, vector<16x8xf32>, vector<16x8xf32> -> vector<64x8xf32>
    %125 = vector.shape_cast %124 : vector<64x8xf32> to vector<8x8x8xf32>
    %126 = arith.truncf %125 : vector<8x8x8xf32> to vector<8x8x8xbf16>
    %127 = vector.extract_strided_slice %110 {offsets = [0, 0], sizes = [16, 8], strides = [1, 1]} : vector<16x32xf32> to vector<16x8xf32>
    %128 = vector.extract_strided_slice %110 {offsets = [0, 8], sizes = [16, 8], strides = [1, 1]} : vector<16x32xf32> to vector<16x8xf32>
    %129 = vector.extract_strided_slice %110 {offsets = [0, 16], sizes = [16, 8], strides = [1, 1]} : vector<16x32xf32> to vector<16x8xf32>
    %130 = vector.extract_strided_slice %110 {offsets = [0, 24], sizes = [16, 8], strides = [1, 1]} : vector<16x32xf32> to vector<16x8xf32>
    %131 = tpu.concatenate %127, %128, %129, %130 in 0 : vector<16x8xf32>, vector<16x8xf32>, vector<16x8xf32>, vector<16x8xf32> -> vector<64x8xf32>
    %132 = vector.shape_cast %131 : vector<64x8xf32> to vector<8x8x8xf32>
    %133 = arith.truncf %132 : vector<8x8x8xf32> to vector<8x8x8xbf16>
    "tpu.trace_start"() <{level = 10 : i32, message = "bqd,bkd->bqk"}> : () -> ()
    %cst_48 = arith.constant dense<0.000000e+00> : vector<8x8x8xf32>
    %134 = tpu.matmul %119, %126, %cst_48 {dimension_numbers = #tpu.dot_dimension_numbers<[2], [2], [1], [1], [0, 0, 0, 1, 1, 1], [0], [0]>} : vector<8x8x8xbf16>, vector<8x8x8xbf16>, vector<8x8x8xf32> -> vector<8x8x8xf32>
    "tpu.trace_stop"() : () -> ()
    %cst_49 = arith.constant dense<0xFF800000> : vector<8x8xf32>
    %135 = vector.multi_reduction <maximumf>, %134, %cst_49 [2] : vector<8x8x8xf32> to vector<8x8xf32>
    %136 = vector.shape_cast %135 : vector<8x8xf32> to vector<8x8x1xf32>
    %137 = vector.broadcast %136 : vector<8x8x1xf32> to vector<8x8x8xf32>
    %138 = arith.subf %134, %137 : vector<8x8x8xf32>
    %139 = math.exp %138 : vector<8x8x8xf32>
    %cst_50 = arith.constant dense<0.000000e+00> : vector<8x8xf32>
    %140 = vector.multi_reduction <add>, %139, %cst_50 [2] : vector<8x8x8xf32> to vector<8x8xf32>
    %141 = vector.shape_cast %140 : vector<8x8xf32> to vector<8x8x1xf32>
    %142 = tpu.reciprocal %141 {approx = true} : vector<8x8x1xf32> -> vector<8x8x1xf32>
    %143 = vector.broadcast %142 : vector<8x8x1xf32> to vector<8x8x8xf32>
    %144 = arith.mulf %139, %143 : vector<8x8x8xf32>
    %145 = arith.truncf %144 : vector<8x8x8xf32> to vector<8x8x8xbf16>
    "tpu.trace_start"() <{level = 10 : i32, message = "bqk,bkd->bqd"}> : () -> ()
    %cst_51 = arith.constant dense<0.000000e+00> : vector<8x8x8xf32>
    %146 = tpu.matmul %145, %133, %cst_51 {dimension_numbers = #tpu.dot_dimension_numbers<[2], [1], [1], [2], [0, 0, 0, 1, 1, 2], [0], [0]>} : vector<8x8x8xbf16>, vector<8x8x8xbf16>, vector<8x8x8xf32> -> vector<8x8x8xf32>
    "tpu.trace_stop"() : () -> ()
    %147 = vector.shape_cast %146 : vector<8x8x8xf32> to vector<64x8xf32>
    %148 = vector.extract_strided_slice %147 {offsets = [0, 0], sizes = [16, 8], strides = [1, 1]} : vector<64x8xf32> to vector<16x8xf32>
    %149 = vector.extract_strided_slice %147 {offsets = [16, 0], sizes = [16, 8], strides = [1, 1]} : vector<64x8xf32> to vector<16x8xf32>
    %150 = vector.extract_strided_slice %147 {offsets = [32, 0], sizes = [16, 8], strides = [1, 1]} : vector<64x8xf32> to vector<16x8xf32>
    %151 = vector.extract_strided_slice %147 {offsets = [48, 0], sizes = [16, 8], strides = [1, 1]} : vector<64x8xf32> to vector<16x8xf32>
    %152 = tpu.concatenate %148, %149, %150, %151 in 1 : vector<16x8xf32>, vector<16x8xf32>, vector<16x8xf32>, vector<16x8xf32> -> vector<16x32xf32>
    %c0_52 = arith.constant 0 : index
    %c0_53 = arith.constant 0 : index
    %c0_54 = arith.constant 0 : index
    %153 = vector.load %arg15[%c0_52, %c0_53, %c0_54] : memref<1x32x32xbf16, #tpu.memory_space<vmem>>, vector<1x32x32xbf16>
    %154 = vector.shape_cast %153 : vector<1x32x32xbf16> to vector<32x32xbf16>
    %c0_55 = arith.constant 0 : index
    %c0_56 = arith.constant 0 : index
    %c0_57 = arith.constant 0 : index
    %155 = vector.load %arg16[%c0_55, %c0_56, %c0_57] : memref<1x1x32xf32, #tpu.memory_space<vmem>>, vector<1x1x32xf32>
    %156 = vector.shape_cast %155 : vector<1x1x32xf32> to vector<1x32xf32>
    %157 = arith.truncf %152 : vector<16x32xf32> to vector<16x32xbf16>
    %cst_58 = arith.constant dense<0.000000e+00> : vector<16x32xf32>
    %158 = tpu.matmul %157, %154, %cst_58 {dimension_numbers = #tpu.dot_dimension_numbers<[1], [0], [0], [1], [0, 0, 1, 1], [], []>} : vector<16x32xbf16>, vector<32x32xbf16>, vector<16x32xf32> -> vector<16x32xf32>
    %159 = vector.broadcast %156 : vector<1x32xf32> to vector<16x32xf32>
    %160 = arith.addf %158, %159 : vector<16x32xf32>
    %161 = arith.addf %92, %160 : vector<16x32xf32>
    %c0_59 = arith.constant 0 : index
    %c0_60 = arith.constant 0 : index
    %c0_61 = arith.constant 0 : index
    %162 = vector.load %arg17[%c0_59, %c0_60, %c0_61] : memref<1x1x32xf32, #tpu.memory_space<vmem>>, vector<1x1x32xf32>
    %163 = vector.shape_cast %162 : vector<1x1x32xf32> to vector<1x32xf32>
    %c0_62 = arith.constant 0 : index
    %c0_63 = arith.constant 0 : index
    %c0_64 = arith.constant 0 : index
    %164 = vector.load %arg18[%c0_62, %c0_63, %c0_64] : memref<1x1x32xf32, #tpu.memory_space<vmem>>, vector<1x1x32xf32>
    %165 = vector.shape_cast %164 : vector<1x1x32xf32> to vector<1x32xf32>
    %cst_65 = arith.constant dense<0.000000e+00> : vector<16xf32>
    %166 = vector.multi_reduction <add>, %161, %cst_65 [1] : vector<16x32xf32> to vector<16xf32>
    %167 = vector.shape_cast %166 : vector<16xf32> to vector<16x1xf32>
    %cst_66 = arith.constant 3.200000e+01 : f32
    %168 = vector.broadcast %cst_66 : f32 to vector<16x1xf32>
    %169 = arith.divf %167, %168 : vector<16x1xf32>
    %170 = vector.broadcast %169 : vector<16x1xf32> to vector<16x32xf32>
    %171 = arith.subf %161, %170 : vector<16x32xf32>
    %172 = arith.mulf %171, %171 : vector<16x32xf32>
    %cst_67 = arith.constant dense<0.000000e+00> : vector<16xf32>
    %173 = vector.multi_reduction <add>, %172, %cst_67 [1] : vector<16x32xf32> to vector<16xf32>
    %174 = vector.shape_cast %173 : vector<16xf32> to vector<16x1xf32>
    %cst_68 = arith.constant 3.200000e+01 : f32
    %175 = vector.broadcast %cst_68 : f32 to vector<16x1xf32>
    %176 = arith.divf %174, %175 : vector<16x1xf32>
    %177 = vector.broadcast %169 : vector<16x1xf32> to vector<16x32xf32>
    %178 = arith.subf %161, %177 : vector<16x32xf32>
    %cst_69 = arith.constant 9.99999974E-6 : f32
    %179 = vector.broadcast %cst_69 : f32 to vector<16x1xf32>
    %180 = arith.addf %176, %179 : vector<16x1xf32>
    %181 = math.rsqrt %180 : vector<16x1xf32>
    %182 = vector.broadcast %181 : vector<16x1xf32> to vector<16x32xf32>
    %183 = arith.mulf %178, %182 : vector<16x32xf32>
    %184 = vector.broadcast %163 : vector<1x32xf32> to vector<16x32xf32>
    %185 = arith.mulf %183, %184 : vector<16x32xf32>
    %186 = vector.broadcast %165 : vector<1x32xf32> to vector<16x32xf32>
    %187 = arith.addf %185, %186 : vector<16x32xf32>
    %188 = arith.truncf %187 : vector<16x32xf32> to vector<16x32xbf16>
    %cst_70 = arith.constant 0.000000e+00 : f32
    %189 = vector.broadcast %cst_70 : f32 to vector<16x32xf32>
    %c0_71 = arith.constant 0 : index
    %c0_72 = arith.constant 0 : index
    %c0_73 = arith.constant 0 : index
    %190 = vector.load %arg19[%c0_71, %c0_72, %c0_73] : memref<1x32x2048xbf16, #tpu.memory_space<vmem>>, vector<1x32x512xbf16>
    %191 = vector.shape_cast %190 : vector<1x32x512xbf16> to vector<32x512xbf16>
    %cst_74 = arith.constant dense<0.000000e+00> : vector<16x512xf32>
    %192 = tpu.matmul %188, %191, %cst_74 {dimension_numbers = #tpu.dot_dimension_numbers<[1], [0], [0], [1], [0, 0, 1, 1], [], []>} : vector<16x32xbf16>, vector<32x512xbf16>, vector<16x512xf32> -> vector<16x512xf32>
    %c0_75 = arith.constant 0 : index
    %c0_76 = arith.constant 0 : index
    %c0_77 = arith.constant 0 : index
    %193 = vector.load %arg20[%c0_75, %c0_76, %c0_77] : memref<1x1x2048xf32, #tpu.memory_space<vmem>>, vector<1x1x512xf32>
    %194 = vector.shape_cast %193 : vector<1x1x512xf32> to vector<1x512xf32>
    %195 = vector.broadcast %194 : vector<1x512xf32> to vector<16x512xf32>
    %196 = arith.addf %192, %195 : vector<16x512xf32>
    %cst_78 = arith.constant 0.000000e+00 : f32
    %197 = vector.broadcast %cst_78 : f32 to vector<16x512xf32>
    %198 = arith.maximumf %196, %197 : vector<16x512xf32>
    %199 = arith.truncf %198 : vector<16x512xf32> to vector<16x512xbf16>
    %c0_79 = arith.constant 0 : index
    %c0_80 = arith.constant 0 : index
    %c0_81 = arith.constant 0 : index
    %200 = vector.load %arg21[%c0_79, %c0_80, %c0_81] : memref<1x2048x32xbf16, #tpu.memory_space<vmem>>, vector<1x512x32xbf16>
    %201 = vector.shape_cast %200 : vector<1x512x32xbf16> to vector<512x32xbf16>
    %cst_82 = arith.constant dense<0.000000e+00> : vector<16x32xf32>
    %202 = tpu.matmul %199, %201, %cst_82 {dimension_numbers = #tpu.dot_dimension_numbers<[1], [0], [0], [1], [0, 0, 1, 1], [], []>} : vector<16x512xbf16>, vector<512x32xbf16>, vector<16x32xf32> -> vector<16x32xf32>
    %203 = arith.addf %189, %202 : vector<16x32xf32>
    %c0_83 = arith.constant 0 : index
    %c0_84 = arith.constant 0 : index
    %c512 = arith.constant 512 : index
    %204 = vector.load %arg19[%c0_83, %c0_84, %c512] : memref<1x32x2048xbf16, #tpu.memory_space<vmem>>, vector<1x32x512xbf16>
    %205 = vector.shape_cast %204 : vector<1x32x512xbf16> to vector<32x512xbf16>
    %cst_85 = arith.constant dense<0.000000e+00> : vector<16x512xf32>
    %206 = tpu.matmul %188, %205, %cst_85 {dimension_numbers = #tpu.dot_dimension_numbers<[1], [0], [0], [1], [0, 0, 1, 1], [], []>} : vector<16x32xbf16>, vector<32x512xbf16>, vector<16x512xf32> -> vector<16x512xf32>
    %c0_86 = arith.constant 0 : index
    %c0_87 = arith.constant 0 : index
    %c512_88 = arith.constant 512 : index
    %207 = vector.load %arg20[%c0_86, %c0_87, %c512_88] : memref<1x1x2048xf32, #tpu.memory_space<vmem>>, vector<1x1x512xf32>
    %208 = vector.shape_cast %207 : vector<1x1x512xf32> to vector<1x512xf32>
    %209 = vector.broadcast %208 : vector<1x512xf32> to vector<16x512xf32>
    %210 = arith.addf %206, %209 : vector<16x512xf32>
    %cst_89 = arith.constant 0.000000e+00 : f32
    %211 = vector.broadcast %cst_89 : f32 to vector<16x512xf32>
    %212 = arith.maximumf %210, %211 : vector<16x512xf32>
    %213 = arith.truncf %212 : vector<16x512xf32> to vector<16x512xbf16>
    %c0_90 = arith.constant 0 : index
    %c512_91 = arith.constant 512 : index
    %c0_92 = arith.constant 0 : index
    %214 = vector.load %arg21[%c0_90, %c512_91, %c0_92] : memref<1x2048x32xbf16, #tpu.memory_space<vmem>>, vector<1x512x32xbf16>
    %215 = vector.shape_cast %214 : vector<1x512x32xbf16> to vector<512x32xbf16>
    %cst_93 = arith.constant dense<0.000000e+00> : vector<16x32xf32>
    %216 = tpu.matmul %213, %215, %cst_93 {dimension_numbers = #tpu.dot_dimension_numbers<[1], [0], [0], [1], [0, 0, 1, 1], [], []>} : vector<16x512xbf16>, vector<512x32xbf16>, vector<16x32xf32> -> vector<16x32xf32>
    %217 = arith.addf %203, %216 : vector<16x32xf32>
    %c0_94 = arith.constant 0 : index
    %c0_95 = arith.constant 0 : index
    %c1024 = arith.constant 1024 : index
    %218 = vector.load %arg19[%c0_94, %c0_95, %c1024] : memref<1x32x2048xbf16, #tpu.memory_space<vmem>>, vector<1x32x512xbf16>
    %219 = vector.shape_cast %218 : vector<1x32x512xbf16> to vector<32x512xbf16>
    %cst_96 = arith.constant dense<0.000000e+00> : vector<16x512xf32>
    %220 = tpu.matmul %188, %219, %cst_96 {dimension_numbers = #tpu.dot_dimension_numbers<[1], [0], [0], [1], [0, 0, 1, 1], [], []>} : vector<16x32xbf16>, vector<32x512xbf16>, vector<16x512xf32> -> vector<16x512xf32>
    %c0_97 = arith.constant 0 : index
    %c0_98 = arith.constant 0 : index
    %c1024_99 = arith.constant 1024 : index
    %221 = vector.load %arg20[%c0_97, %c0_98, %c1024_99] : memref<1x1x2048xf32, #tpu.memory_space<vmem>>, vector<1x1x512xf32>
    %222 = vector.shape_cast %221 : vector<1x1x512xf32> to vector<1x512xf32>
    %223 = vector.broadcast %222 : vector<1x512xf32> to vector<16x512xf32>
    %224 = arith.addf %220, %223 : vector<16x512xf32>
    %cst_100 = arith.constant 0.000000e+00 : f32
    %225 = vector.broadcast %cst_100 : f32 to vector<16x512xf32>
    %226 = arith.maximumf %224, %225 : vector<16x512xf32>
    %227 = arith.truncf %226 : vector<16x512xf32> to vector<16x512xbf16>
    %c0_101 = arith.constant 0 : index
    %c1024_102 = arith.constant 1024 : index
    %c0_103 = arith.constant 0 : index
    %228 = vector.load %arg21[%c0_101, %c1024_102, %c0_103] : memref<1x2048x32xbf16, #tpu.memory_space<vmem>>, vector<1x512x32xbf16>
    %229 = vector.shape_cast %228 : vector<1x512x32xbf16> to vector<512x32xbf16>
    %cst_104 = arith.constant dense<0.000000e+00> : vector<16x32xf32>
    %230 = tpu.matmul %227, %229, %cst_104 {dimension_numbers = #tpu.dot_dimension_numbers<[1], [0], [0], [1], [0, 0, 1, 1], [], []>} : vector<16x512xbf16>, vector<512x32xbf16>, vector<16x32xf32> -> vector<16x32xf32>
    %231 = arith.addf %217, %230 : vector<16x32xf32>
    %c0_105 = arith.constant 0 : index
    %c0_106 = arith.constant 0 : index
    %c1536 = arith.constant 1536 : index
    %232 = vector.load %arg19[%c0_105, %c0_106, %c1536] : memref<1x32x2048xbf16, #tpu.memory_space<vmem>>, vector<1x32x512xbf16>
    %233 = vector.shape_cast %232 : vector<1x32x512xbf16> to vector<32x512xbf16>
    %cst_107 = arith.constant dense<0.000000e+00> : vector<16x512xf32>
    %234 = tpu.matmul %188, %233, %cst_107 {dimension_numbers = #tpu.dot_dimension_numbers<[1], [0], [0], [1], [0, 0, 1, 1], [], []>} : vector<16x32xbf16>, vector<32x512xbf16>, vector<16x512xf32> -> vector<16x512xf32>
    %c0_108 = arith.constant 0 : index
    %c0_109 = arith.constant 0 : index
    %c1536_110 = arith.constant 1536 : index
    %235 = vector.load %arg20[%c0_108, %c0_109, %c1536_110] : memref<1x1x2048xf32, #tpu.memory_space<vmem>>, vector<1x1x512xf32>
    %236 = vector.shape_cast %235 : vector<1x1x512xf32> to vector<1x512xf32>
    %237 = vector.broadcast %236 : vector<1x512xf32> to vector<16x512xf32>
    %238 = arith.addf %234, %237 : vector<16x512xf32>
    %cst_111 = arith.constant 0.000000e+00 : f32
    %239 = vector.broadcast %cst_111 : f32 to vector<16x512xf32>
    %240 = arith.maximumf %238, %239 : vector<16x512xf32>
    %241 = arith.truncf %240 : vector<16x512xf32> to vector<16x512xbf16>
    %c0_112 = arith.constant 0 : index
    %c1536_113 = arith.constant 1536 : index
    %c0_114 = arith.constant 0 : index
    %242 = vector.load %arg21[%c0_112, %c1536_113, %c0_114] : memref<1x2048x32xbf16, #tpu.memory_space<vmem>>, vector<1x512x32xbf16>
    %243 = vector.shape_cast %242 : vector<1x512x32xbf16> to vector<512x32xbf16>
    %cst_115 = arith.constant dense<0.000000e+00> : vector<16x32xf32>
    %244 = tpu.matmul %241, %243, %cst_115 {dimension_numbers = #tpu.dot_dimension_numbers<[1], [0], [0], [1], [0, 0, 1, 1], [], []>} : vector<16x512xbf16>, vector<512x32xbf16>, vector<16x32xf32> -> vector<16x32xf32>
    %245 = arith.addf %231, %244 : vector<16x32xf32>
    %c0_116 = arith.constant 0 : index
    %c0_117 = arith.constant 0 : index
    %c0_118 = arith.constant 0 : index
    %246 = vector.load %arg22[%c0_116, %c0_117, %c0_118] : memref<1x1x32xf32, #tpu.memory_space<vmem>>, vector<1x1x32xf32>
    %247 = vector.shape_cast %246 : vector<1x1x32xf32> to vector<1x32xf32>
    %248 = vector.broadcast %247 : vector<1x32xf32> to vector<16x32xf32>
    %249 = arith.addf %245, %248 : vector<16x32xf32>
    %250 = arith.addf %187, %249 : vector<16x32xf32>
    %c0_119 = arith.constant 0 : index
    %c0_120 = arith.constant 0 : index
    %c0_121 = arith.constant 0 : index
    %251 = vector.load %arg23[%c0_119, %c0_120, %c0_121] : memref<1x1x32xf32, #tpu.memory_space<vmem>>, vector<1x1x32xf32>
    %252 = vector.shape_cast %251 : vector<1x1x32xf32> to vector<1x32xf32>
    %c0_122 = arith.constant 0 : index
    %c0_123 = arith.constant 0 : index
    %c0_124 = arith.constant 0 : index
    %253 = vector.load %arg24[%c0_122, %c0_123, %c0_124] : memref<1x1x32xf32, #tpu.memory_space<vmem>>, vector<1x1x32xf32>
    %254 = vector.shape_cast %253 : vector<1x1x32xf32> to vector<1x32xf32>
    %cst_125 = arith.constant dense<0.000000e+00> : vector<16xf32>
    %255 = vector.multi_reduction <add>, %250, %cst_125 [1] : vector<16x32xf32> to vector<16xf32>
    %256 = vector.shape_cast %255 : vector<16xf32> to vector<16x1xf32>
    %cst_126 = arith.constant 3.200000e+01 : f32
    %257 = vector.broadcast %cst_126 : f32 to vector<16x1xf32>
    %258 = arith.divf %256, %257 : vector<16x1xf32>
    %259 = vector.broadcast %258 : vector<16x1xf32> to vector<16x32xf32>
    %260 = arith.subf %250, %259 : vector<16x32xf32>
    %261 = arith.mulf %260, %260 : vector<16x32xf32>
    %cst_127 = arith.constant dense<0.000000e+00> : vector<16xf32>
    %262 = vector.multi_reduction <add>, %261, %cst_127 [1] : vector<16x32xf32> to vector<16xf32>
    %263 = vector.shape_cast %262 : vector<16xf32> to vector<16x1xf32>
    %cst_128 = arith.constant 3.200000e+01 : f32
    %264 = vector.broadcast %cst_128 : f32 to vector<16x1xf32>
    %265 = arith.divf %263, %264 : vector<16x1xf32>
    %266 = vector.broadcast %258 : vector<16x1xf32> to vector<16x32xf32>
    %267 = arith.subf %250, %266 : vector<16x32xf32>
    %cst_129 = arith.constant 9.99999974E-6 : f32
    %268 = vector.broadcast %cst_129 : f32 to vector<16x1xf32>
    %269 = arith.addf %265, %268 : vector<16x1xf32>
    %270 = math.rsqrt %269 : vector<16x1xf32>
    %271 = vector.broadcast %270 : vector<16x1xf32> to vector<16x32xf32>
    %272 = arith.mulf %267, %271 : vector<16x32xf32>
    %273 = vector.broadcast %252 : vector<1x32xf32> to vector<16x32xf32>
    %274 = arith.mulf %272, %273 : vector<16x32xf32>
    %275 = vector.broadcast %254 : vector<1x32xf32> to vector<16x32xf32>
    %276 = arith.addf %274, %275 : vector<16x32xf32>
    %c0_130 = arith.constant 0 : index
    %c0_131 = arith.constant 0 : index
    %277 = vector.load %arg26[%c0_130, %c0_131] : memref<16x32xf32, #tpu.memory_space<vmem>>, vector<16x32xf32>
    tpu.vector_store %arg26[%c0_130, %c0_131], %276 {strides = array<i32>} : memref<16x32xf32, #tpu.memory_space<vmem>>, vector<16x32xf32>,
    %c1_i32 = arith.constant 1 : i32
    %278 = arith.cmpi eq, %arg1, %c1_i32 : i32
    %279 = arith.extui %278 : i1 to i32
    %c0_i32_132 = arith.constant 0 : i32
    %280 = arith.cmpi ne, %279, %c0_i32_132 : i32
    scf.if %280 {
      %c0_133 = arith.constant 0 : index
      %c0_134 = arith.constant 0 : index
      %281 = vector.load %arg25[%c0_133, %c0_134] : memref<16x32xf32, #tpu.memory_space<vmem>>, vector<16x32xf32>
      tpu.vector_store %arg25[%c0_133, %c0_134], %276 {strides = array<i32>} : memref<16x32xf32, #tpu.memory_space<vmem>>, vector<16x32xf32>,
    } else {
    }
    return
  }
  func.func @transform_0(%arg0: i32, %arg1: i32) -> (i32, i32) {
    %c0_i32 = arith.constant 0 : i32
    %c0_i32_0 = arith.constant 0 : i32
    return %arg0, %c0_i32 : i32, i32
  }
  func.func @transform_1(%arg0: i32, %arg1: i32) -> (i32, i32) {
    %c0_i32 = arith.constant 0 : i32
    %c0_i32_0 = arith.constant 0 : i32
    return %arg0, %c0_i32 : i32, i32
  }
  func.func @transform_2(%arg0: i32, %arg1: i32) -> (i32, i32) {
    %c0_i32 = arith.constant 0 : i32
    %c0_i32_0 = arith.constant 0 : i32
    return %arg0, %c0_i32 : i32, i32
  }
  func.func @transform_3(%arg0: i32, %arg1: i32) -> (i32, i32, i32) {
    %c0_i32 = arith.constant 0 : i32
    %c0_i32_0 = arith.constant 0 : i32
    %c0_i32_1 = arith.constant 0 : i32
    return %arg1, %c0_i32, %c0_i32_0 : i32, i32, i32
  }
  func.func @transform_4(%arg0: i32, %arg1: i32) -> (i32, i32, i32) {
    %c0_i32 = arith.constant 0 : i32
    %c0_i32_0 = arith.constant 0 : i32
    %c0_i32_1 = arith.constant 0 : i32
    return %arg1, %c0_i32, %c0_i32_0 : i32, i32, i32
  }
  func.func @transform_5(%arg0: i32, %arg1: i32) -> (i32, i32, i32) {
    %c0_i32 = arith.constant 0 : i32
    %c0_i32_0 = arith.constant 0 : i32
    %c0_i32_1 = arith.constant 0 : i32
    return %arg1, %c0_i32, %c0_i32_0 : i32, i32, i32
  }
  func.func @transform_6(%arg0: i32, %arg1: i32) -> (i32, i32, i32) {
    %c0_i32 = arith.constant 0 : i32
    %c0_i32_0 = arith.constant 0 : i32
    %c0_i32_1 = arith.constant 0 : i32
    return %arg1, %c0_i32, %c0_i32_0 : i32, i32, i32
  }
  func.func @transform_7(%arg0: i32, %arg1: i32) -> (i32, i32, i32) {
    %c0_i32 = arith.constant 0 : i32
    %c0_i32_0 = arith.constant 0 : i32
    %c0_i32_1 = arith.constant 0 : i32
    return %arg1, %c0_i32, %c0_i32_0 : i32, i32, i32
  }
  func.func @transform_8(%arg0: i32, %arg1: i32) -> (i32, i32, i32) {
    %c0_i32 = arith.constant 0 : i32
    %c0_i32_0 = arith.constant 0 : i32
    %c0_i32_1 = arith.constant 0 : i32
    return %arg1, %c0_i32, %c0_i32_0 : i32, i32, i32
  }
  func.func @transform_9(%arg0: i32, %arg1: i32) -> (i32, i32, i32) {
    %c0_i32 = arith.constant 0 : i32
    %c0_i32_0 = arith.constant 0 : i32
    %c0_i32_1 = arith.constant 0 : i32
    return %arg1, %c0_i32, %c0_i32_0 : i32, i32, i32
  }
  func.func @transform_10(%arg0: i32, %arg1: i32) -> (i32, i32, i32) {
    %c0_i32 = arith.constant 0 : i32
    %c0_i32_0 = arith.constant 0 : i32
    %c0_i32_1 = arith.constant 0 : i32
    return %arg1, %c0_i32, %c0_i32_0 : i32, i32, i32
  }
  func.func @transform_11(%arg0: i32, %arg1: i32) -> (i32, i32, i32) {
    %c0_i32 = arith.constant 0 : i32
    %c0_i32_0 = arith.constant 0 : i32
    %c0_i32_1 = arith.constant 0 : i32
    return %arg1, %c0_i32, %c0_i32_0 : i32, i32, i32
  }
  func.func @transform_12(%arg0: i32, %arg1: i32) -> (i32, i32, i32) {
    %c0_i32 = arith.constant 0 : i32
    %c0_i32_0 = arith.constant 0 : i32
    %c0_i32_1 = arith.constant 0 : i32
    return %arg1, %c0_i32, %c0_i32_0 : i32, i32, i32
  }
  func.func @transform_13(%arg0: i32, %arg1: i32) -> (i32, i32, i32) {
    %c0_i32 = arith.constant 0 : i32
    %c0_i32_0 = arith.constant 0 : i32
    %c0_i32_1 = arith.constant 0 : i32
    return %arg1, %c0_i32, %c0_i32_0 : i32, i32, i32
  }
  func.func @transform_14(%arg0: i32, %arg1: i32) -> (i32, i32, i32) {
    %c0_i32 = arith.constant 0 : i32
    %c0_i32_0 = arith.constant 0 : i32
    %c0_i32_1 = arith.constant 0 : i32
    return %arg1, %c0_i32, %c0_i32_0 : i32, i32, i32
  }
  func.func @transform_15(%arg0: i32, %arg1: i32) -> (i32, i32, i32) {
    %c0_i32 = arith.constant 0 : i32
    %c0_i32_0 = arith.constant 0 : i32
    %c0_i32_1 = arith.constant 0 : i32
    return %arg1, %c0_i32, %c0_i32_0 : i32, i32, i32
  }
  func.func @transform_16(%arg0: i32, %arg1: i32) -> (i32, i32, i32) {
    %c0_i32 = arith.constant 0 : i32
    %c0_i32_0 = arith.constant 0 : i32
    %c0_i32_1 = arith.constant 0 : i32
    return %arg1, %c0_i32, %c0_i32_0 : i32, i32, i32
  }
  func.func @transform_17(%arg0: i32, %arg1: i32) -> (i32, i32, i32) {
    %c0_i32 = arith.constant 0 : i32
    %c0_i32_0 = arith.constant 0 : i32
    %c0_i32_1 = arith.constant 0 : i32
    return %arg1, %c0_i32, %c0_i32_0 : i32, i32, i32
  }
  func.func @transform_18(%arg0: i32, %arg1: i32) -> (i32, i32, i32) {
    %c0_i32 = arith.constant 0 : i32
    %c0_i32_0 = arith.constant 0 : i32
    %c0_i32_1 = arith.constant 0 : i32
    return %arg1, %c0_i32, %c0_i32_0 : i32, i32, i32
  }
  func.func @transform_19(%arg0: i32, %arg1: i32) -> (i32, i32, i32) {
    %c0_i32 = arith.constant 0 : i32
    %c0_i32_0 = arith.constant 0 : i32
    %c0_i32_1 = arith.constant 0 : i32
    return %arg1, %c0_i32, %c0_i32_0 : i32, i32, i32
  }
  func.func @transform_20(%arg0: i32, %arg1: i32) -> (i32, i32, i32) {
    %c0_i32 = arith.constant 0 : i32
    %c0_i32_0 = arith.constant 0 : i32
    %c0_i32_1 = arith.constant 0 : i32
    return %arg1, %c0_i32, %c0_i32_0 : i32, i32, i32
  }
  func.func @transform_21(%arg0: i32, %arg1: i32) -> (i32, i32, i32) {
    %c0_i32 = arith.constant 0 : i32
    %c0_i32_0 = arith.constant 0 : i32
    %c0_i32_1 = arith.constant 0 : i32
    return %arg1, %c0_i32, %c0_i32_0 : i32, i32, i32
  }
  func.func @transform_22(%arg0: i32, %arg1: i32) -> (i32, i32, i32) {
    %c0_i32 = arith.constant 0 : i32
    %c0_i32_0 = arith.constant 0 : i32
    %c0_i32_1 = arith.constant 0 : i32
    return %arg1, %c0_i32, %c0_i32_0 : i32, i32, i32
  }
  func.func @transform_23(%arg0: i32, %arg1: i32) -> (i32, i32) {
    %c0_i32 = arith.constant 0 : i32
    %c0_i32_0 = arith.constant 0 : i32
    return %arg0, %c0_i32 : i32, i32
  }
}

</mosaic_0001>

<llo_original>
// kernel: tpu_custom_call.1
$region0: #{tpu_custom_call.1}
  #allocation0 [shape = 'u32[]', space=smem, size = 0x4, offset = 0x4, fixed_abs, tag = 'smem constant byte address 0x4 - core index']
  #allocation1 [shape = 'u32[144,128]{1,0:T(1,128)}', space=vmem, size = 0x12000, scoped, tag = 'internal scratch']
  #allocation2 [shape = 'f32[16,32]{1,0:T(8,128)}', space=vmem, size = 0x2000, scoped, tag = 'scratch operand']
  #allocation3 [shape = 'f32[16,32]{1,0:T(8,128)}', space=vmem, size = 0x2000, scoped, tag = 'scratch operand']
  %s0 = inlined_call_operand.vmem [shape: f32[16,32], index: 0, kind: input, shape index: {}]
  %s1 = inlined_call_operand.vmem [shape: f32[16,32], index: 1, kind: input, shape index: {}]
  %s2 = inlined_call_operand.vmem [shape: f32[16,32], index: 2, kind: input, shape index: {}]
  %s3 = inlined_call_operand.vmem [shape: bf16[2,32,96], index: 3, kind: input, shape index: {}]
  %s4 = inlined_call_operand.vmem [shape: f32[2,1,96], index: 4, kind: input, shape index: {}]
  %s5 = inlined_call_operand.vmem [shape: bf16[2,32,32], index: 5, kind: input, shape index: {}]
  %s6 = inlined_call_operand.vmem [shape: f32[2,1,32], index: 6, kind: input, shape index: {}]
  %s7 = inlined_call_operand.vmem [shape: f32[2,1,32], index: 7, kind: input, shape index: {}]
  %s8 = inlined_call_operand.vmem [shape: f32[2,1,32], index: 8, kind: input, shape index: {}]
  %s9 = inlined_call_operand.vmem [shape: bf16[2,32,32], index: 9, kind: input, shape index: {}]
  %s10 = inlined_call_operand.vmem [shape: f32[2,1,32], index: 10, kind: input, shape index: {}]
  %s11 = inlined_call_operand.vmem [shape: bf16[2,32,64], index: 11, kind: input, shape index: {}]
  %s12 = inlined_call_operand.vmem [shape: f32[2,1,64], index: 12, kind: input, shape index: {}]
  %s13 = inlined_call_operand.vmem [shape: bf16[2,32,32], index: 13, kind: input, shape index: {}]
  %s14 = inlined_call_operand.vmem [shape: f32[2,1,32], index: 14, kind: input, shape index: {}]
  %s15 = inlined_call_operand.vmem [shape: f32[2,1,32], index: 15, kind: input, shape index: {}]
  %s16 = inlined_call_operand.vmem [shape: f32[2,1,32], index: 16, kind: input, shape index: {}]
  %s17 = inlined_call_operand.vmem [shape: bf16[2,32,2048], index: 17, kind: input, shape index: {}]
  %s18 = inlined_call_operand.vmem [shape: f32[2,1,2048], index: 18, kind: input, shape index: {}]
  %s19 = inlined_call_operand.vmem [shape: bf16[2,2048,32], index: 19, kind: input, shape index: {}]
  %s20 = inlined_call_operand.vmem [shape: f32[2,1,32], index: 20, kind: input, shape index: {}]
  %s21 = inlined_call_operand.vmem [shape: f32[2,1,32], index: 21, kind: input, shape index: {}]
  %s22 = inlined_call_operand.vmem [shape: f32[2,1,32], index: 22, kind: input, shape index: {}]
  %s23 = inlined_call_operand.hbm [shape: f32[16,32], index: 23, kind: output, shape index: {}]
  %s24 = sld [smem:[#allocation0]]
  $region133: #{tpu_custom_call.1} parent=0
    _
  %s26 = ssub.s32 1, %s24
  %s27 = scalar_select 0, %s26, %s24
  $region1: #{tpu_custom_call.1} parent=0
    #allocation4 [shape = 'u8[8192]{0}', space=vmem, size = 0x2000, scoped, tag = 'output window, operand 0, single buffered']
    #allocation5 [shape = 's32[2]{0}', space=sflag, size = 0x8, scoped, tag = 'scoped memory for tpu_custom_call.1']
    %28 = vsyncpa [#allocation5], 0
    loop: start=0, step=1, limit=4
    $region2: #{tpu_custom_call.1} parent=1 // loop_pre_header
      _
    $region3: #{tpu_custom_call.1} parent=1 // loop_header
      %s30 = sphi 0, %s34
      %p31 = scmp.ge.s32.totalorder %s30, 4
      %s37 = sphi 0, %s49
      %s38 = sphi 0, %s45
      %s39 = sphi 0, %s37
      %s40 = sphi 0, %s38
      %s41 = sphi 0, %s39
      %s42 = sphi 0, %s40
      %s52 = sphi 0, %s54
      %s55 = sphi 0, %s52
      %s56 = sphi 0, %s55
      %s72 = sphi 0, %s56
      %s78 = sphi 0, %s80
      %s81 = sphi 0, %s78
      %s82 = sphi 0, %s81
      %s98 = sphi 0, %s82
      %s104 = sphi 0, %s106
      %s107 = sphi 0, %s104
      %s108 = sphi 0, %s107
      %s124 = sphi 0, %s108
      %s130 = sphi 0, %s132
      %s133 = sphi 0, %s130
      %s134 = sphi 0, %s133
      %s150 = sphi 0, %s134
      %s156 = sphi 0, %s158
      %s159 = sphi 0, %s156
      %s160 = sphi 0, %s159
      %s176 = sphi 0, %s160
      %s182 = sphi 0, %s184
      %s185 = sphi 0, %s182
      %s186 = sphi 0, %s185
      %s202 = sphi 0, %s186
      %s208 = sphi 0, %s210
      %s211 = sphi 0, %s208
      %s212 = sphi 0, %s211
      %s228 = sphi 0, %s212
      %s234 = sphi 0, %s236
      %s237 = sphi 0, %s234
      %s238 = sphi 0, %s237
      %s254 = sphi 0, %s238
      %s260 = sphi 0, %s262
      %s263 = sphi 0, %s260
      %s264 = sphi 0, %s263
      %s280 = sphi 0, %s264
      %s286 = sphi 0, %s288
      %s289 = sphi 0, %s286
      %s290 = sphi 0, %s289
      %s306 = sphi 0, %s290
      %s312 = sphi 0, %s314
      %s315 = sphi 0, %s312
      %s316 = sphi 0, %s315
      %s332 = sphi 0, %s316
      %s338 = sphi 0, %s340
      %s341 = sphi 0, %s338
      %s342 = sphi 0, %s341
      %s358 = sphi 0, %s342
      %s364 = sphi 0, %s366
      %s367 = sphi 0, %s364
      %s368 = sphi 0, %s367
      %s384 = sphi 0, %s368
      %s390 = sphi 0, %s392
      %s393 = sphi 0, %s390
      %s394 = sphi 0, %s393
      %s410 = sphi 0, %s394
      %s416 = sphi 0, %s418
      %s419 = sphi 0, %s416
      %s420 = sphi 0, %s419
      %s436 = sphi 0, %s420
      %s442 = sphi 0, %s444
      %s445 = sphi 0, %s442
      %s446 = sphi 0, %s445
      %s462 = sphi 0, %s446
      %s468 = sphi 0, %s470
      %s471 = sphi 0, %s468
      %s472 = sphi 0, %s471
      %s488 = sphi 0, %s472
      %s494 = sphi 0, %s496
      %s497 = sphi 0, %s494
      %s498 = sphi 0, %s497
      %s514 = sphi 0, %s498
      %s520 = sphi 0, %s522
      %s523 = sphi 0, %s520
      %s524 = sphi 0, %s523
      %s540 = sphi 0, %s524
      %s546 = sphi 0, %s548
      %s549 = sphi 0, %s546
      %s550 = sphi 0, %s549
      %s566 = sphi 0, %s550
      %s572 = sphi 0, %s574
      %s575 = sphi 0, %s572
      %s576 = sphi 0, %s575
      %s592 = sphi 0, %s576
      %s598 = sphi 0, %s600
      %s601 = sphi 0, %s598
      %s602 = sphi 0, %s601
      %s618 = sphi 0, %s602
      %s624 = sphi 0, %s626
      %s627 = sphi 0, %s624
      %s628 = sphi 0, %s627
      %s644 = sphi 0, %s628
      %s650 = sphi 0, %s652
      %s653 = sphi 0, %s650
      %s654 = sphi 0, %s653
      %s670 = sphi 0, %s654
    $region4: #{tpu_custom_call.1} parent=1 // loop_header_branch
      %33 = sbr.rel (%p31) target = $region8
    $region5: #{tpu_custom_call.1} parent=1 // loop_body
      %s35 = ssub.s32 %s30, 1
      %s36 = ssub.s32 %s30, 2
      %s43 = sadd.s32 1, %s38
      %p44 = scmp.ge.s32.totalorder %s43, 2
      %s45 = scalar_select %p44, 0, %s43
      %s46 = sadd.s32 1, %s37
      %s47 = scalar_select %p44, %s46, %s37
      %p48 = scmp.ge.s32.totalorder %s47, 1
      %s49 = scalar_select %p48, 0, %s47
      %s50 = ssub.s32 %s37, %s49
      %p51 = scmp.eq.s32.totalorder %s50, 0
      %s53 = sadd.s32 %s52, 1
      %s54 = scalar_select %p51, %s52, %s53
      %p57 = pneg %p51
      %p58 = scmp.eq.s32.totalorder %s30, 1
      %p59 = por %p57, %p58
      %p60 = scmp.ne.s32.totalorder %s52, %s55
      %p61 = scmp.eq.s32.totalorder %s30, 0
      %p62 = por %p60, %p61
      %p63 = scmp.ne.s32.totalorder %s52, %s55
      %p64 = scmp.eq.s32.totalorder %s35, 1
      %p65 = por %p63, %p64
      %p66 = scmp.ne.s32.totalorder %s55, %s56
      %p67 = scmp.eq.s32.totalorder %s35, 0
      %p68 = por %p66, %p67
      %p69 = scmp.ne.s32.totalorder %s55, %s56
      %p70 = scmp.eq.s32.totalorder %s36, 1
      %p71 = por %p69, %p70
      %p73 = scmp.ne.s32.totalorder %s56, %s72
      %p74 = scmp.eq.s32.totalorder %s36, 0
      %p75 = por %p73, %p74
      %s76 = ssub.s32 %s37, %s49
      %p77 = scmp.eq.s32.totalorder %s76, 0
      %s79 = sadd.s32 %s78, 1
      %s80 = scalar_select %p77, %s78, %s79
      %p83 = pneg %p77
      %p84 = scmp.eq.s32.totalorder %s30, 1
      %p85 = por %p83, %p84
      %p86 = scmp.ne.s32.totalorder %s78, %s81
      %p87 = scmp.eq.s32.totalorder %s30, 0
      %p88 = por %p86, %p87
      %p89 = scmp.ne.s32.totalorder %s78, %s81
      %p90 = scmp.eq.s32.totalorder %s35, 1
      %p91 = por %p89, %p90
      %p92 = scmp.ne.s32.totalorder %s81, %s82
      %p93 = scmp.eq.s32.totalorder %s35, 0
      %p94 = por %p92, %p93
      %p95 = scmp.ne.s32.totalorder %s81, %s82
      %p96 = scmp.eq.s32.totalorder %s36, 1
      %p97 = por %p95, %p96
      %p99 = scmp.ne.s32.totalorder %s82, %s98
      %p100 = scmp.eq.s32.totalorder %s36, 0
      %p101 = por %p99, %p100
      %s102 = ssub.s32 %s37, %s49
      %p103 = scmp.eq.s32.totalorder %s102, 0
      %s105 = sadd.s32 %s104, 1
      %s106 = scalar_select %p103, %s104, %s105
      %p109 = pneg %p103
      %p110 = scmp.eq.s32.totalorder %s30, 1
      %p111 = por %p109, %p110
      %p112 = scmp.ne.s32.totalorder %s104, %s107
      %p113 = scmp.eq.s32.totalorder %s30, 0
      %p114 = por %p112, %p113
      %p115 = scmp.ne.s32.totalorder %s104, %s107
      %p116 = scmp.eq.s32.totalorder %s35, 1
      %p117 = por %p115, %p116
      %p118 = scmp.ne.s32.totalorder %s107, %s108
      %p119 = scmp.eq.s32.totalorder %s35, 0
      %p120 = por %p118, %p119
      %p121 = scmp.ne.s32.totalorder %s107, %s108
      %p122 = scmp.eq.s32.totalorder %s36, 1
      %p123 = por %p121, %p122
      %p125 = scmp.ne.s32.totalorder %s108, %s124
      %p126 = scmp.eq.s32.totalorder %s36, 0
      %p127 = por %p125, %p126
      %s128 = ssub.s32 %s38, %s45
      %p129 = scmp.eq.s32.totalorder %s128, 0
      %s131 = sadd.s32 %s130, 1
      %s132 = scalar_select %p129, %s130, %s131
      %p135 = pneg %p129
      %p136 = scmp.eq.s32.totalorder %s30, 1
      %p137 = por %p135, %p136
      %p138 = scmp.ne.s32.totalorder %s130, %s133
      %p139 = scmp.eq.s32.totalorder %s30, 0
      %p140 = por %p138, %p139
      %p141 = scmp.ne.s32.totalorder %s130, %s133
      %p142 = scmp.eq.s32.totalorder %s35, 1
      %p143 = por %p141, %p142
      %p144 = scmp.ne.s32.totalorder %s133, %s134
      %p145 = scmp.eq.s32.totalorder %s35, 0
      %p146 = por %p144, %p145
      %p147 = scmp.ne.s32.totalorder %s133, %s134
      %p148 = scmp.eq.s32.totalorder %s36, 1
      %p149 = por %p147, %p148
      %p151 = scmp.ne.s32.totalorder %s134, %s150
      %p152 = scmp.eq.s32.totalorder %s36, 0
      %p153 = por %p151, %p152
      %s154 = ssub.s32 %s38, %s45
      %p155 = scmp.eq.s32.totalorder %s154, 0
      %s157 = sadd.s32 %s156, 1
      %s158 = scalar_select %p155, %s156, %s157
      %p161 = pneg %p155
      %p162 = scmp.eq.s32.totalorder %s30, 1
      %p163 = por %p161, %p162
      %p164 = scmp.ne.s32.totalorder %s156, %s159
      %p165 = scmp.eq.s32.totalorder %s30, 0
      %p166 = por %p164, %p165
      %p167 = scmp.ne.s32.totalorder %s156, %s159
      %p168 = scmp.eq.s32.totalorder %s35, 1
      %p169 = por %p167, %p168
      %p170 = scmp.ne.s32.totalorder %s159, %s160
      %p171 = scmp.eq.s32.totalorder %s35, 0
      %p172 = por %p170, %p171
      %p173 = scmp.ne.s32.totalorder %s159, %s160
      %p174 = scmp.eq.s32.totalorder %s36, 1
      %p175 = por %p173, %p174
      %p177 = scmp.ne.s32.totalorder %s160, %s176
      %p178 = scmp.eq.s32.totalorder %s36, 0
      %p179 = por %p177, %p178
      %s180 = ssub.s32 %s38, %s45
      %p181 = scmp.eq.s32.totalorder %s180, 0
      %s183 = sadd.s32 %s182, 1
      %s184 = scalar_select %p181, %s182, %s183
      %p187 = pneg %p181
      %p188 = scmp.eq.s32.totalorder %s30, 1
      %p189 = por %p187, %p188
      %p190 = scmp.ne.s32.totalorder %s182, %s185
      %p191 = scmp.eq.s32.totalorder %s30, 0
      %p192 = por %p190, %p191
      %p193 = scmp.ne.s32.totalorder %s182, %s185
      %p194 = scmp.eq.s32.totalorder %s35, 1
      %p195 = por %p193, %p194
      %p196 = scmp.ne.s32.totalorder %s185, %s186
      %p197 = scmp.eq.s32.totalorder %s35, 0
      %p198 = por %p196, %p197
      %p199 = scmp.ne.s32.totalorder %s185, %s186
      %p200 = scmp.eq.s32.totalorder %s36, 1
      %p201 = por %p199, %p200
      %p203 = scmp.ne.s32.totalorder %s186, %s202
      %p204 = scmp.eq.s32.totalorder %s36, 0
      %p205 = por %p203, %p204
      %s206 = ssub.s32 %s38, %s45
      %p207 = scmp.eq.s32.totalorder %s206, 0
      %s209 = sadd.s32 %s208, 1
      %s210 = scalar_select %p207, %s208, %s209
      %p213 = pneg %p207
      %p214 = scmp.eq.s32.totalorder %s30, 1
      %p215 = por %p213, %p214
      %p216 = scmp.ne.s32.totalorder %s208, %s211
      %p217 = scmp.eq.s32.totalorder %s30, 0
      %p218 = por %p216, %p217
      %p219 = scmp.ne.s32.totalorder %s208, %s211
      %p220 = scmp.eq.s32.totalorder %s35, 1
      %p221 = por %p219, %p220
      %p222 = scmp.ne.s32.totalorder %s211, %s212
      %p223 = scmp.eq.s32.totalorder %s35, 0
      %p224 = por %p222, %p223
      %p225 = scmp.ne.s32.totalorder %s211, %s212
      %p226 = scmp.eq.s32.totalorder %s36, 1
      %p227 = por %p225, %p226
      %p229 = scmp.ne.s32.totalorder %s212, %s228
      %p230 = scmp.eq.s32.totalorder %s36, 0
      %p231 = por %p229, %p230
      %s232 = ssub.s32 %s38, %s45
      %p233 = scmp.eq.s32.totalorder %s232, 0
      %s235 = sadd.s32 %s234, 1
      %s236 = scalar_select %p233, %s234, %s235
      %p239 = pneg %p233
      %p240 = scmp.eq.s32.totalorder %s30, 1
      %p241 = por %p239, %p240
      %p242 = scmp.ne.s32.totalorder %s234, %s237
      %p243 = scmp.eq.s32.totalorder %s30, 0
      %p244 = por %p242, %p243
      %p245 = scmp.ne.s32.totalorder %s234, %s237
      %p246 = scmp.eq.s32.totalorder %s35, 1
      %p247 = por %p245, %p246
      %p248 = scmp.ne.s32.totalorder %s237, %s238
      %p249 = scmp.eq.s32.totalorder %s35, 0
      %p250 = por %p248, %p249
      %p251 = scmp.ne.s32.totalorder %s237, %s238
      %p252 = scmp.eq.s32.totalorder %s36, 1
      %p253 = por %p251, %p252
      %p255 = scmp.ne.s32.totalorder %s238, %s254
      %p256 = scmp.eq.s32.totalorder %s36, 0
      %p257 = por %p255, %p256
      %s258 = ssub.s32 %s38, %s45
      %p259 = scmp.eq.s32.totalorder %s258, 0
      %s261 = sadd.s32 %s260, 1
      %s262 = scalar_select %p259, %s260, %s261
      %p265 = pneg %p259
      %p266 = scmp.eq.s32.totalorder %s30, 1
      %p267 = por %p265, %p266
      %p268 = scmp.ne.s32.totalorder %s260, %s263
      %p269 = scmp.eq.s32.totalorder %s30, 0
      %p270 = por %p268, %p269
      %p271 = scmp.ne.s32.totalorder %s260, %s263
      %p272 = scmp.eq.s32.totalorder %s35, 1
      %p273 = por %p271, %p272
      %p274 = scmp.ne.s32.totalorder %s263, %s264
      %p275 = scmp.eq.s32.totalorder %s35, 0
      %p276 = por %p274, %p275
      %p277 = scmp.ne.s32.totalorder %s263, %s264
      %p278 = scmp.eq.s32.totalorder %s36, 1
      %p279 = por %p277, %p278
      %p281 = scmp.ne.s32.totalorder %s264, %s280
      %p282 = scmp.eq.s32.totalorder %s36, 0
      %p283 = por %p281, %p282
      %s284 = ssub.s32 %s38, %s45
      %p285 = scmp.eq.s32.totalorder %s284, 0
      %s287 = sadd.s32 %s286, 1
      %s288 = scalar_select %p285, %s286, %s287
      %p291 = pneg %p285
      %p292 = scmp.eq.s32.totalorder %s30, 1
      %p293 = por %p291, %p292
      %p294 = scmp.ne.s32.totalorder %s286, %s289
      %p295 = scmp.eq.s32.totalorder %s30, 0
      %p296 = por %p294, %p295
      %p297 = scmp.ne.s32.totalorder %s286, %s289
      %p298 = scmp.eq.s32.totalorder %s35, 1
      %p299 = por %p297, %p298
      %p300 = scmp.ne.s32.totalorder %s289, %s290
      %p301 = scmp.eq.s32.totalorder %s35, 0
      %p302 = por %p300, %p301
      %p303 = scmp.ne.s32.totalorder %s289, %s290
      %p304 = scmp.eq.s32.totalorder %s36, 1
      %p305 = por %p303, %p304
      %p307 = scmp.ne.s32.totalorder %s290, %s306
      %p308 = scmp.eq.s32.totalorder %s36, 0
      %p309 = por %p307, %p308
      %s310 = ssub.s32 %s38, %s45
      %p311 = scmp.eq.s32.totalorder %s310, 0
      %s313 = sadd.s32 %s312, 1
      %s314 = scalar_select %p311, %s312, %s313
      %p317 = pneg %p311
      %p318 = scmp.eq.s32.totalorder %s30, 1
      %p319 = por %p317, %p318
      %p320 = scmp.ne.s32.totalorder %s312, %s315
      %p321 = scmp.eq.s32.totalorder %s30, 0
      %p322 = por %p320, %p321
      %p323 = scmp.ne.s32.totalorder %s312, %s315
      %p324 = scmp.eq.s32.totalorder %s35, 1
      %p325 = por %p323, %p324
      %p326 = scmp.ne.s32.totalorder %s315, %s316
      %p327 = scmp.eq.s32.totalorder %s35, 0
      %p328 = por %p326, %p327
      %p329 = scmp.ne.s32.totalorder %s315, %s316
      %p330 = scmp.eq.s32.totalorder %s36, 1
      %p331 = por %p329, %p330
      %p333 = scmp.ne.s32.totalorder %s316, %s332
      %p334 = scmp.eq.s32.totalorder %s36, 0
      %p335 = por %p333, %p334
      %s336 = ssub.s32 %s38, %s45
      %p337 = scmp.eq.s32.totalorder %s336, 0
      %s339 = sadd.s32 %s338, 1
      %s340 = scalar_select %p337, %s338, %s339
      %p343 = pneg %p337
      %p344 = scmp.eq.s32.totalorder %s30, 1
      %p345 = por %p343, %p344
      %p346 = scmp.ne.s32.totalorder %s338, %s341
      %p347 = scmp.eq.s32.totalorder %s30, 0
      %p348 = por %p346, %p347
      %p349 = scmp.ne.s32.totalorder %s338, %s341
      %p350 = scmp.eq.s32.totalorder %s35, 1
      %p351 = por %p349, %p350
      %p352 = scmp.ne.s32.totalorder %s341, %s342
      %p353 = scmp.eq.s32.totalorder %s35, 0
      %p354 = por %p352, %p353
      %p355 = scmp.ne.s32.totalorder %s341, %s342
      %p356 = scmp.eq.s32.totalorder %s36, 1
      %p357 = por %p355, %p356
      %p359 = scmp.ne.s32.totalorder %s342, %s358
      %p360 = scmp.eq.s32.totalorder %s36, 0
      %p361 = por %p359, %p360
      %s362 = ssub.s32 %s38, %s45
      %p363 = scmp.eq.s32.totalorder %s362, 0
      %s365 = sadd.s32 %s364, 1
      %s366 = scalar_select %p363, %s364, %s365
      %p369 = pneg %p363
      %p370 = scmp.eq.s32.totalorder %s30, 1
      %p371 = por %p369, %p370
      %p372 = scmp.ne.s32.totalorder %s364, %s367
      %p373 = scmp.eq.s32.totalorder %s30, 0
      %p374 = por %p372, %p373
      %p375 = scmp.ne.s32.totalorder %s364, %s367
      %p376 = scmp.eq.s32.totalorder %s35, 1
      %p377 = por %p375, %p376
      %p378 = scmp.ne.s32.totalorder %s367, %s368
      %p379 = scmp.eq.s32.totalorder %s35, 0
      %p380 = por %p378, %p379
      %p381 = scmp.ne.s32.totalorder %s367, %s368
      %p382 = scmp.eq.s32.totalorder %s36, 1
      %p383 = por %p381, %p382
      %p385 = scmp.ne.s32.totalorder %s368, %s384
      %p386 = scmp.eq.s32.totalorder %s36, 0
      %p387 = por %p385, %p386
      %s388 = ssub.s32 %s38, %s45
      %p389 = scmp.eq.s32.totalorder %s388, 0
      %s391 = sadd.s32 %s390, 1
      %s392 = scalar_select %p389, %s390, %s391
      %p395 = pneg %p389
      %p396 = scmp.eq.s32.totalorder %s30, 1
      %p397 = por %p395, %p396
      %p398 = scmp.ne.s32.totalorder %s390, %s393
      %p399 = scmp.eq.s32.totalorder %s30, 0
      %p400 = por %p398, %p399
      %p401 = scmp.ne.s32.totalorder %s390, %s393
      %p402 = scmp.eq.s32.totalorder %s35, 1
      %p403 = por %p401, %p402
      %p404 = scmp.ne.s32.totalorder %s393, %s394
      %p405 = scmp.eq.s32.totalorder %s35, 0
      %p406 = por %p404, %p405
      %p407 = scmp.ne.s32.totalorder %s393, %s394
      %p408 = scmp.eq.s32.totalorder %s36, 1
      %p409 = por %p407, %p408
      %p411 = scmp.ne.s32.totalorder %s394, %s410
      %p412 = scmp.eq.s32.totalorder %s36, 0
      %p413 = por %p411, %p412
      %s414 = ssub.s32 %s38, %s45
      %p415 = scmp.eq.s32.totalorder %s414, 0
      %s417 = sadd.s32 %s416, 1
      %s418 = scalar_select %p415, %s416, %s417
      %p421 = pneg %p415
      %p422 = scmp.eq.s32.totalorder %s30, 1
      %p423 = por %p421, %p422
      %p424 = scmp.ne.s32.totalorder %s416, %s419
      %p425 = scmp.eq.s32.totalorder %s30, 0
      %p426 = por %p424, %p425
      %p427 = scmp.ne.s32.totalorder %s416, %s419
      %p428 = scmp.eq.s32.totalorder %s35, 1
      %p429 = por %p427, %p428
      %p430 = scmp.ne.s32.totalorder %s419, %s420
      %p431 = scmp.eq.s32.totalorder %s35, 0
      %p432 = por %p430, %p431
      %p433 = scmp.ne.s32.totalorder %s419, %s420
      %p434 = scmp.eq.s32.totalorder %s36, 1
      %p435 = por %p433, %p434
      %p437 = scmp.ne.s32.totalorder %s420, %s436
      %p438 = scmp.eq.s32.totalorder %s36, 0
      %p439 = por %p437, %p438
      %s440 = ssub.s32 %s38, %s45
      %p441 = scmp.eq.s32.totalorder %s440, 0
      %s443 = sadd.s32 %s442, 1
      %s444 = scalar_select %p441, %s442, %s443
      %p447 = pneg %p441
      %p448 = scmp.eq.s32.totalorder %s30, 1
      %p449 = por %p447, %p448
      %p450 = scmp.ne.s32.totalorder %s442, %s445
      %p451 = scmp.eq.s32.totalorder %s30, 0
      %p452 = por %p450, %p451
      %p453 = scmp.ne.s32.totalorder %s442, %s445
      %p454 = scmp.eq.s32.totalorder %s35, 1
      %p455 = por %p453, %p454
      %p456 = scmp.ne.s32.totalorder %s445, %s446
      %p457 = scmp.eq.s32.totalorder %s35, 0
      %p458 = por %p456, %p457
      %p459 = scmp.ne.s32.totalorder %s445, %s446
      %p460 = scmp.eq.s32.totalorder %s36, 1
      %p461 = por %p459, %p460
      %p463 = scmp.ne.s32.totalorder %s446, %s462
      %p464 = scmp.eq.s32.totalorder %s36, 0
      %p465 = por %p463, %p464
      %s466 = ssub.s32 %s38, %s45
      %p467 = scmp.eq.s32.totalorder %s466, 0
      %s469 = sadd.s32 %s468, 1
      %s470 = scalar_select %p467, %s468, %s469
      %p473 = pneg %p467
      %p474 = scmp.eq.s32.totalorder %s30, 1
      %p475 = por %p473, %p474
      %p476 = scmp.ne.s32.totalorder %s468, %s471
      %p477 = scmp.eq.s32.totalorder %s30, 0
      %p478 = por %p476, %p477
      %p479 = scmp.ne.s32.totalorder %s468, %s471
      %p480 = scmp.eq.s32.totalorder %s35, 1
      %p481 = por %p479, %p480
      %p482 = scmp.ne.s32.totalorder %s471, %s472
      %p483 = scmp.eq.s32.totalorder %s35, 0
      %p484 = por %p482, %p483
      %p485 = scmp.ne.s32.totalorder %s471, %s472
      %p486 = scmp.eq.s32.totalorder %s36, 1
      %p487 = por %p485, %p486
      %p489 = scmp.ne.s32.totalorder %s472, %s488
      %p490 = scmp.eq.s32.totalorder %s36, 0
      %p491 = por %p489, %p490
      %s492 = ssub.s32 %s38, %s45
      %p493 = scmp.eq.s32.totalorder %s492, 0
      %s495 = sadd.s32 %s494, 1
      %s496 = scalar_select %p493, %s494, %s495
      %p499 = pneg %p493
      %p500 = scmp.eq.s32.totalorder %s30, 1
      %p501 = por %p499, %p500
      %p502 = scmp.ne.s32.totalorder %s494, %s497
      %p503 = scmp.eq.s32.totalorder %s30, 0
      %p504 = por %p502, %p503
      %p505 = scmp.ne.s32.totalorder %s494, %s497
      %p506 = scmp.eq.s32.totalorder %s35, 1
      %p507 = por %p505, %p506
      %p508 = scmp.ne.s32.totalorder %s497, %s498
      %p509 = scmp.eq.s32.totalorder %s35, 0
      %p510 = por %p508, %p509
      %p511 = scmp.ne.s32.totalorder %s497, %s498
      %p512 = scmp.eq.s32.totalorder %s36, 1
      %p513 = por %p511, %p512
      %p515 = scmp.ne.s32.totalorder %s498, %s514
      %p516 = scmp.eq.s32.totalorder %s36, 0
      %p517 = por %p515, %p516
      %s518 = ssub.s32 %s38, %s45
      %p519 = scmp.eq.s32.totalorder %s518, 0
      %s521 = sadd.s32 %s520, 1
      %s522 = scalar_select %p519, %s520, %s521
      %p525 = pneg %p519
      %p526 = scmp.eq.s32.totalorder %s30, 1
      %p527 = por %p525, %p526
      %p528 = scmp.ne.s32.totalorder %s520, %s523
      %p529 = scmp.eq.s32.totalorder %s30, 0
      %p530 = por %p528, %p529
      %p531 = scmp.ne.s32.totalorder %s520, %s523
      %p532 = scmp.eq.s32.totalorder %s35, 1
      %p533 = por %p531, %p532
      %p534 = scmp.ne.s32.totalorder %s523, %s524
      %p535 = scmp.eq.s32.totalorder %s35, 0
      %p536 = por %p534, %p535
      %p537 = scmp.ne.s32.totalorder %s523, %s524
      %p538 = scmp.eq.s32.totalorder %s36, 1
      %p539 = por %p537, %p538
      %p541 = scmp.ne.s32.totalorder %s524, %s540
      %p542 = scmp.eq.s32.totalorder %s36, 0
      %p543 = por %p541, %p542
      %s544 = ssub.s32 %s38, %s45
      %p545 = scmp.eq.s32.totalorder %s544, 0
      %s547 = sadd.s32 %s546, 1
      %s548 = scalar_select %p545, %s546, %s547
      %p551 = pneg %p545
      %p552 = scmp.eq.s32.totalorder %s30, 1
      %p553 = por %p551, %p552
      %p554 = scmp.ne.s32.totalorder %s546, %s549
      %p555 = scmp.eq.s32.totalorder %s30, 0
      %p556 = por %p554, %p555
      %p557 = scmp.ne.s32.totalorder %s546, %s549
      %p558 = scmp.eq.s32.totalorder %s35, 1
      %p559 = por %p557, %p558
      %p560 = scmp.ne.s32.totalorder %s549, %s550
      %p561 = scmp.eq.s32.totalorder %s35, 0
      %p562 = por %p560, %p561
      %p563 = scmp.ne.s32.totalorder %s549, %s550
      %p564 = scmp.eq.s32.totalorder %s36, 1
      %p565 = por %p563, %p564
      %p567 = scmp.ne.s32.totalorder %s550, %s566
      %p568 = scmp.eq.s32.totalorder %s36, 0
      %p569 = por %p567, %p568
      %s570 = ssub.s32 %s38, %s45
      %p571 = scmp.eq.s32.totalorder %s570, 0
      %s573 = sadd.s32 %s572, 1
      %s574 = scalar_select %p571, %s572, %s573
      %p577 = pneg %p571
      %p578 = scmp.eq.s32.totalorder %s30, 1
      %p579 = por %p577, %p578
      %p580 = scmp.ne.s32.totalorder %s572, %s575
      %p581 = scmp.eq.s32.totalorder %s30, 0
      %p582 = por %p580, %p581
      %p583 = scmp.ne.s32.totalorder %s572, %s575
      %p584 = scmp.eq.s32.totalorder %s35, 1
      %p585 = por %p583, %p584
      %p586 = scmp.ne.s32.totalorder %s575, %s576
      %p587 = scmp.eq.s32.totalorder %s35, 0
      %p588 = por %p586, %p587
      %p589 = scmp.ne.s32.totalorder %s575, %s576
      %p590 = scmp.eq.s32.totalorder %s36, 1
      %p591 = por %p589, %p590
      %p593 = scmp.ne.s32.totalorder %s576, %s592
      %p594 = scmp.eq.s32.totalorder %s36, 0
      %p595 = por %p593, %p594
      %s596 = ssub.s32 %s38, %s45
      %p597 = scmp.eq.s32.totalorder %s596, 0
      %s599 = sadd.s32 %s598, 1
      %s600 = scalar_select %p597, %s598, %s599
      %p603 = pneg %p597
      %p604 = scmp.eq.s32.totalorder %s30, 1
      %p605 = por %p603, %p604
      %p606 = scmp.ne.s32.totalorder %s598, %s601
      %p607 = scmp.eq.s32.totalorder %s30, 0
      %p608 = por %p606, %p607
      %p609 = scmp.ne.s32.totalorder %s598, %s601
      %p610 = scmp.eq.s32.totalorder %s35, 1
      %p611 = por %p609, %p610
      %p612 = scmp.ne.s32.totalorder %s601, %s602
      %p613 = scmp.eq.s32.totalorder %s35, 0
      %p614 = por %p612, %p613
      %p615 = scmp.ne.s32.totalorder %s601, %s602
      %p616 = scmp.eq.s32.totalorder %s36, 1
      %p617 = por %p615, %p616
      %p619 = scmp.ne.s32.totalorder %s602, %s618
      %p620 = scmp.eq.s32.totalorder %s36, 0
      %p621 = por %p619, %p620
      %s622 = ssub.s32 %s38, %s45
      %p623 = scmp.eq.s32.totalorder %s622, 0
      %s625 = sadd.s32 %s624, 1
      %s626 = scalar_select %p623, %s624, %s625
      %p629 = pneg %p623
      %p630 = scmp.eq.s32.totalorder %s30, 1
      %p631 = por %p629, %p630
      %p632 = scmp.ne.s32.totalorder %s624, %s627
      %p633 = scmp.eq.s32.totalorder %s30, 0
      %p634 = por %p632, %p633
      %p635 = scmp.ne.s32.totalorder %s624, %s627
      %p636 = scmp.eq.s32.totalorder %s35, 1
      %p637 = por %p635, %p636
      %p638 = scmp.ne.s32.totalorder %s627, %s628
      %p639 = scmp.eq.s32.totalorder %s35, 0
      %p640 = por %p638, %p639
      %p641 = scmp.ne.s32.totalorder %s627, %s628
      %p642 = scmp.eq.s32.totalorder %s36, 1
      %p643 = por %p641, %p642
      %p645 = scmp.ne.s32.totalorder %s628, %s644
      %p646 = scmp.eq.s32.totalorder %s36, 0
      %p647 = por %p645, %p646
      %s648 = ssub.s32 %s37, %s49
      %p649 = scmp.eq.s32.totalorder %s648, 0
      %s651 = sadd.s32 %s650, 1
      %s652 = scalar_select %p649, %s650, %s651
      %p655 = pneg %p649
      %p656 = scmp.eq.s32.totalorder %s30, 1
      %p657 = por %p655, %p656
      %p658 = scmp.ne.s32.totalorder %s650, %s653
      %p659 = scmp.eq.s32.totalorder %s30, 0
      %p660 = por %p658, %p659
      %p661 = scmp.ne.s32.totalorder %s650, %s653
      %p662 = scmp.eq.s32.totalorder %s35, 1
      %p663 = por %p661, %p662
      %p664 = scmp.ne.s32.totalorder %s653, %s654
      %p665 = scmp.eq.s32.totalorder %s35, 0
      %p666 = por %p664, %p665
      %p667 = scmp.ne.s32.totalorder %s653, %s654
      %p668 = scmp.eq.s32.totalorder %s36, 1
      %p669 = por %p667, %p668
      %p671 = scmp.ne.s32.totalorder %s654, %s670
      %p672 = scmp.eq.s32.totalorder %s36, 0
      %p673 = por %p671, %p672
      %p674 = scmp.le.s32.totalorder 1, %s30
      %p675 = scmp.lt.s32.totalorder %s30, 3
      %p676 = pnand %p674, %p675
      %p677 = pneg %p676
      // Predicated region
      $region9: #{tpu_custom_call.1} parent=5 // pred_check
        _
      $region10: #{tpu_custom_call.1} parent=5 // pred_check_branch
        %679 = sbr.rel (%p676) target = $region12
      $region11: #{tpu_custom_call.1} parent=5 // pred_region
        %s680 = ssub.s32 %s30, 1
        // Predicated region
        $region13: #{tpu_custom_call.1} parent=11 // pred_check
          %p681 = pneg %p68
        $region14: #{tpu_custom_call.1} parent=11 // pred_check_branch
          %683 = sbr.rel (%p681) target = $region16
        $region15: #{tpu_custom_call.1} parent=11 // pred_region
          %s684 = smul.u32 2, %s39
          %p685 = scmp.lt.s32.totalorder %s684, 1
          %s686 = scalar_select %p685, %s684, 1
          %s687 = smul.addr %s686, 8
          %s688 = scalar_lea.vmem %s0, %s687
          %s689 = smul.u32 2, %s39
        $region16: #{tpu_custom_call.1} parent=11 // pred_fallthru
          _
        // Predicated region
        $region17: #{tpu_custom_call.1} parent=11 // pred_check
          %p690 = pneg %p94
        $region18: #{tpu_custom_call.1} parent=11 // pred_check_branch
          %692 = sbr.rel (%p690) target = $region20
        $region19: #{tpu_custom_call.1} parent=11 // pred_region
          %s693 = smul.u32 2, %s39
          %p694 = scmp.lt.s32.totalorder %s693, 1
          %s695 = scalar_select %p694, %s693, 1
          %s696 = smul.addr %s695, 8
          %s697 = scalar_lea.vmem %s1, %s696
          %s698 = smul.u32 2, %s39
        $region20: #{tpu_custom_call.1} parent=11 // pred_fallthru
          _
        // Predicated region
        $region21: #{tpu_custom_call.1} parent=11 // pred_check
          %p699 = pneg %p120
        $region22: #{tpu_custom_call.1} parent=11 // pred_check_branch
          %701 = sbr.rel (%p699) target = $region24
        $region23: #{tpu_custom_call.1} parent=11 // pred_region
          %s702 = smul.u32 2, %s39
          %p703 = scmp.lt.s32.totalorder %s702, 1
          %s704 = scalar_select %p703, %s702, 1
          %s705 = smul.addr %s704, 8
          %s706 = scalar_lea.vmem %s2, %s705
          %s707 = smul.u32 2, %s39
        $region24: #{tpu_custom_call.1} parent=11 // pred_fallthru
          _
      $region12: #{tpu_custom_call.1} parent=5 // pred_fallthru
        _
      %p708 = scmp.lt.s32.totalorder %s30, 2
      // Predicated region
      $region25: #{tpu_custom_call.1} parent=5 // pred_check
        %p709 = pneg %p708
      $region26: #{tpu_custom_call.1} parent=5 // pred_check_branch
        %711 = sbr.rel (%p709) target = $region28
      $region27: #{tpu_custom_call.1} parent=5 // pred_region
        // Predicated region
        $region29: #{tpu_custom_call.1} parent=27 // pred_check
          %p712 = pneg %p140
        $region30: #{tpu_custom_call.1} parent=27 // pred_check_branch
          %714 = sbr.rel (%p712) target = $region32
        $region31: #{tpu_custom_call.1} parent=27 // pred_region
          %p715 = scmp.lt.s32.totalorder %s38, 1
          %s716 = scalar_select %p715, %s38, 1
          %s717 = smul.addr %s716, 4
          %s718 = smul.addr %s717, 4
          %s719 = scalar_lea.vmem %s3, %s718
        $region32: #{tpu_custom_call.1} parent=27 // pred_fallthru
          _
        // Predicated region
        $region33: #{tpu_custom_call.1} parent=27 // pred_check
          %p720 = pneg %p166
        $region34: #{tpu_custom_call.1} parent=27 // pred_check_branch
          %722 = sbr.rel (%p720) target = $region36
        $region35: #{tpu_custom_call.1} parent=27 // pred_region
          %p723 = scmp.lt.s32.totalorder %s38, 1
          %s724 = scalar_select %p723, %s38, 1
          %s725 = scalar_lea.vmem %s4, %s724
        $region36: #{tpu_custom_call.1} parent=27 // pred_fallthru
          _
        // Predicated region
        $region37: #{tpu_custom_call.1} parent=27 // pred_check
          %p726 = pneg %p192
        $region38: #{tpu_custom_call.1} parent=27 // pred_check_branch
          %728 = sbr.rel (%p726) target = $region40
        $region39: #{tpu_custom_call.1} parent=27 // pred_region
          %p729 = scmp.lt.s32.totalorder %s38, 1
          %s730 = scalar_select %p729, %s38, 1
          %s731 = smul.addr %s730, 4
          %s732 = smul.addr %s731, 4
          %s733 = scalar_lea.vmem %s5, %s732
        $region40: #{tpu_custom_call.1} parent=27 // pred_fallthru
          _
        // Predicated region
        $region41: #{tpu_custom_call.1} parent=27 // pred_check
          %p734 = pneg %p218
        $region42: #{tpu_custom_call.1} parent=27 // pred_check_branch
          %736 = sbr.rel (%p734) target = $region44
        $region43: #{tpu_custom_call.1} parent=27 // pred_region
          %p737 = scmp.lt.s32.totalorder %s38, 1
          %s738 = scalar_select %p737, %s38, 1
          %s739 = scalar_lea.vmem %s6, %s738
        $region44: #{tpu_custom_call.1} parent=27 // pred_fallthru
          _
        // Predicated region
        $region45: #{tpu_custom_call.1} parent=27 // pred_check
          %p740 = pneg %p244
        $region46: #{tpu_custom_call.1} parent=27 // pred_check_branch
          %742 = sbr.rel (%p740) target = $region48
        $region47: #{tpu_custom_call.1} parent=27 // pred_region
          %p743 = scmp.lt.s32.totalorder %s38, 1
          %s744 = scalar_select %p743, %s38, 1
          %s745 = scalar_lea.vmem %s7, %s744
        $region48: #{tpu_custom_call.1} parent=27 // pred_fallthru
          _
        // Predicated region
        $region49: #{tpu_custom_call.1} parent=27 // pred_check
          %p746 = pneg %p270
        $region50: #{tpu_custom_call.1} parent=27 // pred_check_branch
          %748 = sbr.rel (%p746) target = $region52
        $region51: #{tpu_custom_call.1} parent=27 // pred_region
          %p749 = scmp.lt.s32.totalorder %s38, 1
          %s750 = scalar_select %p749, %s38, 1
          %s751 = scalar_lea.vmem %s8, %s750
        $region52: #{tpu_custom_call.1} parent=27 // pred_fallthru
          _
        // Predicated region
        $region53: #{tpu_custom_call.1} parent=27 // pred_check
          %p752 = pneg %p296
        $region54: #{tpu_custom_call.1} parent=27 // pred_check_branch
          %754 = sbr.rel (%p752) target = $region56
        $region55: #{tpu_custom_call.1} parent=27 // pred_region
          %p755 = scmp.lt.s32.totalorder %s38, 1
          %s756 = scalar_select %p755, %s38, 1
          %s757 = smul.addr %s756, 4
          %s758 = smul.addr %s757, 4
          %s759 = scalar_lea.vmem %s9, %s758
        $region56: #{tpu_custom_call.1} parent=27 // pred_fallthru
          _
        // Predicated region
        $region57: #{tpu_custom_call.1} parent=27 // pred_check
          %p760 = pneg %p322
        $region58: #{tpu_custom_call.1} parent=27 // pred_check_branch
          %762 = sbr.rel (%p760) target = $region60
        $region59: #{tpu_custom_call.1} parent=27 // pred_region
          %p763 = scmp.lt.s32.totalorder %s38, 1
          %s764 = scalar_select %p763, %s38, 1
          %s765 = scalar_lea.vmem %s10, %s764
        $region60: #{tpu_custom_call.1} parent=27 // pred_fallthru
          _
        // Predicated region
        $region61: #{tpu_custom_call.1} parent=27 // pred_check
          %p766 = pneg %p348
        $region62: #{tpu_custom_call.1} parent=27 // pred_check_branch
          %768 = sbr.rel (%p766) target = $region64
        $region63: #{tpu_custom_call.1} parent=27 // pred_region
          %p769 = scmp.lt.s32.totalorder %s38, 1
          %s770 = scalar_select %p769, %s38, 1
          %s771 = smul.addr %s770, 4
          %s772 = smul.addr %s771, 4
          %s773 = scalar_lea.vmem %s11, %s772
        $region64: #{tpu_custom_call.1} parent=27 // pred_fallthru
          _
        // Predicated region
        $region65: #{tpu_custom_call.1} parent=27 // pred_check
          %p774 = pneg %p374
        $region66: #{tpu_custom_call.1} parent=27 // pred_check_branch
          %776 = sbr.rel (%p774) target = $region68
        $region67: #{tpu_custom_call.1} parent=27 // pred_region
          %p777 = scmp.lt.s32.totalorder %s38, 1
          %s778 = scalar_select %p777, %s38, 1
          %s779 = scalar_lea.vmem %s12, %s778
        $region68: #{tpu_custom_call.1} parent=27 // pred_fallthru
          _
        // Predicated region
        $region69: #{tpu_custom_call.1} parent=27 // pred_check
          %p780 = pneg %p400
        $region70: #{tpu_custom_call.1} parent=27 // pred_check_branch
          %782 = sbr.rel (%p780) target = $region72
        $region71: #{tpu_custom_call.1} parent=27 // pred_region
          %p783 = scmp.lt.s32.totalorder %s38, 1
          %s784 = scalar_select %p783, %s38, 1
          %s785 = smul.addr %s784, 4
          %s786 = smul.addr %s785, 4
          %s787 = scalar_lea.vmem %s13, %s786
        $region72: #{tpu_custom_call.1} parent=27 // pred_fallthru
          _
        // Predicated region
        $region73: #{tpu_custom_call.1} parent=27 // pred_check
          %p788 = pneg %p426
        $region74: #{tpu_custom_call.1} parent=27 // pred_check_branch
          %790 = sbr.rel (%p788) target = $region76
        $region75: #{tpu_custom_call.1} parent=27 // pred_region
          %p791 = scmp.lt.s32.totalorder %s38, 1
          %s792 = scalar_select %p791, %s38, 1
          %s793 = scalar_lea.vmem %s14, %s792
        $region76: #{tpu_custom_call.1} parent=27 // pred_fallthru
          _
        // Predicated region
        $region77: #{tpu_custom_call.1} parent=27 // pred_check
          %p794 = pneg %p452
        $region78: #{tpu_custom_call.1} parent=27 // pred_check_branch
          %796 = sbr.rel (%p794) target = $region80
        $region79: #{tpu_custom_call.1} parent=27 // pred_region
          %p797 = scmp.lt.s32.totalorder %s38, 1
          %s798 = scalar_select %p797, %s38, 1
          %s799 = scalar_lea.vmem %s15, %s798
        $region80: #{tpu_custom_call.1} parent=27 // pred_fallthru
          _
        // Predicated region
        $region81: #{tpu_custom_call.1} parent=27 // pred_check
          %p800 = pneg %p478
        $region82: #{tpu_custom_call.1} parent=27 // pred_check_branch
          %802 = sbr.rel (%p800) target = $region84
        $region83: #{tpu_custom_call.1} parent=27 // pred_region
          %p803 = scmp.lt.s32.totalorder %s38, 1
          %s804 = scalar_select %p803, %s38, 1
          %s805 = scalar_lea.vmem %s16, %s804
        $region84: #{tpu_custom_call.1} parent=27 // pred_fallthru
          _
        // Predicated region
        $region85: #{tpu_custom_call.1} parent=27 // pred_check
          %p806 = pneg %p504
        $region86: #{tpu_custom_call.1} parent=27 // pred_check_branch
          %808 = sbr.rel (%p806) target = $region88
        $region87: #{tpu_custom_call.1} parent=27 // pred_region
          %p809 = scmp.lt.s32.totalorder %s38, 1
          %s810 = scalar_select %p809, %s38, 1
          %s811 = smul.addr %s810, 64
          %s812 = smul.addr %s811, 4
          %s813 = scalar_lea.vmem %s17, %s812
        $region88: #{tpu_custom_call.1} parent=27 // pred_fallthru
          _
        // Predicated region
        $region89: #{tpu_custom_call.1} parent=27 // pred_check
          %p814 = pneg %p530
        $region90: #{tpu_custom_call.1} parent=27 // pred_check_branch
          %816 = sbr.rel (%p814) target = $region92
        $region91: #{tpu_custom_call.1} parent=27 // pred_region
          %p817 = scmp.lt.s32.totalorder %s38, 1
          %s818 = scalar_select %p817, %s38, 1
          %s819 = smul.addr %s818, 16
          %s820 = scalar_lea.vmem %s18, %s819
        $region92: #{tpu_custom_call.1} parent=27 // pred_fallthru
          _
        // Predicated region
        $region93: #{tpu_custom_call.1} parent=27 // pred_check
          %p821 = pneg %p556
        $region94: #{tpu_custom_call.1} parent=27 // pred_check_branch
          %823 = sbr.rel (%p821) target = $region96
        $region95: #{tpu_custom_call.1} parent=27 // pred_region
          %p824 = scmp.lt.s32.totalorder %s38, 1
          %s825 = scalar_select %p824, %s38, 1
          %s826 = smul.addr %s825, 256
          %s827 = smul.addr %s826, 4
          %s828 = scalar_lea.vmem %s19, %s827
        $region96: #{tpu_custom_call.1} parent=27 // pred_fallthru
          _
        // Predicated region
        $region97: #{tpu_custom_call.1} parent=27 // pred_check
          %p829 = pneg %p582
        $region98: #{tpu_custom_call.1} parent=27 // pred_check_branch
          %831 = sbr.rel (%p829) target = $region100
        $region99: #{tpu_custom_call.1} parent=27 // pred_region
          %p832 = scmp.lt.s32.totalorder %s38, 1
          %s833 = scalar_select %p832, %s38, 1
          %s834 = scalar_lea.vmem %s20, %s833
        $region100: #{tpu_custom_call.1} parent=27 // pred_fallthru
          _
        // Predicated region
        $region101: #{tpu_custom_call.1} parent=27 // pred_check
          %p835 = pneg %p608
        $region102: #{tpu_custom_call.1} parent=27 // pred_check_branch
          %837 = sbr.rel (%p835) target = $region104
        $region103: #{tpu_custom_call.1} parent=27 // pred_region
          %p838 = scmp.lt.s32.totalorder %s38, 1
          %s839 = scalar_select %p838, %s38, 1
          %s840 = scalar_lea.vmem %s21, %s839
        $region104: #{tpu_custom_call.1} parent=27 // pred_fallthru
          _
        // Predicated region
        $region105: #{tpu_custom_call.1} parent=27 // pred_check
          %p841 = pneg %p634
        $region106: #{tpu_custom_call.1} parent=27 // pred_check_branch
          %843 = sbr.rel (%p841) target = $region108
        $region107: #{tpu_custom_call.1} parent=27 // pred_region
          %p844 = scmp.lt.s32.totalorder %s38, 1
          %s845 = scalar_select %p844, %s38, 1
          %s846 = scalar_lea.vmem %s22, %s845
        $region108: #{tpu_custom_call.1} parent=27 // pred_fallthru
          _
      $region28: #{tpu_custom_call.1} parent=5 // pred_fallthru
        _
      %p847 = scmp.le.s32.totalorder 1, %s30
      %p848 = scmp.lt.s32.totalorder %s30, 3
      %p849 = pnand %p847, %p848
      %p850 = pneg %p849
      // Predicated region
      $region109: #{tpu_custom_call.1} parent=5 // pred_check
        _
      $region110: #{tpu_custom_call.1} parent=5 // pred_check_branch
        %852 = sbr.rel (%p849) target = $region112
      $region111: #{tpu_custom_call.1} parent=5 // pred_region
        %s853 = ssub.s32 %s30, 1
        %s854 = smul.u32 2, %s39
        %p855 = scmp.lt.s32.totalorder %s854, 1
        %s856 = scalar_select %p855, %s854, 1
        %s857 = smul.addr %s856, 8
        %s858 = scalar_lea.vmem %s0, %s857
        %p859 = pneg %p68
        %p860 = pneg %p65
        %s861 = smul.u32 2, %s39
        %p862 = scmp.lt.s32.totalorder %s861, 1
        %s863 = scalar_select %p862, %s861, 1
        %s864 = smul.addr %s863, 8
        %s865 = scalar_lea.vmem %s1, %s864
        %p866 = pneg %p94
        %p867 = pneg %p91
        %s868 = smul.u32 2, %s39
        %p869 = scmp.lt.s32.totalorder %s868, 1
        %s870 = scalar_select %p869, %s868, 1
        %s871 = smul.addr %s870, 8
        %s872 = scalar_lea.vmem %s2, %s871
        %p873 = pneg %p120
        %p874 = pneg %p117
        %p875 = scmp.lt.s32.totalorder %s40, 1
        %s876 = scalar_select %p875, %s40, 1
        %s877 = smul.addr %s876, 4
        %s878 = smul.addr %s877, 4
        %s879 = scalar_lea.vmem %s3, %s878
        %p880 = pneg %p146
        %p881 = pneg %p143
        %p882 = scmp.lt.s32.totalorder %s40, 1
        %s883 = scalar_select %p882, %s40, 1
        %s884 = scalar_lea.vmem %s4, %s883
        %p885 = pneg %p172
        %p886 = pneg %p169
        %p887 = scmp.lt.s32.totalorder %s40, 1
        %s888 = scalar_select %p887, %s40, 1
        %s889 = smul.addr %s888, 4
        %s890 = smul.addr %s889, 4
        %s891 = scalar_lea.vmem %s5, %s890
        %p892 = pneg %p198
        %p893 = pneg %p195
        %p894 = scmp.lt.s32.totalorder %s40, 1
        %s895 = scalar_select %p894, %s40, 1
        %s896 = scalar_lea.vmem %s6, %s895
        %p897 = pneg %p224
        %p898 = pneg %p221
        %p899 = scmp.lt.s32.totalorder %s40, 1
        %s900 = scalar_select %p899, %s40, 1
        %s901 = scalar_lea.vmem %s7, %s900
        %p902 = pneg %p250
        %p903 = pneg %p247
        %p904 = scmp.lt.s32.totalorder %s40, 1
        %s905 = scalar_select %p904, %s40, 1
        %s906 = scalar_lea.vmem %s8, %s905
        %p907 = pneg %p276
        %p908 = pneg %p273
        %p909 = scmp.lt.s32.totalorder %s40, 1
        %s910 = scalar_select %p909, %s40, 1
        %s911 = smul.addr %s910, 4
        %s912 = smul.addr %s911, 4
        %s913 = scalar_lea.vmem %s9, %s912
        %p914 = pneg %p302
        %p915 = pneg %p299
        %p916 = scmp.lt.s32.totalorder %s40, 1
        %s917 = scalar_select %p916, %s40, 1
        %s918 = scalar_lea.vmem %s10, %s917
        %p919 = pneg %p328
        %p920 = pneg %p325
        %p921 = scmp.lt.s32.totalorder %s40, 1
        %s922 = scalar_select %p921, %s40, 1
        %s923 = smul.addr %s922, 4
        %s924 = smul.addr %s923, 4
        %s925 = scalar_lea.vmem %s11, %s924
        %p926 = pneg %p354
        %p927 = pneg %p351
        %p928 = scmp.lt.s32.totalorder %s40, 1
        %s929 = scalar_select %p928, %s40, 1
        %s930 = scalar_lea.vmem %s12, %s929
        %p931 = pneg %p380
        %p932 = pneg %p377
        %p933 = scmp.lt.s32.totalorder %s40, 1
        %s934 = scalar_select %p933, %s40, 1
        %s935 = smul.addr %s934, 4
        %s936 = smul.addr %s935, 4
        %s937 = scalar_lea.vmem %s13, %s936
        %p938 = pneg %p406
        %p939 = pneg %p403
        %p940 = scmp.lt.s32.totalorder %s40, 1
        %s941 = scalar_select %p940, %s40, 1
        %s942 = scalar_lea.vmem %s14, %s941
        %p943 = pneg %p432
        %p944 = pneg %p429
        %p945 = scmp.lt.s32.totalorder %s40, 1
        %s946 = scalar_select %p945, %s40, 1
        %s947 = scalar_lea.vmem %s15, %s946
        %p948 = pneg %p458
        %p949 = pneg %p455
        %p950 = scmp.lt.s32.totalorder %s40, 1
        %s951 = scalar_select %p950, %s40, 1
        %s952 = scalar_lea.vmem %s16, %s951
        %p953 = pneg %p484
        %p954 = pneg %p481
        %p955 = scmp.lt.s32.totalorder %s40, 1
        %s956 = scalar_select %p955, %s40, 1
        %s957 = smul.addr %s956, 64
        %s958 = smul.addr %s957, 4
        %s959 = scalar_lea.vmem %s17, %s958
        %p960 = pneg %p510
        %p961 = pneg %p507
        %p962 = scmp.lt.s32.totalorder %s40, 1
        %s963 = scalar_select %p962, %s40, 1
        %s964 = smul.addr %s963, 16
        %s965 = scalar_lea.vmem %s18, %s964
        %p966 = pneg %p536
        %p967 = pneg %p533
        %p968 = scmp.lt.s32.totalorder %s40, 1
        %s969 = scalar_select %p968, %s40, 1
        %s970 = smul.addr %s969, 256
        %s971 = smul.addr %s970, 4
        %s972 = scalar_lea.vmem %s19, %s971
        %p973 = pneg %p562
        %p974 = pneg %p559
        %p975 = scmp.lt.s32.totalorder %s40, 1
        %s976 = scalar_select %p975, %s40, 1
        %s977 = scalar_lea.vmem %s20, %s976
        %p978 = pneg %p588
        %p979 = pneg %p585
        %p980 = scmp.lt.s32.totalorder %s40, 1
        %s981 = scalar_select %p980, %s40, 1
        %s982 = scalar_lea.vmem %s21, %s981
        %p983 = pneg %p614
        %p984 = pneg %p611
        %p985 = scmp.lt.s32.totalorder %s40, 1
        %s986 = scalar_select %p985, %s40, 1
        %s987 = scalar_lea.vmem %s22, %s986
        %p988 = pneg %p640
        %p989 = pneg %p637
        %p990 = pneg %p666
        %p991 = pneg %p663
        %s992 = smul.u32 2, %s39
        %p993 = scmp.lt.s32.totalorder %s992, 1
        %s994 = scalar_select %p993, %s992, 1
        %s995 = smul.addr %s994, 8
        %s996 = scalar_lea.vmem %s0, %s995
        %s997 = smul.u32 2, %s39
        %s998 = smul.u32 2, %s39
        %p999 = scmp.lt.s32.totalorder %s998, 1
        %s1000 = scalar_select %p999, %s998, 1
        %s1001 = smul.addr %s1000, 8
        %s1002 = scalar_lea.vmem %s1, %s1001
        %s1003 = smul.u32 2, %s39
        %s1004 = smul.u32 2, %s39
        %p1005 = scmp.lt.s32.totalorder %s1004, 1
        %s1006 = scalar_select %p1005, %s1004, 1
        %s1007 = smul.addr %s1006, 8
        %s1008 = scalar_lea.vmem %s2, %s1007
        %s1009 = smul.u32 2, %s39
        %p1010 = scmp.lt.s32.totalorder %s40, 1
        %s1011 = scalar_select %p1010, %s40, 1
        %s1012 = smul.addr %s1011, 4
        %s1013 = smul.addr %s1012, 4
        %s1014 = scalar_lea.vmem %s3, %s1013
        %p1015 = scmp.lt.s32.totalorder %s40, 1
        %s1016 = scalar_select %p1015, %s40, 1
        %s1017 = scalar_lea.vmem %s4, %s1016
        %p1018 = scmp.lt.s32.totalorder %s40, 1
        %s1019 = scalar_select %p1018, %s40, 1
        %s1020 = smul.addr %s1019, 4
        %s1021 = smul.addr %s1020, 4
        %s1022 = scalar_lea.vmem %s5, %s1021
        %p1023 = scmp.lt.s32.totalorder %s40, 1
        %s1024 = scalar_select %p1023, %s40, 1
        %s1025 = scalar_lea.vmem %s6, %s1024
        %p1026 = scmp.lt.s32.totalorder %s40, 1
        %s1027 = scalar_select %p1026, %s40, 1
        %s1028 = scalar_lea.vmem %s7, %s1027
        %p1029 = scmp.lt.s32.totalorder %s40, 1
        %s1030 = scalar_select %p1029, %s40, 1
        %s1031 = scalar_lea.vmem %s8, %s1030
        %p1032 = scmp.lt.s32.totalorder %s40, 1
        %s1033 = scalar_select %p1032, %s40, 1
        %s1034 = smul.addr %s1033, 4
        %s1035 = smul.addr %s1034, 4
        %s1036 = scalar_lea.vmem %s9, %s1035
        %p1037 = scmp.lt.s32.totalorder %s40, 1
        %s1038 = scalar_select %p1037, %s40, 1
        %s1039 = scalar_lea.vmem %s10, %s1038
        %p1040 = scmp.lt.s32.totalorder %s40, 1
        %s1041 = scalar_select %p1040, %s40, 1
        %s1042 = smul.addr %s1041, 4
        %s1043 = smul.addr %s1042, 4
        %s1044 = scalar_lea.vmem %s11, %s1043
        %p1045 = scmp.lt.s32.totalorder %s40, 1
        %s1046 = scalar_select %p1045, %s40, 1
        %s1047 = scalar_lea.vmem %s12, %s1046
        %p1048 = scmp.lt.s32.totalorder %s40, 1
        %s1049 = scalar_select %p1048, %s40, 1
        %s1050 = smul.addr %s1049, 4
        %s1051 = smul.addr %s1050, 4
        %s1052 = scalar_lea.vmem %s13, %s1051
        %p1053 = scmp.lt.s32.totalorder %s40, 1
        %s1054 = scalar_select %p1053, %s40, 1
        %s1055 = scalar_lea.vmem %s14, %s1054
        %p1056 = scmp.lt.s32.totalorder %s40, 1
        %s1057 = scalar_select %p1056, %s40, 1
        %s1058 = scalar_lea.vmem %s15, %s1057
        %p1059 = scmp.lt.s32.totalorder %s40, 1
        %s1060 = scalar_select %p1059, %s40, 1
        %s1061 = scalar_lea.vmem %s16, %s1060
        %p1062 = scmp.lt.s32.totalorder %s40, 1
        %s1063 = scalar_select %p1062, %s40, 1
        %s1064 = smul.addr %s1063, 64
        %s1065 = smul.addr %s1064, 4
        %s1066 = scalar_lea.vmem %s17, %s1065
        %p1067 = scmp.lt.s32.totalorder %s40, 1
        %s1068 = scalar_select %p1067, %s40, 1
        %s1069 = smul.addr %s1068, 16
        %s1070 = scalar_lea.vmem %s18, %s1069
        %p1071 = scmp.lt.s32.totalorder %s40, 1
        %s1072 = scalar_select %p1071, %s40, 1
        %s1073 = smul.addr %s1072, 256
        %s1074 = smul.addr %s1073, 4
        %s1075 = scalar_lea.vmem %s19, %s1074
        %p1076 = scmp.lt.s32.totalorder %s40, 1
        %s1077 = scalar_select %p1076, %s40, 1
        %s1078 = scalar_lea.vmem %s20, %s1077
        %p1079 = scmp.lt.s32.totalorder %s40, 1
        %s1080 = scalar_select %p1079, %s40, 1
        %s1081 = scalar_lea.vmem %s21, %s1080
        %p1082 = scmp.lt.s32.totalorder %s40, 1
        %s1083 = scalar_select %p1082, %s40, 1
        %s1084 = scalar_lea.vmem %s22, %s1083
        %s1085 = smul.u32 2, %s39
        %p1087 = scmp.eq.s32.totalorder %s40, 0
        // Predicated region
        $region113: #{tpu_custom_call.1} parent=111 // pred_check
          %p1088 = pneg %p1087
        $region114: #{tpu_custom_call.1} parent=111 // pred_check_branch
          %1090 = sbr.rel (%p1088) target = $region116
        $region115: #{tpu_custom_call.1} parent=111 // pred_region
          %v1091 = vld [vmem:[%s996] sm:$0xff]
          %v1092 = vld [vmem:[%s996 + $0x8] sm:$0xff]
          %1095 = vrot.lane.b32.xlu0 %v1091, 112
          %v1096 = vpop.permute.xlu0 %1095
          %1097 = vrot.lane.b32.xlu0 %v1092, 112
          %v1098 = vpop.permute.xlu0 %1097
          %1101 = vrot.lane.b32.xlu0 %v1091, 16
          %v1102 = vpop.permute.xlu0 %1101
          %1103 = vrot.lane.b32.xlu0 %v1092, 16
          %v1104 = vpop.permute.xlu0 %1103
          %vm1107 = vcmask 130048
          %v1108 = vsel %vm1107, %v1096, %v1102
          %v1109 = vsel %vm1107, %v1098, %v1104
          %v1110 = vld [vmem:[%s1002] sm:$0xff]
          %v1111 = vld [vmem:[%s1002 + $0x8] sm:$0xff]
          %v1112 = vmul.f32 %v1091, %v1110
          %v1113 = vmul.f32 %v1092, %v1111
          %v1114 = vld [vmem:[%s1008] sm:$0xff]
          %v1115 = vld [vmem:[%s1008 + $0x8] sm:$0xff]
          %v1116 = vmul.f32 %v1108, %v1114
          %v1117 = vmul.f32 %v1109, %v1115
          %v1118 = vadd.f32 %v1112, %v1116
          %v1119 = vadd.f32 %v1113, %v1117
          %vm1120 = vcmask 261120
          %1121 = vst.msk [vmem:[#allocation2] sm:$0xff] %vm1120, %v1118
          %1122 = vst.msk [vmem:[#allocation2 + $0x8] sm:$0xff] %vm1120, %v1119
          %1123 = vst.msk [vmem:[#allocation3] sm:$0xff] %vm1120, %v1118
          %1124 = vst.msk [vmem:[#allocation3 + $0x8] sm:$0xff] %vm1120, %v1119
        $region116: #{tpu_custom_call.1} parent=111 // pred_fallthru
          _
        %v1125 = vld [vmem:[#allocation2] sm:$0xff]
        %v1126 = vld [vmem:[#allocation2 + $0x8] sm:$0xff]
        %v1127 = vld [vmem:[#allocation3] sm:$0xff]
        %v1128 = vld [vmem:[#allocation3 + $0x8] sm:$0xff]
        %v1129 = vld [vmem:[%s1014] sm:$0xf]
        %v1130 = vld [vmem:[%s1014 + $0x4] sm:$0xf]
        %v1131 = vld [vmem:[%s1014 + $0x8] sm:$0xf]
        %v1132 = vld [vmem:[%s1014 + $0xc] sm:$0xf]
        %v1133 = vld [vmem:[%s1017] sm:$0x1]
        %v1134 = vpack.c.bf16 %v1126, %v1125
        %v1136 = vlaneseq
        %v1137 = vshrl.u32 %v1136, 7
        %v1138 = vsub.s32 0, %v1137
        %v1139 = vrot.slane %v1133, %v1138
        %v1145 = vunpack.c.l.b16 %v1129
        %v1146 = vunpack.c.l.b16 %v1130
        %v1147 = vunpack.c.l.b16 %v1131
        %v1148 = vunpack.c.l.b16 %v1132
        %v1149 = vpack.c.b16 %v1146, %v1145
        %v1150 = vpack.c.b16 %v1148, %v1147
        %vm1153 = vcmask 261120
        %v1155 = vsel %vm1153, %v1134, 0
        %1157 = vmatprep.subr.bf16.mxu0 0
        %1158 = vmatpush1.bf16.msra.mxu0 %v1149
        %1159 = vmatprep.subr.bf16.mxu0 0
        %1160 = vmatpush1.bf16.msra.mxu0 %v1150
        %1161 = vmatprep.subr.bf16.mxu0 0
        %1162 = vmatpush1.bf16.msra.mxu0 0
        %1163 = vmatprep.subr.bf16.mxu0 0
        %1164 = vmatpush1.bf16.msra.mxu0 0
        %1165 = vmatprep.subr.bf16.mxu0 0
        %1166 = vmatpush1.bf16.msra.mxu0 0
        %1167 = vmatprep.subr.bf16.mxu0 0
        %1168 = vmatpush1.bf16.msra.mxu0 0
        %1169 = vmatprep.subr.bf16.mxu0 0
        %1170 = vmatpush1.bf16.msra.mxu0 0
        %1171 = vmatprep.subr.bf16.mxu0 0
        %1172 = vmatpush1.bf16.msra.mxu0 0
        %1173 = vmatprep.subr.bf16.mxu0 0
        %1174 = vmatpush1.bf16.msra.mxu0 0
        %1175 = vmatprep.subr.bf16.mxu0 0
        %1176 = vmatpush1.bf16.msra.mxu0 0
        %1177 = vmatprep.subr.bf16.mxu0 0
        %1178 = vmatpush1.bf16.msra.mxu0 0
        %1179 = vmatprep.subr.bf16.mxu0 0
        %1180 = vmatpush1.bf16.msra.mxu0 0
        %1181 = vmatprep.subr.bf16.mxu0 0
        %1182 = vmatpush1.bf16.msra.mxu0 0
        %1183 = vmatprep.subr.bf16.mxu0 0
        %1184 = vmatpush1.bf16.msra.mxu0 0
        %1185 = vmatprep.subr.bf16.mxu0 0
        %1186 = vmatpush1.bf16.msra.mxu0 0
        %1187 = vmatprep.subr.bf16.mxu0 0
        %1188 = vmatpush1.bf16.msra.mxu0 0
        %1189 = vmatprep.mubr.bf16.mxu0 0
        %1190 = vmatmul.mubr.bf16.gmra.mrb[0].mxu0 %v1155
        %v1191 = vpop.f32.mrb[0].mxu0
        %v1192 = vadd.f32 %v1139, %v1191
        %v1193 = vpop.f32.mrb[0].mxu0
        %v1194 = vpop.f32.mrb[0].mxu0
        %v1195 = vadd.f32 %v1139, %v1194
        %v1196 = vpop.f32.mrb[0].mxu0
        %1197 = vdwg.mxu0
        %v1198 = vmul.f32 %v1192, 0.35355338
        %v1199 = vmul.f32 %v1195, 0.35355338
        %1202 = vrot.lane.b32.xlu0 %v1198, 120
        %v1203 = vpop.permute.xlu0 %1202
        %1204 = vrot.lane.b32.xlu0 %v1199, 120
        %v1205 = vpop.permute.xlu0 %1204
        %1208 = vrot.lane.b32.xlu0 %v1198, 112
        %v1209 = vpop.permute.xlu0 %1208
        %1210 = vrot.lane.b32.xlu0 %v1199, 112
        %v1211 = vpop.permute.xlu0 %1210
        %1214 = vrot.lane.b32.xlu0 %v1198, 104
        %v1215 = vpop.permute.xlu0 %1214
        %1216 = vrot.lane.b32.xlu0 %v1199, 104
        %v1217 = vpop.permute.xlu0 %1216
        %v1220 = vpack.c.bf16 %v1198, %v1198
        %v1221 = vpack.c.bf16 %v1199, %v1199
        %v1222 = vpack.c.bf16 %v1203, %v1203
        %v1223 = vpack.c.bf16 %v1205, %v1205
        %v1224 = vpack.c.bf16 %v1209, %v1209
        %v1225 = vpack.c.bf16 %v1211, %v1211
        %v1226 = vpack.c.bf16 %v1215, %v1215
        %v1227 = vpack.c.bf16 %v1217, %v1217
        %1230 = vrot.lane.b32.xlu0 %v1192, 120
        %v1231 = vpop.permute.xlu0 %1230
        %1232 = vrot.lane.b32.xlu0 %v1195, 120
        %v1233 = vpop.permute.xlu0 %1232
        %1236 = vrot.lane.b32.xlu0 %v1192, 112
        %v1237 = vpop.permute.xlu0 %1236
        %1238 = vrot.lane.b32.xlu0 %v1195, 112
        %v1239 = vpop.permute.xlu0 %1238
        %1242 = vrot.lane.b32.xlu0 %v1192, 104
        %v1243 = vpop.permute.xlu0 %1242
        %1244 = vrot.lane.b32.xlu0 %v1195, 104
        %v1245 = vpop.permute.xlu0 %1244
        %v1248 = vpack.c.bf16 %v1192, %v1192
        %v1249 = vpack.c.bf16 %v1195, %v1195
        %v1250 = vpack.c.bf16 %v1231, %v1231
        %v1251 = vpack.c.bf16 %v1233, %v1233
        %v1252 = vpack.c.bf16 %v1237, %v1237
        %v1253 = vpack.c.bf16 %v1239, %v1239
        %v1254 = vpack.c.bf16 %v1243, %v1243
        %v1255 = vpack.c.bf16 %v1245, %v1245
        %1257 = vrot.lane.b32.xlu0 %v1248, 96
        %v1258 = vpop.permute.xlu0 %1257
        %vm1259 = vcmask 64512
        %v1261 = vsel %vm1259, %v1220, 0
        %v1264 = vsel %vm1259, %v1258, 0
        %1266 = vmatprep.subr.bf16.mxu0 0
        %1267 = vmatpush1.bf16.xpose.msra.mxu0 %v1264
        %1268 = vmatprep.subr.bf16.mxu0 0
        %1269 = vmatpush1.bf16.xpose.msra.mxu0 0
        %1270 = vmatprep.subr.bf16.mxu0 0
        %1271 = vmatpush1.bf16.xpose.msra.mxu0 0
        %1272 = vmatprep.subr.bf16.mxu0 0
        %1273 = vmatpush1.bf16.xpose.msra.mxu0 0
        %1274 = vmatprep.subr.bf16.mxu0 0
        %1275 = vmatpush1.bf16.xpose.msra.mxu0 0
        %1276 = vmatprep.subr.bf16.mxu0 0
        %1277 = vmatpush1.bf16.xpose.msra.mxu0 0
        %1278 = vmatprep.subr.bf16.mxu0 0
        %1279 = vmatpush1.bf16.xpose.msra.mxu0 0
        %1280 = vmatprep.subr.bf16.mxu0 0
        %1281 = vmatpush1.bf16.xpose.msra.mxu0 0
        %1282 = vmatprep.subr.bf16.mxu0 0
        %1283 = vmatpush1.bf16.xpose.msra.mxu0 0
        %1284 = vmatprep.subr.bf16.mxu0 0
        %1285 = vmatpush1.bf16.xpose.msra.mxu0 0
        %1286 = vmatprep.subr.bf16.mxu0 0
        %1287 = vmatpush1.bf16.xpose.msra.mxu0 0
        %1288 = vmatprep.subr.bf16.mxu0 0
        %1289 = vmatpush1.bf16.xpose.msra.mxu0 0
        %1290 = vmatprep.subr.bf16.mxu0 0
        %1291 = vmatpush1.bf16.xpose.msra.mxu0 0
        %1292 = vmatprep.subr.bf16.mxu0 0
        %1293 = vmatpush1.bf16.xpose.msra.mxu0 0
        %1294 = vmatprep.subr.bf16.mxu0 0
        %1295 = vmatpush1.bf16.xpose.msra.mxu0 0
        %1296 = vmatprep.subr.bf16.mxu0 0
        %1297 = vmatpush1.bf16.xpose.msra.mxu0 0
        %1298 = vmatprep.mubr.bf16.mxu0 0
        %1299 = vmatmul.mubr.bf16.gmra.mrb[0].mxu0 %v1261
        %v1300 = vpop.f32.mrb[0].mxu0
        %v1301 = vadd.f32 0.0, %v1300
        %v1302 = vpop.f32.mrb[0].mxu0
        %v1303 = vpop.f32.mrb[0].mxu0
        %v1304 = vpop.f32.mrb[0].mxu0
        %1305 = vdwg.mxu0
        %1307 = vrot.lane.b32.xlu0 %v1249, 96
        %v1308 = vpop.permute.xlu0 %1307
        %v1310 = vsel %vm1259, %v1221, 0
        %v1313 = vsel %vm1259, %v1308, 0
        %1315 = vmatprep.subr.bf16.mxu0 0
        %1316 = vmatpush1.bf16.xpose.msra.mxu0 %v1313
        %1317 = vmatprep.subr.bf16.mxu0 0
        %1318 = vmatpush1.bf16.xpose.msra.mxu0 0
        %1319 = vmatprep.subr.bf16.mxu0 0
        %1320 = vmatpush1.bf16.xpose.msra.mxu0 0
        %1321 = vmatprep.subr.bf16.mxu0 0
        %1322 = vmatpush1.bf16.xpose.msra.mxu0 0
        %1323 = vmatprep.subr.bf16.mxu0 0
        %1324 = vmatpush1.bf16.xpose.msra.mxu0 0
        %1325 = vmatprep.subr.bf16.mxu0 0
        %1326 = vmatpush1.bf16.xpose.msra.mxu0 0
        %1327 = vmatprep.subr.bf16.mxu0 0
        %1328 = vmatpush1.bf16.xpose.msra.mxu0 0
        %1329 = vmatprep.subr.bf16.mxu0 0
        %1330 = vmatpush1.bf16.xpose.msra.mxu0 0
        %1331 = vmatprep.subr.bf16.mxu0 0
        %1332 = vmatpush1.bf16.xpose.msra.mxu0 0
        %1333 = vmatprep.subr.bf16.mxu0 0
        %1334 = vmatpush1.bf16.xpose.msra.mxu0 0
        %1335 = vmatprep.subr.bf16.mxu0 0
        %1336 = vmatpush1.bf16.xpose.msra.mxu0 0
        %1337 = vmatprep.subr.bf16.mxu0 0
        %1338 = vmatpush1.bf16.xpose.msra.mxu0 0
        %1339 = vmatprep.subr.bf16.mxu0 0
        %1340 = vmatpush1.bf16.xpose.msra.mxu0 0
        %1341 = vmatprep.subr.bf16.mxu0 0
        %1342 = vmatpush1.bf16.xpose.msra.mxu0 0
        %1343 = vmatprep.subr.bf16.mxu0 0
        %1344 = vmatpush1.bf16.xpose.msra.mxu0 0
        %1345 = vmatprep.subr.bf16.mxu0 0
        %1346 = vmatpush1.bf16.xpose.msra.mxu0 0
        %1347 = vmatprep.mubr.bf16.mxu0 0
        %1348 = vmatmul.mubr.bf16.gmra.mrb[0].mxu0 %v1310
        %v1349 = vpop.f32.mrb[0].mxu0
        %v1350 = vadd.f32 0.0, %v1349
        %v1351 = vpop.f32.mrb[0].mxu0
        %v1352 = vpop.f32.mrb[0].mxu0
        %v1353 = vpop.f32.mrb[0].mxu0
        %1354 = vdwg.mxu0
        %1356 = vrot.lane.b32.xlu0 %v1250, 96
        %v1357 = vpop.permute.xlu0 %1356
        %v1359 = vsel %vm1259, %v1222, 0
        %v1362 = vsel %vm1259, %v1357, 0
        %1364 = vmatprep.subr.bf16.mxu0 0
        %1365 = vmatpush1.bf16.xpose.msra.mxu0 %v1362
        %1366 = vmatprep.subr.bf16.mxu0 0
        %1367 = vmatpush1.bf16.xpose.msra.mxu0 0
        %1368 = vmatprep.subr.bf16.mxu0 0
        %1369 = vmatpush1.bf16.xpose.msra.mxu0 0
        %1370 = vmatprep.subr.bf16.mxu0 0
        %1371 = vmatpush1.bf16.xpose.msra.mxu0 0
        %1372 = vmatprep.subr.bf16.mxu0 0
        %1373 = vmatpush1.bf16.xpose.msra.mxu0 0
        %1374 = vmatprep.subr.bf16.mxu0 0
        %1375 = vmatpush1.bf16.xpose.msra.mxu0 0
        %1376 = vmatprep.subr.bf16.mxu0 0
        %1377 = vmatpush1.bf16.xpose.msra.mxu0 0
        %1378 = vmatprep.subr.bf16.mxu0 0
        %1379 = vmatpush1.bf16.xpose.msra.mxu0 0
        %1380 = vmatprep.subr.bf16.mxu0 0
        %1381 = vmatpush1.bf16.xpose.msra.mxu0 0
        %1382 = vmatprep.subr.bf16.mxu0 0
        %1383 = vmatpush1.bf16.xpose.msra.mxu0 0
        %1384 = vmatprep.subr.bf16.mxu0 0
        %1385 = vmatpush1.bf16.xpose.msra.mxu0 0
        %1386 = vmatprep.subr.bf16.mxu0 0
        %1387 = vmatpush1.bf16.xpose.msra.mxu0 0
        %1388 = vmatprep.subr.bf16.mxu0 0
        %1389 = vmatpush1.bf16.xpose.msra.mxu0 0
        %1390 = vmatprep.subr.bf16.mxu0 0
        %1391 = vmatpush1.bf16.xpose.msra.mxu0 0
        %1392 = vmatprep.subr.bf16.mxu0 0
        %1393 = vmatpush1.bf16.xpose.msra.mxu0 0
        %1394 = vmatprep.subr.bf16.mxu0 0
        %1395 = vmatpush1.bf16.xpose.msra.mxu0 0
        %1396 = vmatprep.mubr.bf16.mxu0 0
        %1397 = vmatmul.mubr.bf16.gmra.mrb[0].mxu0 %v1359
        %v1398 = vpop.f32.mrb[0].mxu0
        %v1399 = vadd.f32 0.0, %v1398
        %v1400 = vpop.f32.mrb[0].mxu0
        %v1401 = vpop.f32.mrb[0].mxu0
        %v1402 = vpop.f32.mrb[0].mxu0
        %1403 = vdwg.mxu0
        %1405 = vrot.lane.b32.xlu0 %v1251, 96
        %v1406 = vpop.permute.xlu0 %1405
        %v1408 = vsel %vm1259, %v1223, 0
        %v1411 = vsel %vm1259, %v1406, 0
        %1413 = vmatprep.subr.bf16.mxu0 0
        %1414 = vmatpush1.bf16.xpose.msra.mxu0 %v1411
        %1415 = vmatprep.subr.bf16.mxu0 0
        %1416 = vmatpush1.bf16.xpose.msra.mxu0 0
        %1417 = vmatprep.subr.bf16.mxu0 0
        %1418 = vmatpush1.bf16.xpose.msra.mxu0 0
        %1419 = vmatprep.subr.bf16.mxu0 0
        %1420 = vmatpush1.bf16.xpose.msra.mxu0 0
        %1421 = vmatprep.subr.bf16.mxu0 0
        %1422 = vmatpush1.bf16.xpose.msra.mxu0 0
        %1423 = vmatprep.subr.bf16.mxu0 0
        %1424 = vmatpush1.bf16.xpose.msra.mxu0 0
        %1425 = vmatprep.subr.bf16.mxu0 0
        %1426 = vmatpush1.bf16.xpose.msra.mxu0 0
        %1427 = vmatprep.subr.bf16.mxu0 0
        %1428 = vmatpush1.bf16.xpose.msra.mxu0 0
        %1429 = vmatprep.subr.bf16.mxu0 0
        %1430 = vmatpush1.bf16.xpose.msra.mxu0 0
        %1431 = vmatprep.subr.bf16.mxu0 0
        %1432 = vmatpush1.bf16.xpose.msra.mxu0 0
        %1433 = vmatprep.subr.bf16.mxu0 0
        %1434 = vmatpush1.bf16.xpose.msra.mxu0 0
        %1435 = vmatprep.subr.bf16.mxu0 0
        %1436 = vmatpush1.bf16.xpose.msra.mxu0 0
        %1437 = vmatprep.subr.bf16.mxu0 0
        %1438 = vmatpush1.bf16.xpose.msra.mxu0 0
        %1439 = vmatprep.subr.bf16.mxu0 0
        %1440 = vmatpush1.bf16.xpose.msra.mxu0 0
        %1441 = vmatprep.subr.bf16.mxu0 0
        %1442 = vmatpush1.bf16.xpose.msra.mxu0 0
        %1443 = vmatprep.subr.bf16.mxu0 0
        %1444 = vmatpush1.bf16.xpose.msra.mxu0 0
        %1445 = vmatprep.mubr.bf16.mxu0 0
        %1446 = vmatmul.mubr.bf16.gmra.mrb[0].mxu0 %v1408
        %v1447 = vpop.f32.mrb[0].mxu0
        %v1448 = vadd.f32 0.0, %v1447
        %v1449 = vpop.f32.mrb[0].mxu0
        %v1450 = vpop.f32.mrb[0].mxu0
        %v1451 = vpop.f32.mrb[0].mxu0
        %1452 = vdwg.mxu0
        %1454 = vrot.lane.b32.xlu0 %v1252, 96
        %v1455 = vpop.permute.xlu0 %1454
        %v1457 = vsel %vm1259, %v1224, 0
        %v1460 = vsel %vm1259, %v1455, 0
        %1462 = vmatprep.subr.bf16.mxu0 0
        %1463 = vmatpush1.bf16.xpose.msra.mxu0 %v1460
        %1464 = vmatprep.subr.bf16.mxu0 0
        %1465 = vmatpush1.bf16.xpose.msra.mxu0 0
        %1466 = vmatprep.subr.bf16.mxu0 0
        %1467 = vmatpush1.bf16.xpose.msra.mxu0 0
        %1468 = vmatprep.subr.bf16.mxu0 0
        %1469 = vmatpush1.bf16.xpose.msra.mxu0 0
        %1470 = vmatprep.subr.bf16.mxu0 0
        %1471 = vmatpush1.bf16.xpose.msra.mxu0 0
        %1472 = vmatprep.subr.bf16.mxu0 0
        %1473 = vmatpush1.bf16.xpose.msra.mxu0 0
        %1474 = vmatprep.subr.bf16.mxu0 0
        %1475 = vmatpush1.bf16.xpose.msra.mxu0 0
        %1476 = vmatprep.subr.bf16.mxu0 0
        %1477 = vmatpush1.bf16.xpose.msra.mxu0 0
        %1478 = vmatprep.subr.bf16.mxu0 0
        %1479 = vmatpush1.bf16.xpose.msra.mxu0 0
        %1480 = vmatprep.subr.bf16.mxu0 0
        %1481 = vmatpush1.bf16.xpose.msra.mxu0 0
        %1482 = vmatprep.subr.bf16.mxu0 0
        %1483 = vmatpush1.bf16.xpose.msra.mxu0 0
        %1484 = vmatprep.subr.bf16.mxu0 0
        %1485 = vmatpush1.bf16.xpose.msra.mxu0 0
        %1486 = vmatprep.subr.bf16.mxu0 0
        %1487 = vmatpush1.bf16.xpose.msra.mxu0 0
        %1488 = vmatprep.subr.bf16.mxu0 0
        %1489 = vmatpush1.bf16.xpose.msra.mxu0 0
        %1490 = vmatprep.subr.bf16.mxu0 0
        %1491 = vmatpush1.bf16.xpose.msra.mxu0 0
        %1492 = vmatprep.subr.bf16.mxu0 0
        %1493 = vmatpush1.bf16.xpose.msra.mxu0 0
        %1494 = vmatprep.mubr.bf16.mxu0 0
        %1495 = vmatmul.mubr.bf16.gmra.mrb[0].mxu0 %v1457
        %v1496 = vpop.f32.mrb[0].mxu0
        %v1497 = vadd.f32 0.0, %v1496
        %v1498 = vpop.f32.mrb[0].mxu0
        %v1499 = vpop.f32.mrb[0].mxu0
        %v1500 = vpop.f32.mrb[0].mxu0
        %1501 = vdwg.mxu0
        %1503 = vrot.lane.b32.xlu0 %v1253, 96
        %v1504 = vpop.permute.xlu0 %1503
        %v1506 = vsel %vm1259, %v1225, 0
        %v1509 = vsel %vm1259, %v1504, 0
        %1511 = vmatprep.subr.bf16.mxu0 0
        %1512 = vmatpush1.bf16.xpose.msra.mxu0 %v1509
        %1513 = vmatprep.subr.bf16.mxu0 0
        %1514 = vmatpush1.bf16.xpose.msra.mxu0 0
        %1515 = vmatprep.subr.bf16.mxu0 0
        %1516 = vmatpush1.bf16.xpose.msra.mxu0 0
        %1517 = vmatprep.subr.bf16.mxu0 0
        %1518 = vmatpush1.bf16.xpose.msra.mxu0 0
        %1519 = vmatprep.subr.bf16.mxu0 0
        %1520 = vmatpush1.bf16.xpose.msra.mxu0 0
        %1521 = vmatprep.subr.bf16.mxu0 0
        %1522 = vmatpush1.bf16.xpose.msra.mxu0 0
        %1523 = vmatprep.subr.bf16.mxu0 0
        %1524 = vmatpush1.bf16.xpose.msra.mxu0 0
        %1525 = vmatprep.subr.bf16.mxu0 0
        %1526 = vmatpush1.bf16.xpose.msra.mxu0 0
        %1527 = vmatprep.subr.bf16.mxu0 0
        %1528 = vmatpush1.bf16.xpose.msra.mxu0 0
        %1529 = vmatprep.subr.bf16.mxu0 0
        %1530 = vmatpush1.bf16.xpose.msra.mxu0 0
        %1531 = vmatprep.subr.bf16.mxu0 0
        %1532 = vmatpush1.bf16.xpose.msra.mxu0 0
        %1533 = vmatprep.subr.bf16.mxu0 0
        %1534 = vmatpush1.bf16.xpose.msra.mxu0 0
        %1535 = vmatprep.subr.bf16.mxu0 0
        %1536 = vmatpush1.bf16.xpose.msra.mxu0 0
        %1537 = vmatprep.subr.bf16.mxu0 0
        %1538 = vmatpush1.bf16.xpose.msra.mxu0 0
        %1539 = vmatprep.subr.bf16.mxu0 0
        %1540 = vmatpush1.bf16.xpose.msra.mxu0 0
        %1541 = vmatprep.subr.bf16.mxu0 0
        %1542 = vmatpush1.bf16.xpose.msra.mxu0 0
        %1543 = vmatprep.mubr.bf16.mxu0 0
        %1544 = vmatmul.mubr.bf16.gmra.mrb[0].mxu0 %v1506
        %v1545 = vpop.f32.mrb[0].mxu0
        %v1546 = vadd.f32 0.0, %v1545
        %v1547 = vpop.f32.mrb[0].mxu0
        %v1548 = vpop.f32.mrb[0].mxu0
        %v1549 = vpop.f32.mrb[0].mxu0
        %1550 = vdwg.mxu0
        %1552 = vrot.lane.b32.xlu0 %v1254, 96
        %v1553 = vpop.permute.xlu0 %1552
        %v1555 = vsel %vm1259, %v1226, 0
        %v1558 = vsel %vm1259, %v1553, 0
        %1560 = vmatprep.subr.bf16.mxu0 0
        %1561 = vmatpush1.bf16.xpose.msra.mxu0 %v1558
        %1562 = vmatprep.subr.bf16.mxu0 0
        %1563 = vmatpush1.bf16.xpose.msra.mxu0 0
        %1564 = vmatprep.subr.bf16.mxu0 0
        %1565 = vmatpush1.bf16.xpose.msra.mxu0 0
        %1566 = vmatprep.subr.bf16.mxu0 0
        %1567 = vmatpush1.bf16.xpose.msra.mxu0 0
        %1568 = vmatprep.subr.bf16.mxu0 0
        %1569 = vmatpush1.bf16.xpose.msra.mxu0 0
        %1570 = vmatprep.subr.bf16.mxu0 0
        %1571 = vmatpush1.bf16.xpose.msra.mxu0 0
        %1572 = vmatprep.subr.bf16.mxu0 0
        %1573 = vmatpush1.bf16.xpose.msra.mxu0 0
        %1574 = vmatprep.subr.bf16.mxu0 0
        %1575 = vmatpush1.bf16.xpose.msra.mxu0 0
        %1576 = vmatprep.subr.bf16.mxu0 0
        %1577 = vmatpush1.bf16.xpose.msra.mxu0 0
        %1578 = vmatprep.subr.bf16.mxu0 0
        %1579 = vmatpush1.bf16.xpose.msra.mxu0 0
        %1580 = vmatprep.subr.bf16.mxu0 0
        %1581 = vmatpush1.bf16.xpose.msra.mxu0 0
        %1582 = vmatprep.subr.bf16.mxu0 0
        %1583 = vmatpush1.bf16.xpose.msra.mxu0 0
        %1584 = vmatprep.subr.bf16.mxu0 0
        %1585 = vmatpush1.bf16.xpose.msra.mxu0 0
        %1586 = vmatprep.subr.bf16.mxu0 0
        %1587 = vmatpush1.bf16.xpose.msra.mxu0 0
        %1588 = vmatprep.subr.bf16.mxu0 0
        %1589 = vmatpush1.bf16.xpose.msra.mxu0 0
        %1590 = vmatprep.subr.bf16.mxu0 0
        %1591 = vmatpush1.bf16.xpose.msra.mxu0 0
        %1592 = vmatprep.mubr.bf16.mxu0 0
        %1593 = vmatmul.mubr.bf16.gmra.mrb[0].mxu0 %v1555
        %v1594 = vpop.f32.mrb[0].mxu0
        %v1595 = vadd.f32 0.0, %v1594
        %v1596 = vpop.f32.mrb[0].mxu0
        %v1597 = vpop.f32.mrb[0].mxu0
        %v1598 = vpop.f32.mrb[0].mxu0
        %1599 = vdwg.mxu0
        %1601 = vrot.lane.b32.xlu0 %v1255, 96
        %v1602 = vpop.permute.xlu0 %1601
        %v1604 = vsel %vm1259, %v1227, 0
        %v1607 = vsel %vm1259, %v1602, 0
        %1609 = vmatprep.subr.bf16.mxu0 0
        %1610 = vmatpush1.bf16.xpose.msra.mxu0 %v1607
        %1611 = vmatprep.subr.bf16.mxu0 0
        %1612 = vmatpush1.bf16.xpose.msra.mxu0 0
        %1613 = vmatprep.subr.bf16.mxu0 0
        %1614 = vmatpush1.bf16.xpose.msra.mxu0 0
        %1615 = vmatprep.subr.bf16.mxu0 0
        %1616 = vmatpush1.bf16.xpose.msra.mxu0 0
        %1617 = vmatprep.subr.bf16.mxu0 0
        %1618 = vmatpush1.bf16.xpose.msra.mxu0 0
        %1619 = vmatprep.subr.bf16.mxu0 0
        %1620 = vmatpush1.bf16.xpose.msra.mxu0 0
        %1621 = vmatprep.subr.bf16.mxu0 0
        %1622 = vmatpush1.bf16.xpose.msra.mxu0 0
        %1623 = vmatprep.subr.bf16.mxu0 0
        %1624 = vmatpush1.bf16.xpose.msra.mxu0 0
        %1625 = vmatprep.subr.bf16.mxu0 0
        %1626 = vmatpush1.bf16.xpose.msra.mxu0 0
        %1627 = vmatprep.subr.bf16.mxu0 0
        %1628 = vmatpush1.bf16.xpose.msra.mxu0 0
        %1629 = vmatprep.subr.bf16.mxu0 0
        %1630 = vmatpush1.bf16.xpose.msra.mxu0 0
        %1631 = vmatprep.subr.bf16.mxu0 0
        %1632 = vmatpush1.bf16.xpose.msra.mxu0 0
        %1633 = vmatprep.subr.bf16.mxu0 0
        %1634 = vmatpush1.bf16.xpose.msra.mxu0 0
        %1635 = vmatprep.subr.bf16.mxu0 0
        %1636 = vmatpush1.bf16.xpose.msra.mxu0 0
        %1637 = vmatprep.subr.bf16.mxu0 0
        %1638 = vmatpush1.bf16.xpose.msra.mxu0 0
        %1639 = vmatprep.subr.bf16.mxu0 0
        %1640 = vmatpush1.bf16.xpose.msra.mxu0 0
        %1641 = vmatprep.mubr.bf16.mxu0 0
        %1642 = vmatmul.mubr.bf16.gmra.mrb[0].mxu0 %v1604
        %v1643 = vpop.f32.mrb[0].mxu0
        %v1644 = vadd.f32 0.0, %v1643
        %v1645 = vpop.f32.mrb[0].mxu0
        %v1646 = vpop.f32.mrb[0].mxu0
        %v1647 = vpop.f32.mrb[0].mxu0
        %1648 = vdwg.mxu0
        %v1649 = vsel %vm1259, %v1301, -inf
        %1650 = vmax.xlane.f32.xlu0 %v1649
        %v1651 = vpop.xlane.xlu0 %1650
        %v1652 = vsel %vm1259, %v1350, -inf
        %1653 = vmax.xlane.f32.xlu0 %v1652
        %v1654 = vpop.xlane.xlu0 %1653
        %v1655 = vsel %vm1259, %v1399, -inf
        %1656 = vmax.xlane.f32.xlu0 %v1655
        %v1657 = vpop.xlane.xlu0 %1656
        %v1658 = vsel %vm1259, %v1448, -inf
        %1659 = vmax.xlane.f32.xlu0 %v1658
        %v1660 = vpop.xlane.xlu0 %1659
        %v1661 = vsel %vm1259, %v1497, -inf
        %1662 = vmax.xlane.f32.xlu0 %v1661
        %v1663 = vpop.xlane.xlu0 %1662
        %v1664 = vsel %vm1259, %v1546, -inf
        %1665 = vmax.xlane.f32.xlu0 %v1664
        %v1666 = vpop.xlane.xlu0 %1665
        %v1667 = vsel %vm1259, %v1595, -inf
        %1668 = vmax.xlane.f32.xlu0 %v1667
        %v1669 = vpop.xlane.xlu0 %1668
        %v1670 = vsel %vm1259, %v1644, -inf
        %1671 = vmax.xlane.f32.xlu0 %v1670
        %v1672 = vpop.xlane.xlu0 %1671
        %v1673 = vsub.f32 %v1301, %v1651
        %v1674 = vsub.f32 %v1350, %v1654
        %v1675 = vsub.f32 %v1399, %v1657
        %v1676 = vsub.f32 %v1448, %v1660
        %v1677 = vsub.f32 %v1497, %v1663
        %v1678 = vsub.f32 %v1546, %v1666
        %v1679 = vsub.f32 %v1595, %v1669
        %v1680 = vsub.f32 %v1644, %v1672
        %v1681 = vmul.f32 %v1673, 1.442695
        %v1682 = vpow.pop %v1681
        %v1683 = vmul.f32 %v1674, 1.442695
        %v1684 = vpow.pop %v1683
        %v1685 = vmul.f32 %v1675, 1.442695
        %v1686 = vpow.pop %v1685
        %v1687 = vmul.f32 %v1676, 1.442695
        %v1688 = vpow.pop %v1687
        %v1689 = vmul.f32 %v1677, 1.442695
        %v1690 = vpow.pop %v1689
        %v1691 = vmul.f32 %v1678, 1.442695
        %v1692 = vpow.pop %v1691
        %v1693 = vmul.f32 %v1679, 1.442695
        %v1694 = vpow.pop %v1693
        %v1695 = vmul.f32 %v1680, 1.442695
        %v1696 = vpow.pop %v1695
        %v1697 = vsel %vm1259, %v1682, 0.0
        %1698 = vadd.xlane.f32.xlu0 %v1697
        %v1699 = vpop.xlane.xlu0 %1698
        %v1700 = vsel %vm1259, %v1684, 0.0
        %1701 = vadd.xlane.f32.xlu0 %v1700
        %v1702 = vpop.xlane.xlu0 %1701
        %v1703 = vsel %vm1259, %v1686, 0.0
        %1704 = vadd.xlane.f32.xlu0 %v1703
        %v1705 = vpop.xlane.xlu0 %1704
        %v1706 = vsel %vm1259, %v1688, 0.0
        %1707 = vadd.xlane.f32.xlu0 %v1706
        %v1708 = vpop.xlane.xlu0 %1707
        %v1709 = vsel %vm1259, %v1690, 0.0
        %1710 = vadd.xlane.f32.xlu0 %v1709
        %v1711 = vpop.xlane.xlu0 %1710
        %v1712 = vsel %vm1259, %v1692, 0.0
        %1713 = vadd.xlane.f32.xlu0 %v1712
        %v1714 = vpop.xlane.xlu0 %1713
        %v1715 = vsel %vm1259, %v1694, 0.0
        %1716 = vadd.xlane.f32.xlu0 %v1715
        %v1717 = vpop.xlane.xlu0 %1716
        %v1718 = vsel %vm1259, %v1696, 0.0
        %1719 = vadd.xlane.f32.xlu0 %v1718
        %v1720 = vpop.xlane.xlu0 %1719
        %v1721 = vrcp.pop %v1699
        %v1722 = vrcp.pop %v1702
        %v1723 = vrcp.pop %v1705
        %v1724 = vrcp.pop %v1708
        %v1725 = vrcp.pop %v1711
        %v1726 = vrcp.pop %v1714
        %v1727 = vrcp.pop %v1717
        %v1728 = vrcp.pop %v1720
        %v1729 = vmul.f32 %v1682, %v1721
        %v1730 = vmul.f32 %v1684, %v1722
        %v1731 = vmul.f32 %v1686, %v1723
        %v1732 = vmul.f32 %v1688, %v1724
        %v1733 = vmul.f32 %v1690, %v1725
        %v1734 = vmul.f32 %v1692, %v1726
        %v1735 = vmul.f32 %v1694, %v1727
        %v1736 = vmul.f32 %v1696, %v1728
        %v1737 = vpack.c.bf16 %v1729, %v1729
        %v1738 = vpack.c.bf16 %v1730, %v1730
        %v1739 = vpack.c.bf16 %v1731, %v1731
        %v1740 = vpack.c.bf16 %v1732, %v1732
        %v1741 = vpack.c.bf16 %v1733, %v1733
        %v1742 = vpack.c.bf16 %v1734, %v1734
        %v1743 = vpack.c.bf16 %v1735, %v1735
        %v1744 = vpack.c.bf16 %v1736, %v1736
        %1745 = vrot.lane.b32.xlu0 %v1248, 64
        %v1746 = vpop.permute.xlu0 %1745
        %v1748 = vsel %vm1259, %v1737, 0
        %vm1750 = vcmask 1043456
        %v1752 = vsel %vm1750, %v1746, 0
        %1754 = vmatprep.subr.bf16.mxu0 0
        %1755 = vmatpush1.bf16.msra.mxu0 %v1752
        %1756 = vmatprep.subr.bf16.mxu0 0
        %1757 = vmatpush1.bf16.msra.mxu0 0
        %1758 = vmatprep.subr.bf16.mxu0 0
        %1759 = vmatpush1.bf16.msra.mxu0 0
        %1760 = vmatprep.subr.bf16.mxu0 0
        %1761 = vmatpush1.bf16.msra.mxu0 0
        %1762 = vmatprep.subr.bf16.mxu0 0
        %1763 = vmatpush1.bf16.msra.mxu0 0
        %1764 = vmatprep.subr.bf16.mxu0 0
        %1765 = vmatpush1.bf16.msra.mxu0 0
        %1766 = vmatprep.subr.bf16.mxu0 0
        %1767 = vmatpush1.bf16.msra.mxu0 0
        %1768 = vmatprep.subr.bf16.mxu0 0
        %1769 = vmatpush1.bf16.msra.mxu0 0
        %1770 = vmatprep.subr.bf16.mxu0 0
        %1771 = vmatpush1.bf16.msra.mxu0 0
        %1772 = vmatprep.subr.bf16.mxu0 0
        %1773 = vmatpush1.bf16.msra.mxu0 0
        %1774 = vmatprep.subr.bf16.mxu0 0
        %1775 = vmatpush1.bf16.msra.mxu0 0
        %1776 = vmatprep.subr.bf16.mxu0 0
        %1777 = vmatpush1.bf16.msra.mxu0 0
        %1778 = vmatprep.subr.bf16.mxu0 0
        %1779 = vmatpush1.bf16.msra.mxu0 0
        %1780 = vmatprep.subr.bf16.mxu0 0
        %1781 = vmatpush1.bf16.msra.mxu0 0
        %1782 = vmatprep.subr.bf16.mxu0 0
        %1783 = vmatpush1.bf16.msra.mxu0 0
        %1784 = vmatprep.subr.bf16.mxu0 0
        %1785 = vmatpush1.bf16.msra.mxu0 0
        %1786 = vmatprep.mubr.bf16.mxu0 0
        %1787 = vmatmul.mubr.bf16.gmra.mrb[0].mxu0 %v1748
        %v1788 = vpop.f32.mrb[0].mxu0
        %v1789 = vadd.f32 0.0, %v1788
        %v1790 = vpop.f32.mrb[0].mxu0
        %v1791 = vpop.f32.mrb[0].mxu0
        %v1792 = vpop.f32.mrb[0].mxu0
        %1793 = vdwg.mxu0
        %1794 = vrot.lane.b32.xlu0 %v1249, 64
        %v1795 = vpop.permute.xlu0 %1794
        %v1797 = vsel %vm1259, %v1738, 0
        %v1800 = vsel %vm1750, %v1795, 0
        %1802 = vmatprep.subr.bf16.mxu0 0
        %1803 = vmatpush1.bf16.msra.mxu0 %v1800
        %1804 = vmatprep.subr.bf16.mxu0 0
        %1805 = vmatpush1.bf16.msra.mxu0 0
        %1806 = vmatprep.subr.bf16.mxu0 0
        %1807 = vmatpush1.bf16.msra.mxu0 0
        %1808 = vmatprep.subr.bf16.mxu0 0
        %1809 = vmatpush1.bf16.msra.mxu0 0
        %1810 = vmatprep.subr.bf16.mxu0 0
        %1811 = vmatpush1.bf16.msra.mxu0 0
        %1812 = vmatprep.subr.bf16.mxu0 0
        %1813 = vmatpush1.bf16.msra.mxu0 0
        %1814 = vmatprep.subr.bf16.mxu0 0
        %1815 = vmatpush1.bf16.msra.mxu0 0
        %1816 = vmatprep.subr.bf16.mxu0 0
        %1817 = vmatpush1.bf16.msra.mxu0 0
        %1818 = vmatprep.subr.bf16.mxu0 0
        %1819 = vmatpush1.bf16.msra.mxu0 0
        %1820 = vmatprep.subr.bf16.mxu0 0
        %1821 = vmatpush1.bf16.msra.mxu0 0
        %1822 = vmatprep.subr.bf16.mxu0 0
        %1823 = vmatpush1.bf16.msra.mxu0 0
        %1824 = vmatprep.subr.bf16.mxu0 0
        %1825 = vmatpush1.bf16.msra.mxu0 0
        %1826 = vmatprep.subr.bf16.mxu0 0
        %1827 = vmatpush1.bf16.msra.mxu0 0
        %1828 = vmatprep.subr.bf16.mxu0 0
        %1829 = vmatpush1.bf16.msra.mxu0 0
        %1830 = vmatprep.subr.bf16.mxu0 0
        %1831 = vmatpush1.bf16.msra.mxu0 0
        %1832 = vmatprep.subr.bf16.mxu0 0
        %1833 = vmatpush1.bf16.msra.mxu0 0
        %1834 = vmatprep.mubr.bf16.mxu0 0
        %1835 = vmatmul.mubr.bf16.gmra.mrb[0].mxu0 %v1797
        %v1836 = vpop.f32.mrb[0].mxu0
        %v1837 = vadd.f32 0.0, %v1836
        %v1838 = vpop.f32.mrb[0].mxu0
        %v1839 = vpop.f32.mrb[0].mxu0
        %v1840 = vpop.f32.mrb[0].mxu0
        %1841 = vdwg.mxu0
        %1842 = vrot.lane.b32.xlu0 %v1250, 64
        %v1843 = vpop.permute.xlu0 %1842
        %v1845 = vsel %vm1259, %v1739, 0
        %v1848 = vsel %vm1750, %v1843, 0
        %1850 = vmatprep.subr.bf16.mxu0 0
        %1851 = vmatpush1.bf16.msra.mxu0 %v1848
        %1852 = vmatprep.subr.bf16.mxu0 0
        %1853 = vmatpush1.bf16.msra.mxu0 0
        %1854 = vmatprep.subr.bf16.mxu0 0
        %1855 = vmatpush1.bf16.msra.mxu0 0
        %1856 = vmatprep.subr.bf16.mxu0 0
        %1857 = vmatpush1.bf16.msra.mxu0 0
        %1858 = vmatprep.subr.bf16.mxu0 0
        %1859 = vmatpush1.bf16.msra.mxu0 0
        %1860 = vmatprep.subr.bf16.mxu0 0
        %1861 = vmatpush1.bf16.msra.mxu0 0
        %1862 = vmatprep.subr.bf16.mxu0 0
        %1863 = vmatpush1.bf16.msra.mxu0 0
        %1864 = vmatprep.subr.bf16.mxu0 0
        %1865 = vmatpush1.bf16.msra.mxu0 0
        %1866 = vmatprep.subr.bf16.mxu0 0
        %1867 = vmatpush1.bf16.msra.mxu0 0
        %1868 = vmatprep.subr.bf16.mxu0 0
        %1869 = vmatpush1.bf16.msra.mxu0 0
        %1870 = vmatprep.subr.bf16.mxu0 0
        %1871 = vmatpush1.bf16.msra.mxu0 0
        %1872 = vmatprep.subr.bf16.mxu0 0
        %1873 = vmatpush1.bf16.msra.mxu0 0
        %1874 = vmatprep.subr.bf16.mxu0 0
        %1875 = vmatpush1.bf16.msra.mxu0 0
        %1876 = vmatprep.subr.bf16.mxu0 0
        %1877 = vmatpush1.bf16.msra.mxu0 0
        %1878 = vmatprep.subr.bf16.mxu0 0
        %1879 = vmatpush1.bf16.msra.mxu0 0
        %1880 = vmatprep.subr.bf16.mxu0 0
        %1881 = vmatpush1.bf16.msra.mxu0 0
        %1882 = vmatprep.mubr.bf16.mxu0 0
        %1883 = vmatmul.mubr.bf16.gmra.mrb[0].mxu0 %v1845
        %v1884 = vpop.f32.mrb[0].mxu0
        %v1885 = vadd.f32 0.0, %v1884
        %v1886 = vpop.f32.mrb[0].mxu0
        %v1887 = vpop.f32.mrb[0].mxu0
        %v1888 = vpop.f32.mrb[0].mxu0
        %1889 = vdwg.mxu0
        %1890 = vrot.lane.b32.xlu0 %v1251, 64
        %v1891 = vpop.permute.xlu0 %1890
        %v1893 = vsel %vm1259, %v1740, 0
        %v1896 = vsel %vm1750, %v1891, 0
        %1898 = vmatprep.subr.bf16.mxu0 0
        %1899 = vmatpush1.bf16.msra.mxu0 %v1896
        %1900 = vmatprep.subr.bf16.mxu0 0
        %1901 = vmatpush1.bf16.msra.mxu0 0
        %1902 = vmatprep.subr.bf16.mxu0 0
        %1903 = vmatpush1.bf16.msra.mxu0 0
        %1904 = vmatprep.subr.bf16.mxu0 0
        %1905 = vmatpush1.bf16.msra.mxu0 0
        %1906 = vmatprep.subr.bf16.mxu0 0
        %1907 = vmatpush1.bf16.msra.mxu0 0
        %1908 = vmatprep.subr.bf16.mxu0 0
        %1909 = vmatpush1.bf16.msra.mxu0 0
        %1910 = vmatprep.subr.bf16.mxu0 0
        %1911 = vmatpush1.bf16.msra.mxu0 0
        %1912 = vmatprep.subr.bf16.mxu0 0
        %1913 = vmatpush1.bf16.msra.mxu0 0
        %1914 = vmatprep.subr.bf16.mxu0 0
        %1915 = vmatpush1.bf16.msra.mxu0 0
        %1916 = vmatprep.subr.bf16.mxu0 0
        %1917 = vmatpush1.bf16.msra.mxu0 0
        %1918 = vmatprep.subr.bf16.mxu0 0
        %1919 = vmatpush1.bf16.msra.mxu0 0
        %1920 = vmatprep.subr.bf16.mxu0 0
        %1921 = vmatpush1.bf16.msra.mxu0 0
        %1922 = vmatprep.subr.bf16.mxu0 0
        %1923 = vmatpush1.bf16.msra.mxu0 0
        %1924 = vmatprep.subr.bf16.mxu0 0
        %1925 = vmatpush1.bf16.msra.mxu0 0
        %1926 = vmatprep.subr.bf16.mxu0 0
        %1927 = vmatpush1.bf16.msra.mxu0 0
        %1928 = vmatprep.subr.bf16.mxu0 0
        %1929 = vmatpush1.bf16.msra.mxu0 0
        %1930 = vmatprep.mubr.bf16.mxu0 0
        %1931 = vmatmul.mubr.bf16.gmra.mrb[0].mxu0 %v1893
        %v1932 = vpop.f32.mrb[0].mxu0
        %v1933 = vadd.f32 0.0, %v1932
        %v1934 = vpop.f32.mrb[0].mxu0
        %v1935 = vpop.f32.mrb[0].mxu0
        %v1936 = vpop.f32.mrb[0].mxu0
        %1937 = vdwg.mxu0
        %1938 = vrot.lane.b32.xlu0 %v1252, 64
        %v1939 = vpop.permute.xlu0 %1938
        %v1941 = vsel %vm1259, %v1741, 0
        %v1944 = vsel %vm1750, %v1939, 0
        %1946 = vmatprep.subr.bf16.mxu0 0
        %1947 = vmatpush1.bf16.msra.mxu0 %v1944
        %1948 = vmatprep.subr.bf16.mxu0 0
        %1949 = vmatpush1.bf16.msra.mxu0 0
        %1950 = vmatprep.subr.bf16.mxu0 0
        %1951 = vmatpush1.bf16.msra.mxu0 0
        %1952 = vmatprep.subr.bf16.mxu0 0
        %1953 = vmatpush1.bf16.msra.mxu0 0
        %1954 = vmatprep.subr.bf16.mxu0 0
        %1955 = vmatpush1.bf16.msra.mxu0 0
        %1956 = vmatprep.subr.bf16.mxu0 0
        %1957 = vmatpush1.bf16.msra.mxu0 0
        %1958 = vmatprep.subr.bf16.mxu0 0
        %1959 = vmatpush1.bf16.msra.mxu0 0
        %1960 = vmatprep.subr.bf16.mxu0 0
        %1961 = vmatpush1.bf16.msra.mxu0 0
        %1962 = vmatprep.subr.bf16.mxu0 0
        %1963 = vmatpush1.bf16.msra.mxu0 0
        %1964 = vmatprep.subr.bf16.mxu0 0
        %1965 = vmatpush1.bf16.msra.mxu0 0
        %1966 = vmatprep.subr.bf16.mxu0 0
        %1967 = vmatpush1.bf16.msra.mxu0 0
        %1968 = vmatprep.subr.bf16.mxu0 0
        %1969 = vmatpush1.bf16.msra.mxu0 0
        %1970 = vmatprep.subr.bf16.mxu0 0
        %1971 = vmatpush1.bf16.msra.mxu0 0
        %1972 = vmatprep.subr.bf16.mxu0 0
        %1973 = vmatpush1.bf16.msra.mxu0 0
        %1974 = vmatprep.subr.bf16.mxu0 0
        %1975 = vmatpush1.bf16.msra.mxu0 0
        %1976 = vmatprep.subr.bf16.mxu0 0
        %1977 = vmatpush1.bf16.msra.mxu0 0
        %1978 = vmatprep.mubr.bf16.mxu0 0
        %1979 = vmatmul.mubr.bf16.gmra.mrb[0].mxu0 %v1941
        %v1980 = vpop.f32.mrb[0].mxu0
        %v1981 = vadd.f32 0.0, %v1980
        %v1982 = vpop.f32.mrb[0].mxu0
        %v1983 = vpop.f32.mrb[0].mxu0
        %v1984 = vpop.f32.mrb[0].mxu0
        %1985 = vdwg.mxu0
        %1986 = vrot.lane.b32.xlu0 %v1253, 64
        %v1987 = vpop.permute.xlu0 %1986
        %v1989 = vsel %vm1259, %v1742, 0
        %v1992 = vsel %vm1750, %v1987, 0
        %1994 = vmatprep.subr.bf16.mxu0 0
        %1995 = vmatpush1.bf16.msra.mxu0 %v1992
        %1996 = vmatprep.subr.bf16.mxu0 0
        %1997 = vmatpush1.bf16.msra.mxu0 0
        %1998 = vmatprep.subr.bf16.mxu0 0
        %1999 = vmatpush1.bf16.msra.mxu0 0
        %2000 = vmatprep.subr.bf16.mxu0 0
        %2001 = vmatpush1.bf16.msra.mxu0 0
        %2002 = vmatprep.subr.bf16.mxu0 0
        %2003 = vmatpush1.bf16.msra.mxu0 0
        %2004 = vmatprep.subr.bf16.mxu0 0
        %2005 = vmatpush1.bf16.msra.mxu0 0
        %2006 = vmatprep.subr.bf16.mxu0 0
        %2007 = vmatpush1.bf16.msra.mxu0 0
        %2008 = vmatprep.subr.bf16.mxu0 0
        %2009 = vmatpush1.bf16.msra.mxu0 0
        %2010 = vmatprep.subr.bf16.mxu0 0
        %2011 = vmatpush1.bf16.msra.mxu0 0
        %2012 = vmatprep.subr.bf16.mxu0 0
        %2013 = vmatpush1.bf16.msra.mxu0 0
        %2014 = vmatprep.subr.bf16.mxu0 0
        %2015 = vmatpush1.bf16.msra.mxu0 0
        %2016 = vmatprep.subr.bf16.mxu0 0
        %2017 = vmatpush1.bf16.msra.mxu0 0
        %2018 = vmatprep.subr.bf16.mxu0 0
        %2019 = vmatpush1.bf16.msra.mxu0 0
        %2020 = vmatprep.subr.bf16.mxu0 0
        %2021 = vmatpush1.bf16.msra.mxu0 0
        %2022 = vmatprep.subr.bf16.mxu0 0
        %2023 = vmatpush1.bf16.msra.mxu0 0
        %2024 = vmatprep.subr.bf16.mxu0 0
        %2025 = vmatpush1.bf16.msra.mxu0 0
        %2026 = vmatprep.mubr.bf16.mxu0 0
        %2027 = vmatmul.mubr.bf16.gmra.mrb[0].mxu0 %v1989
        %v2028 = vpop.f32.mrb[0].mxu0
        %v2029 = vadd.f32 0.0, %v2028
        %v2030 = vpop.f32.mrb[0].mxu0
        %v2031 = vpop.f32.mrb[0].mxu0
        %v2032 = vpop.f32.mrb[0].mxu0
        %2033 = vdwg.mxu0
        %2034 = vrot.lane.b32.xlu0 %v1254, 64
        %v2035 = vpop.permute.xlu0 %2034
        %v2037 = vsel %vm1259, %v1743, 0
        %v2040 = vsel %vm1750, %v2035, 0
        %2042 = vmatprep.subr.bf16.mxu0 0
        %2043 = vmatpush1.bf16.msra.mxu0 %v2040
        %2044 = vmatprep.subr.bf16.mxu0 0
        %2045 = vmatpush1.bf16.msra.mxu0 0
        %2046 = vmatprep.subr.bf16.mxu0 0
        %2047 = vmatpush1.bf16.msra.mxu0 0
        %2048 = vmatprep.subr.bf16.mxu0 0
        %2049 = vmatpush1.bf16.msra.mxu0 0
        %2050 = vmatprep.subr.bf16.mxu0 0
        %2051 = vmatpush1.bf16.msra.mxu0 0
        %2052 = vmatprep.subr.bf16.mxu0 0
        %2053 = vmatpush1.bf16.msra.mxu0 0
        %2054 = vmatprep.subr.bf16.mxu0 0
        %2055 = vmatpush1.bf16.msra.mxu0 0
        %2056 = vmatprep.subr.bf16.mxu0 0
        %2057 = vmatpush1.bf16.msra.mxu0 0
        %2058 = vmatprep.subr.bf16.mxu0 0
        %2059 = vmatpush1.bf16.msra.mxu0 0
        %2060 = vmatprep.subr.bf16.mxu0 0
        %2061 = vmatpush1.bf16.msra.mxu0 0
        %2062 = vmatprep.subr.bf16.mxu0 0
        %2063 = vmatpush1.bf16.msra.mxu0 0
        %2064 = vmatprep.subr.bf16.mxu0 0
        %2065 = vmatpush1.bf16.msra.mxu0 0
        %2066 = vmatprep.subr.bf16.mxu0 0
        %2067 = vmatpush1.bf16.msra.mxu0 0
        %2068 = vmatprep.subr.bf16.mxu0 0
        %2069 = vmatpush1.bf16.msra.mxu0 0
        %2070 = vmatprep.subr.bf16.mxu0 0
        %2071 = vmatpush1.bf16.msra.mxu0 0
        %2072 = vmatprep.subr.bf16.mxu0 0
        %2073 = vmatpush1.bf16.msra.mxu0 0
        %2074 = vmatprep.mubr.bf16.mxu0 0
        %2075 = vmatmul.mubr.bf16.gmra.mrb[0].mxu0 %v2037
        %v2076 = vpop.f32.mrb[0].mxu0
        %v2077 = vadd.f32 0.0, %v2076
        %v2078 = vpop.f32.mrb[0].mxu0
        %v2079 = vpop.f32.mrb[0].mxu0
        %v2080 = vpop.f32.mrb[0].mxu0
        %2081 = vdwg.mxu0
        %2082 = vrot.lane.b32.xlu0 %v1255, 64
        %v2083 = vpop.permute.xlu0 %2082
        %v2085 = vsel %vm1259, %v1744, 0
        %v2088 = vsel %vm1750, %v2083, 0
        %2090 = vmatprep.subr.bf16.mxu0 0
        %2091 = vmatpush1.bf16.msra.mxu0 %v2088
        %2092 = vmatprep.subr.bf16.mxu0 0
        %2093 = vmatpush1.bf16.msra.mxu0 0
        %2094 = vmatprep.subr.bf16.mxu0 0
        %2095 = vmatpush1.bf16.msra.mxu0 0
        %2096 = vmatprep.subr.bf16.mxu0 0
        %2097 = vmatpush1.bf16.msra.mxu0 0
        %2098 = vmatprep.subr.bf16.mxu0 0
        %2099 = vmatpush1.bf16.msra.mxu0 0
        %2100 = vmatprep.subr.bf16.mxu0 0
        %2101 = vmatpush1.bf16.msra.mxu0 0
        %2102 = vmatprep.subr.bf16.mxu0 0
        %2103 = vmatpush1.bf16.msra.mxu0 0
        %2104 = vmatprep.subr.bf16.mxu0 0
        %2105 = vmatpush1.bf16.msra.mxu0 0
        %2106 = vmatprep.subr.bf16.mxu0 0
        %2107 = vmatpush1.bf16.msra.mxu0 0
        %2108 = vmatprep.subr.bf16.mxu0 0
        %2109 = vmatpush1.bf16.msra.mxu0 0
        %2110 = vmatprep.subr.bf16.mxu0 0
        %2111 = vmatpush1.bf16.msra.mxu0 0
        %2112 = vmatprep.subr.bf16.mxu0 0
        %2113 = vmatpush1.bf16.msra.mxu0 0
        %2114 = vmatprep.subr.bf16.mxu0 0
        %2115 = vmatpush1.bf16.msra.mxu0 0
        %2116 = vmatprep.subr.bf16.mxu0 0
        %2117 = vmatpush1.bf16.msra.mxu0 0
        %2118 = vmatprep.subr.bf16.mxu0 0
        %2119 = vmatpush1.bf16.msra.mxu0 0
        %2120 = vmatprep.subr.bf16.mxu0 0
        %2121 = vmatpush1.bf16.msra.mxu0 0
        %2122 = vmatprep.mubr.bf16.mxu0 0
        %2123 = vmatmul.mubr.bf16.gmra.mrb[0].mxu0 %v2085
        %v2124 = vpop.f32.mrb[0].mxu0
        %v2125 = vadd.f32 0.0, %v2124
        %v2126 = vpop.f32.mrb[0].mxu0
        %v2127 = vpop.f32.mrb[0].mxu0
        %v2128 = vpop.f32.mrb[0].mxu0
        %2129 = vdwg.mxu0
        %2132 = vrot.lane.b32.xlu0 %v1885, 8
        %v2133 = vpop.permute.xlu0 %2132
        %2134 = vrot.lane.b32.xlu0 %v1933, 8
        %v2135 = vpop.permute.xlu0 %2134
        %2140 = vrot.lane.b32.xlu0 %v1981, 16
        %v2141 = vpop.permute.xlu0 %2140
        %2142 = vrot.lane.b32.xlu0 %v2029, 16
        %v2143 = vpop.permute.xlu0 %2142
        %2148 = vrot.lane.b32.xlu0 %v2077, 24
        %v2149 = vpop.permute.xlu0 %2148
        %2150 = vrot.lane.b32.xlu0 %v2125, 24
        %v2151 = vpop.permute.xlu0 %2150
        %v2154 = vsel %vm1259, %v1789, %v2133
        %v2155 = vsel %vm1259, %v1837, %v2135
        %vm2156 = vcmask 130048
        %v2157 = vsel %vm2156, %v2154, %v2141
        %v2158 = vsel %vm2156, %v2155, %v2143
        %vm2159 = vcmask 195584
        %v2160 = vsel %vm2159, %v2157, %v2149
        %v2161 = vsel %vm2159, %v2158, %v2151
        %v2162 = vld [vmem:[%s1022] sm:$0xf]
        %v2163 = vld [vmem:[%s1022 + $0x4] sm:$0xf]
        %v2164 = vld [vmem:[%s1022 + $0x8] sm:$0xf]
        %v2165 = vld [vmem:[%s1022 + $0xc] sm:$0xf]
        %v2166 = vld [vmem:[%s1025] sm:$0x1]
        %v2167 = vpack.c.bf16 %v2161, %v2160
        %v2169 = vlaneseq
        %v2170 = vshrl.u32 %v2169, 7
        %v2171 = vsub.s32 0, %v2170
        %v2172 = vrot.slane %v2166, %v2171
        %v2178 = vunpack.c.l.b16 %v2162
        %v2179 = vunpack.c.l.b16 %v2163
        %v2180 = vunpack.c.l.b16 %v2164
        %v2181 = vunpack.c.l.b16 %v2165
        %v2182 = vpack.c.b16 %v2179, %v2178
        %v2183 = vpack.c.b16 %v2181, %v2180
        %v2187 = vsel %vm1153, %v2167, 0
        %2189 = vmatprep.subr.bf16.mxu0 0
        %2190 = vmatpush1.bf16.msra.mxu0 %v2182
        %2191 = vmatprep.subr.bf16.mxu0 0
        %2192 = vmatpush1.bf16.msra.mxu0 %v2183
        %2193 = vmatprep.subr.bf16.mxu0 0
        %2194 = vmatpush1.bf16.msra.mxu0 0
        %2195 = vmatprep.subr.bf16.mxu0 0
        %2196 = vmatpush1.bf16.msra.mxu0 0
        %2197 = vmatprep.subr.bf16.mxu0 0
        %2198 = vmatpush1.bf16.msra.mxu0 0
        %2199 = vmatprep.subr.bf16.mxu0 0
        %2200 = vmatpush1.bf16.msra.mxu0 0
        %2201 = vmatprep.subr.bf16.mxu0 0
        %2202 = vmatpush1.bf16.msra.mxu0 0
        %2203 = vmatprep.subr.bf16.mxu0 0
        %2204 = vmatpush1.bf16.msra.mxu0 0
        %2205 = vmatprep.subr.bf16.mxu0 0
        %2206 = vmatpush1.bf16.msra.mxu0 0
        %2207 = vmatprep.subr.bf16.mxu0 0
        %2208 = vmatpush1.bf16.msra.mxu0 0
        %2209 = vmatprep.subr.bf16.mxu0 0
        %2210 = vmatpush1.bf16.msra.mxu0 0
        %2211 = vmatprep.subr.bf16.mxu0 0
        %2212 = vmatpush1.bf16.msra.mxu0 0
        %2213 = vmatprep.subr.bf16.mxu0 0
        %2214 = vmatpush1.bf16.msra.mxu0 0
        %2215 = vmatprep.subr.bf16.mxu0 0
        %2216 = vmatpush1.bf16.msra.mxu0 0
        %2217 = vmatprep.subr.bf16.mxu0 0
        %2218 = vmatpush1.bf16.msra.mxu0 0
        %2219 = vmatprep.subr.bf16.mxu0 0
        %2220 = vmatpush1.bf16.msra.mxu0 0
        %2221 = vmatprep.mubr.bf16.mxu0 0
        %2222 = vmatmul.mubr.bf16.gmra.mrb[0].mxu0 %v2187
        %v2223 = vpop.f32.mrb[0].mxu0
        %v2224 = vadd.f32 %v2172, %v2223
        %v2225 = vpop.f32.mrb[0].mxu0
        %v2226 = vpop.f32.mrb[0].mxu0
        %v2227 = vadd.f32 %v2172, %v2226
        %v2228 = vpop.f32.mrb[0].mxu0
        %2229 = vdwg.mxu0
        %v2230 = vadd.f32 %v1125, %v2224
        %v2231 = vadd.f32 %v1126, %v2227
        %v2232 = vld [vmem:[%s1028] sm:$0x1]
        %v2233 = vld [vmem:[%s1031] sm:$0x1]
        %v2234 = vsel %vm1153, %v2230, 0.0
        %2235 = vadd.xlane.f32.xlu0 %v2234
        %v2236 = vpop.xlane.xlu0 %2235
        %v2237 = vsel %vm1153, %v2231, 0.0
        %2238 = vadd.xlane.f32.xlu0 %v2237
        %v2239 = vpop.xlane.xlu0 %2238
        %v2240 = vrcp.pop 32.0
        %v2241 = vmul.f32 %v2236, %v2240
        %v2242 = vmul.f32 %v2239, %v2240
        %v2243 = vsub.f32 %v2230, %v2241
        %v2244 = vsub.f32 %v2231, %v2242
        %v2245 = vmul.f32 %v2243, %v2243
        %v2246 = vmul.f32 %v2244, %v2244
        %v2247 = vsel %vm1153, %v2245, 0.0
        %2248 = vadd.xlane.f32.xlu0 %v2247
        %v2249 = vpop.xlane.xlu0 %2248
        %v2250 = vsel %vm1153, %v2246, 0.0
        %2251 = vadd.xlane.f32.xlu0 %v2250
        %v2252 = vpop.xlane.xlu0 %2251
        %v2253 = vmul.f32 %v2249, %v2240
        %v2254 = vmul.f32 %v2252, %v2240
        %v2255 = vadd.f32 %v2253, 1e-05
        %v2256 = vadd.f32 %v2254, 1e-05
        %v2257 = vrsqrt.pop %v2255
        %v2258 = vrsqrt.pop %v2256
        %v2259 = vmul.f32 %v2243, %v2257
        %v2260 = vmul.f32 %v2244, %v2258
        %v2262 = vlaneseq
        %v2263 = vshrl.u32 %v2262, 7
        %v2264 = vsub.s32 0, %v2263
        %v2265 = vrot.slane %v2232, %v2264
        %v2267 = vmul.f32 %v2259, %v2265
        %v2268 = vmul.f32 %v2260, %v2265
        %v2270 = vlaneseq
        %v2271 = vshrl.u32 %v2270, 7
        %v2272 = vsub.s32 0, %v2271
        %v2273 = vrot.slane %v2233, %v2272
        %v2275 = vadd.f32 %v2267, %v2273
        %v2276 = vadd.f32 %v2268, %v2273
        %v2277 = vld [vmem:[%s1036] sm:$0xf]
        %v2278 = vld [vmem:[%s1036 + $0x4] sm:$0xf]
        %v2279 = vld [vmem:[%s1036 + $0x8] sm:$0xf]
        %v2280 = vld [vmem:[%s1036 + $0xc] sm:$0xf]
        %v2281 = vld [vmem:[%s1039] sm:$0x1]
        %v2282 = vpack.c.bf16 %v2276, %v2275
        %v2284 = vlaneseq
        %v2285 = vshrl.u32 %v2284, 7
        %v2286 = vsub.s32 0, %v2285
        %v2287 = vrot.slane %v2281, %v2286
        %v2293 = vunpack.c.l.b16 %v2277
        %v2294 = vunpack.c.l.b16 %v2278
        %v2295 = vunpack.c.l.b16 %v2279
        %v2296 = vunpack.c.l.b16 %v2280
        %v2297 = vpack.c.b16 %v2294, %v2293
        %v2298 = vpack.c.b16 %v2296, %v2295
        %v2302 = vsel %vm1153, %v2282, 0
        %2304 = vmatprep.subr.bf16.mxu0 0
        %2305 = vmatpush1.bf16.msra.mxu0 %v2297
        %2306 = vmatprep.subr.bf16.mxu0 0
        %2307 = vmatpush1.bf16.msra.mxu0 %v2298
        %2308 = vmatprep.subr.bf16.mxu0 0
        %2309 = vmatpush1.bf16.msra.mxu0 0
        %2310 = vmatprep.subr.bf16.mxu0 0
        %2311 = vmatpush1.bf16.msra.mxu0 0
        %2312 = vmatprep.subr.bf16.mxu0 0
        %2313 = vmatpush1.bf16.msra.mxu0 0
        %2314 = vmatprep.subr.bf16.mxu0 0
        %2315 = vmatpush1.bf16.msra.mxu0 0
        %2316 = vmatprep.subr.bf16.mxu0 0
        %2317 = vmatpush1.bf16.msra.mxu0 0
        %2318 = vmatprep.subr.bf16.mxu0 0
        %2319 = vmatpush1.bf16.msra.mxu0 0
        %2320 = vmatprep.subr.bf16.mxu0 0
        %2321 = vmatpush1.bf16.msra.mxu0 0
        %2322 = vmatprep.subr.bf16.mxu0 0
        %2323 = vmatpush1.bf16.msra.mxu0 0
        %2324 = vmatprep.subr.bf16.mxu0 0
        %2325 = vmatpush1.bf16.msra.mxu0 0
        %2326 = vmatprep.subr.bf16.mxu0 0
        %2327 = vmatpush1.bf16.msra.mxu0 0
        %2328 = vmatprep.subr.bf16.mxu0 0
        %2329 = vmatpush1.bf16.msra.mxu0 0
        %2330 = vmatprep.subr.bf16.mxu0 0
        %2331 = vmatpush1.bf16.msra.mxu0 0
        %2332 = vmatprep.subr.bf16.mxu0 0
        %2333 = vmatpush1.bf16.msra.mxu0 0
        %2334 = vmatprep.subr.bf16.mxu0 0
        %2335 = vmatpush1.bf16.msra.mxu0 0
        %2336 = vmatprep.mubr.bf16.mxu0 0
        %2337 = vmatmul.mubr.bf16.gmra.mrb[0].mxu0 %v2302
        %v2338 = vpop.f32.mrb[0].mxu0
        %v2339 = vadd.f32 %v2287, %v2338
        %v2340 = vpop.f32.mrb[0].mxu0
        %v2341 = vpop.f32.mrb[0].mxu0
        %v2342 = vadd.f32 %v2287, %v2341
        %v2343 = vpop.f32.mrb[0].mxu0
        %2344 = vdwg.mxu0
        %v2345 = vld [vmem:[%s1044] sm:$0xf]
        %v2346 = vld [vmem:[%s1044 + $0x4] sm:$0xf]
        %v2347 = vld [vmem:[%s1044 + $0x8] sm:$0xf]
        %v2348 = vld [vmem:[%s1044 + $0xc] sm:$0xf]
        %v2349 = vld [vmem:[%s1047] sm:$0x1]
        %v2350 = vpack.c.bf16 %v1128, %v1127
        %v2352 = vlaneseq
        %v2353 = vshrl.u32 %v2352, 7
        %v2354 = vsub.s32 0, %v2353
        %v2355 = vrot.slane %v2349, %v2354
        %v2361 = vunpack.c.l.b16 %v2345
        %v2362 = vunpack.c.l.b16 %v2346
        %v2363 = vunpack.c.l.b16 %v2347
        %v2364 = vunpack.c.l.b16 %v2348
        %v2365 = vpack.c.b16 %v2362, %v2361
        %v2366 = vpack.c.b16 %v2364, %v2363
        %v2370 = vsel %vm1153, %v2350, 0
        %2372 = vmatprep.subr.bf16.mxu0 0
        %2373 = vmatpush1.bf16.msra.mxu0 %v2365
        %2374 = vmatprep.subr.bf16.mxu0 0
        %2375 = vmatpush1.bf16.msra.mxu0 %v2366
        %2376 = vmatprep.subr.bf16.mxu0 0
        %2377 = vmatpush1.bf16.msra.mxu0 0
        %2378 = vmatprep.subr.bf16.mxu0 0
        %2379 = vmatpush1.bf16.msra.mxu0 0
        %2380 = vmatprep.subr.bf16.mxu0 0
        %2381 = vmatpush1.bf16.msra.mxu0 0
        %2382 = vmatprep.subr.bf16.mxu0 0
        %2383 = vmatpush1.bf16.msra.mxu0 0
        %2384 = vmatprep.subr.bf16.mxu0 0
        %2385 = vmatpush1.bf16.msra.mxu0 0
        %2386 = vmatprep.subr.bf16.mxu0 0
        %2387 = vmatpush1.bf16.msra.mxu0 0
        %2388 = vmatprep.subr.bf16.mxu0 0
        %2389 = vmatpush1.bf16.msra.mxu0 0
        %2390 = vmatprep.subr.bf16.mxu0 0
        %2391 = vmatpush1.bf16.msra.mxu0 0
        %2392 = vmatprep.subr.bf16.mxu0 0
        %2393 = vmatpush1.bf16.msra.mxu0 0
        %2394 = vmatprep.subr.bf16.mxu0 0
        %2395 = vmatpush1.bf16.msra.mxu0 0
        %2396 = vmatprep.subr.bf16.mxu0 0
        %2397 = vmatpush1.bf16.msra.mxu0 0
        %2398 = vmatprep.subr.bf16.mxu0 0
        %2399 = vmatpush1.bf16.msra.mxu0 0
        %2400 = vmatprep.subr.bf16.mxu0 0
        %2401 = vmatpush1.bf16.msra.mxu0 0
        %2402 = vmatprep.subr.bf16.mxu0 0
        %2403 = vmatpush1.bf16.msra.mxu0 0
        %2404 = vmatprep.mubr.bf16.mxu0 0
        %2405 = vmatmul.mubr.bf16.gmra.mrb[0].mxu0 %v2370
        %v2406 = vpop.f32.mrb[0].mxu0
        %v2407 = vadd.f32 %v2355, %v2406
        %v2408 = vpop.f32.mrb[0].mxu0
        %v2409 = vpop.f32.mrb[0].mxu0
        %v2410 = vadd.f32 %v2355, %v2409
        %v2411 = vpop.f32.mrb[0].mxu0
        %2412 = vdwg.mxu0
        %v2413 = vmul.f32 %v2339, 0.35355338
        %v2414 = vmul.f32 %v2342, 0.35355338
        %2417 = vrot.lane.b32.xlu0 %v2413, 120
        %v2418 = vpop.permute.xlu0 %2417
        %2419 = vrot.lane.b32.xlu0 %v2414, 120
        %v2420 = vpop.permute.xlu0 %2419
        %2423 = vrot.lane.b32.xlu0 %v2413, 112
        %v2424 = vpop.permute.xlu0 %2423
        %2425 = vrot.lane.b32.xlu0 %v2414, 112
        %v2426 = vpop.permute.xlu0 %2425
        %2429 = vrot.lane.b32.xlu0 %v2413, 104
        %v2430 = vpop.permute.xlu0 %2429
        %2431 = vrot.lane.b32.xlu0 %v2414, 104
        %v2432 = vpop.permute.xlu0 %2431
        %v2435 = vpack.c.bf16 %v2413, %v2413
        %v2436 = vpack.c.bf16 %v2414, %v2414
        %v2437 = vpack.c.bf16 %v2418, %v2418
        %v2438 = vpack.c.bf16 %v2420, %v2420
        %v2439 = vpack.c.bf16 %v2424, %v2424
        %v2440 = vpack.c.bf16 %v2426, %v2426
        %v2441 = vpack.c.bf16 %v2430, %v2430
        %v2442 = vpack.c.bf16 %v2432, %v2432
        %2445 = vrot.lane.b32.xlu0 %v2407, 120
        %v2446 = vpop.permute.xlu0 %2445
        %2447 = vrot.lane.b32.xlu0 %v2410, 120
        %v2448 = vpop.permute.xlu0 %2447
        %2451 = vrot.lane.b32.xlu0 %v2407, 112
        %v2452 = vpop.permute.xlu0 %2451
        %2453 = vrot.lane.b32.xlu0 %v2410, 112
        %v2454 = vpop.permute.xlu0 %2453
        %2457 = vrot.lane.b32.xlu0 %v2407, 104
        %v2458 = vpop.permute.xlu0 %2457
        %2459 = vrot.lane.b32.xlu0 %v2410, 104
        %v2460 = vpop.permute.xlu0 %2459
        %v2463 = vpack.c.bf16 %v2407, %v2407
        %v2464 = vpack.c.bf16 %v2410, %v2410
        %v2465 = vpack.c.bf16 %v2446, %v2446
        %v2466 = vpack.c.bf16 %v2448, %v2448
        %v2467 = vpack.c.bf16 %v2452, %v2452
        %v2468 = vpack.c.bf16 %v2454, %v2454
        %v2469 = vpack.c.bf16 %v2458, %v2458
        %v2470 = vpack.c.bf16 %v2460, %v2460
        %v2472 = vsel %vm1259, %v2435, 0
        %v2475 = vsel %vm1259, %v2463, 0
        %2477 = vmatprep.subr.bf16.mxu0 0
        %2478 = vmatpush1.bf16.xpose.msra.mxu0 %v2475
        %2479 = vmatprep.subr.bf16.mxu0 0
        %2480 = vmatpush1.bf16.xpose.msra.mxu0 0
        %2481 = vmatprep.subr.bf16.mxu0 0
        %2482 = vmatpush1.bf16.xpose.msra.mxu0 0
        %2483 = vmatprep.subr.bf16.mxu0 0
        %2484 = vmatpush1.bf16.xpose.msra.mxu0 0
        %2485 = vmatprep.subr.bf16.mxu0 0
        %2486 = vmatpush1.bf16.xpose.msra.mxu0 0
        %2487 = vmatprep.subr.bf16.mxu0 0
        %2488 = vmatpush1.bf16.xpose.msra.mxu0 0
        %2489 = vmatprep.subr.bf16.mxu0 0
        %2490 = vmatpush1.bf16.xpose.msra.mxu0 0
        %2491 = vmatprep.subr.bf16.mxu0 0
        %2492 = vmatpush1.bf16.xpose.msra.mxu0 0
        %2493 = vmatprep.subr.bf16.mxu0 0
        %2494 = vmatpush1.bf16.xpose.msra.mxu0 0
        %2495 = vmatprep.subr.bf16.mxu0 0
        %2496 = vmatpush1.bf16.xpose.msra.mxu0 0
        %2497 = vmatprep.subr.bf16.mxu0 0
        %2498 = vmatpush1.bf16.xpose.msra.mxu0 0
        %2499 = vmatprep.subr.bf16.mxu0 0
        %2500 = vmatpush1.bf16.xpose.msra.mxu0 0
        %2501 = vmatprep.subr.bf16.mxu0 0
        %2502 = vmatpush1.bf16.xpose.msra.mxu0 0
        %2503 = vmatprep.subr.bf16.mxu0 0
        %2504 = vmatpush1.bf16.xpose.msra.mxu0 0
        %2505 = vmatprep.subr.bf16.mxu0 0
        %2506 = vmatpush1.bf16.xpose.msra.mxu0 0
        %2507 = vmatprep.subr.bf16.mxu0 0
        %2508 = vmatpush1.bf16.xpose.msra.mxu0 0
        %2509 = vmatprep.mubr.bf16.mxu0 0
        %2510 = vmatmul.mubr.bf16.gmra.mrb[0].mxu0 %v2472
        %v2511 = vpop.f32.mrb[0].mxu0
        %v2512 = vadd.f32 0.0, %v2511
        %v2513 = vpop.f32.mrb[0].mxu0
        %v2514 = vpop.f32.mrb[0].mxu0
        %v2515 = vpop.f32.mrb[0].mxu0
        %2516 = vdwg.mxu0
        %v2518 = vsel %vm1259, %v2436, 0
        %v2521 = vsel %vm1259, %v2464, 0
        %2523 = vmatprep.subr.bf16.mxu0 0
        %2524 = vmatpush1.bf16.xpose.msra.mxu0 %v2521
        %2525 = vmatprep.subr.bf16.mxu0 0
        %2526 = vmatpush1.bf16.xpose.msra.mxu0 0
        %2527 = vmatprep.subr.bf16.mxu0 0
        %2528 = vmatpush1.bf16.xpose.msra.mxu0 0
        %2529 = vmatprep.subr.bf16.mxu0 0
        %2530 = vmatpush1.bf16.xpose.msra.mxu0 0
        %2531 = vmatprep.subr.bf16.mxu0 0
        %2532 = vmatpush1.bf16.xpose.msra.mxu0 0
        %2533 = vmatprep.subr.bf16.mxu0 0
        %2534 = vmatpush1.bf16.xpose.msra.mxu0 0
        %2535 = vmatprep.subr.bf16.mxu0 0
        %2536 = vmatpush1.bf16.xpose.msra.mxu0 0
        %2537 = vmatprep.subr.bf16.mxu0 0
        %2538 = vmatpush1.bf16.xpose.msra.mxu0 0
        %2539 = vmatprep.subr.bf16.mxu0 0
        %2540 = vmatpush1.bf16.xpose.msra.mxu0 0
        %2541 = vmatprep.subr.bf16.mxu0 0
        %2542 = vmatpush1.bf16.xpose.msra.mxu0 0
        %2543 = vmatprep.subr.bf16.mxu0 0
        %2544 = vmatpush1.bf16.xpose.msra.mxu0 0
        %2545 = vmatprep.subr.bf16.mxu0 0
        %2546 = vmatpush1.bf16.xpose.msra.mxu0 0
        %2547 = vmatprep.subr.bf16.mxu0 0
        %2548 = vmatpush1.bf16.xpose.msra.mxu0 0
        %2549 = vmatprep.subr.bf16.mxu0 0
        %2550 = vmatpush1.bf16.xpose.msra.mxu0 0
        %2551 = vmatprep.subr.bf16.mxu0 0
        %2552 = vmatpush1.bf16.xpose.msra.mxu0 0
        %2553 = vmatprep.subr.bf16.mxu0 0
        %2554 = vmatpush1.bf16.xpose.msra.mxu0 0
        %2555 = vmatprep.mubr.bf16.mxu0 0
        %2556 = vmatmul.mubr.bf16.gmra.mrb[0].mxu0 %v2518
        %v2557 = vpop.f32.mrb[0].mxu0
        %v2558 = vadd.f32 0.0, %v2557
        %v2559 = vpop.f32.mrb[0].mxu0
        %v2560 = vpop.f32.mrb[0].mxu0
        %v2561 = vpop.f32.mrb[0].mxu0
        %2562 = vdwg.mxu0
        %v2564 = vsel %vm1259, %v2437, 0
        %v2567 = vsel %vm1259, %v2465, 0
        %2569 = vmatprep.subr.bf16.mxu0 0
        %2570 = vmatpush1.bf16.xpose.msra.mxu0 %v2567
        %2571 = vmatprep.subr.bf16.mxu0 0
        %2572 = vmatpush1.bf16.xpose.msra.mxu0 0
        %2573 = vmatprep.subr.bf16.mxu0 0
        %2574 = vmatpush1.bf16.xpose.msra.mxu0 0
        %2575 = vmatprep.subr.bf16.mxu0 0
        %2576 = vmatpush1.bf16.xpose.msra.mxu0 0
        %2577 = vmatprep.subr.bf16.mxu0 0
        %2578 = vmatpush1.bf16.xpose.msra.mxu0 0
        %2579 = vmatprep.subr.bf16.mxu0 0
        %2580 = vmatpush1.bf16.xpose.msra.mxu0 0
        %2581 = vmatprep.subr.bf16.mxu0 0
        %2582 = vmatpush1.bf16.xpose.msra.mxu0 0
        %2583 = vmatprep.subr.bf16.mxu0 0
        %2584 = vmatpush1.bf16.xpose.msra.mxu0 0
        %2585 = vmatprep.subr.bf16.mxu0 0
        %2586 = vmatpush1.bf16.xpose.msra.mxu0 0
        %2587 = vmatprep.subr.bf16.mxu0 0
        %2588 = vmatpush1.bf16.xpose.msra.mxu0 0
        %2589 = vmatprep.subr.bf16.mxu0 0
        %2590 = vmatpush1.bf16.xpose.msra.mxu0 0
        %2591 = vmatprep.subr.bf16.mxu0 0
        %2592 = vmatpush1.bf16.xpose.msra.mxu0 0
        %2593 = vmatprep.subr.bf16.mxu0 0
        %2594 = vmatpush1.bf16.xpose.msra.mxu0 0
        %2595 = vmatprep.subr.bf16.mxu0 0
        %2596 = vmatpush1.bf16.xpose.msra.mxu0 0
        %2597 = vmatprep.subr.bf16.mxu0 0
        %2598 = vmatpush1.bf16.xpose.msra.mxu0 0
        %2599 = vmatprep.subr.bf16.mxu0 0
        %2600 = vmatpush1.bf16.xpose.msra.mxu0 0
        %2601 = vmatprep.mubr.bf16.mxu0 0
        %2602 = vmatmul.mubr.bf16.gmra.mrb[0].mxu0 %v2564
        %v2603 = vpop.f32.mrb[0].mxu0
        %v2604 = vadd.f32 0.0, %v2603
        %v2605 = vpop.f32.mrb[0].mxu0
        %v2606 = vpop.f32.mrb[0].mxu0
        %v2607 = vpop.f32.mrb[0].mxu0
        %2608 = vdwg.mxu0
        %v2610 = vsel %vm1259, %v2438, 0
        %v2613 = vsel %vm1259, %v2466, 0
        %2615 = vmatprep.subr.bf16.mxu0 0
        %2616 = vmatpush1.bf16.xpose.msra.mxu0 %v2613
        %2617 = vmatprep.subr.bf16.mxu0 0
        %2618 = vmatpush1.bf16.xpose.msra.mxu0 0
        %2619 = vmatprep.subr.bf16.mxu0 0
        %2620 = vmatpush1.bf16.xpose.msra.mxu0 0
        %2621 = vmatprep.subr.bf16.mxu0 0
        %2622 = vmatpush1.bf16.xpose.msra.mxu0 0
        %2623 = vmatprep.subr.bf16.mxu0 0
        %2624 = vmatpush1.bf16.xpose.msra.mxu0 0
        %2625 = vmatprep.subr.bf16.mxu0 0
        %2626 = vmatpush1.bf16.xpose.msra.mxu0 0
        %2627 = vmatprep.subr.bf16.mxu0 0
        %2628 = vmatpush1.bf16.xpose.msra.mxu0 0
        %2629 = vmatprep.subr.bf16.mxu0 0
        %2630 = vmatpush1.bf16.xpose.msra.mxu0 0
        %2631 = vmatprep.subr.bf16.mxu0 0
        %2632 = vmatpush1.bf16.xpose.msra.mxu0 0
        %2633 = vmatprep.subr.bf16.mxu0 0
        %2634 = vmatpush1.bf16.xpose.msra.mxu0 0
        %2635 = vmatprep.subr.bf16.mxu0 0
        %2636 = vmatpush1.bf16.xpose.msra.mxu0 0
        %2637 = vmatprep.subr.bf16.mxu0 0
        %2638 = vmatpush1.bf16.xpose.msra.mxu0 0
        %2639 = vmatprep.subr.bf16.mxu0 0
        %2640 = vmatpush1.bf16.xpose.msra.mxu0 0
        %2641 = vmatprep.subr.bf16.mxu0 0
        %2642 = vmatpush1.bf16.xpose.msra.mxu0 0
        %2643 = vmatprep.subr.bf16.mxu0 0
        %2644 = vmatpush1.bf16.xpose.msra.mxu0 0
        %2645 = vmatprep.subr.bf16.mxu0 0
        %2646 = vmatpush1.bf16.xpose.msra.mxu0 0
        %2647 = vmatprep.mubr.bf16.mxu0 0
        %2648 = vmatmul.mubr.bf16.gmra.mrb[0].mxu0 %v2610
        %v2649 = vpop.f32.mrb[0].mxu0
        %v2650 = vadd.f32 0.0, %v2649
        %v2651 = vpop.f32.mrb[0].mxu0
        %v2652 = vpop.f32.mrb[0].mxu0
        %v2653 = vpop.f32.mrb[0].mxu0
        %2654 = vdwg.mxu0
        %v2656 = vsel %vm1259, %v2439, 0
        %v2659 = vsel %vm1259, %v2467, 0
        %2661 = vmatprep.subr.bf16.mxu0 0
        %2662 = vmatpush1.bf16.xpose.msra.mxu0 %v2659
        %2663 = vmatprep.subr.bf16.mxu0 0
        %2664 = vmatpush1.bf16.xpose.msra.mxu0 0
        %2665 = vmatprep.subr.bf16.mxu0 0
        %2666 = vmatpush1.bf16.xpose.msra.mxu0 0
        %2667 = vmatprep.subr.bf16.mxu0 0
        %2668 = vmatpush1.bf16.xpose.msra.mxu0 0
        %2669 = vmatprep.subr.bf16.mxu0 0
        %2670 = vmatpush1.bf16.xpose.msra.mxu0 0
        %2671 = vmatprep.subr.bf16.mxu0 0
        %2672 = vmatpush1.bf16.xpose.msra.mxu0 0
        %2673 = vmatprep.subr.bf16.mxu0 0
        %2674 = vmatpush1.bf16.xpose.msra.mxu0 0
        %2675 = vmatprep.subr.bf16.mxu0 0
        %2676 = vmatpush1.bf16.xpose.msra.mxu0 0
        %2677 = vmatprep.subr.bf16.mxu0 0
        %2678 = vmatpush1.bf16.xpose.msra.mxu0 0
        %2679 = vmatprep.subr.bf16.mxu0 0
        %2680 = vmatpush1.bf16.xpose.msra.mxu0 0
        %2681 = vmatprep.subr.bf16.mxu0 0
        %2682 = vmatpush1.bf16.xpose.msra.mxu0 0
        %2683 = vmatprep.subr.bf16.mxu0 0
        %2684 = vmatpush1.bf16.xpose.msra.mxu0 0
        %2685 = vmatprep.subr.bf16.mxu0 0
        %2686 = vmatpush1.bf16.xpose.msra.mxu0 0
        %2687 = vmatprep.subr.bf16.mxu0 0
        %2688 = vmatpush1.bf16.xpose.msra.mxu0 0
        %2689 = vmatprep.subr.bf16.mxu0 0
        %2690 = vmatpush1.bf16.xpose.msra.mxu0 0
        %2691 = vmatprep.subr.bf16.mxu0 0
        %2692 = vmatpush1.bf16.xpose.msra.mxu0 0
        %2693 = vmatprep.mubr.bf16.mxu0 0
        %2694 = vmatmul.mubr.bf16.gmra.mrb[0].mxu0 %v2656
        %v2695 = vpop.f32.mrb[0].mxu0
        %v2696 = vadd.f32 0.0, %v2695
        %v2697 = vpop.f32.mrb[0].mxu0
        %v2698 = vpop.f32.mrb[0].mxu0
        %v2699 = vpop.f32.mrb[0].mxu0
        %2700 = vdwg.mxu0
        %v2702 = vsel %vm1259, %v2440, 0
        %v2705 = vsel %vm1259, %v2468, 0
        %2707 = vmatprep.subr.bf16.mxu0 0
        %2708 = vmatpush1.bf16.xpose.msra.mxu0 %v2705
        %2709 = vmatprep.subr.bf16.mxu0 0
        %2710 = vmatpush1.bf16.xpose.msra.mxu0 0
        %2711 = vmatprep.subr.bf16.mxu0 0
        %2712 = vmatpush1.bf16.xpose.msra.mxu0 0
        %2713 = vmatprep.subr.bf16.mxu0 0
        %2714 = vmatpush1.bf16.xpose.msra.mxu0 0
        %2715 = vmatprep.subr.bf16.mxu0 0
        %2716 = vmatpush1.bf16.xpose.msra.mxu0 0
        %2717 = vmatprep.subr.bf16.mxu0 0
        %2718 = vmatpush1.bf16.xpose.msra.mxu0 0
        %2719 = vmatprep.subr.bf16.mxu0 0
        %2720 = vmatpush1.bf16.xpose.msra.mxu0 0
        %2721 = vmatprep.subr.bf16.mxu0 0
        %2722 = vmatpush1.bf16.xpose.msra.mxu0 0
        %2723 = vmatprep.subr.bf16.mxu0 0
        %2724 = vmatpush1.bf16.xpose.msra.mxu0 0
        %2725 = vmatprep.subr.bf16.mxu0 0
        %2726 = vmatpush1.bf16.xpose.msra.mxu0 0
        %2727 = vmatprep.subr.bf16.mxu0 0
        %2728 = vmatpush1.bf16.xpose.msra.mxu0 0
        %2729 = vmatprep.subr.bf16.mxu0 0
        %2730 = vmatpush1.bf16.xpose.msra.mxu0 0
        %2731 = vmatprep.subr.bf16.mxu0 0
        %2732 = vmatpush1.bf16.xpose.msra.mxu0 0
        %2733 = vmatprep.subr.bf16.mxu0 0
        %2734 = vmatpush1.bf16.xpose.msra.mxu0 0
        %2735 = vmatprep.subr.bf16.mxu0 0
        %2736 = vmatpush1.bf16.xpose.msra.mxu0 0
        %2737 = vmatprep.subr.bf16.mxu0 0
        %2738 = vmatpush1.bf16.xpose.msra.mxu0 0
        %2739 = vmatprep.mubr.bf16.mxu0 0
        %2740 = vmatmul.mubr.bf16.gmra.mrb[0].mxu0 %v2702
        %v2741 = vpop.f32.mrb[0].mxu0
        %v2742 = vadd.f32 0.0, %v2741
        %v2743 = vpop.f32.mrb[0].mxu0
        %v2744 = vpop.f32.mrb[0].mxu0
        %v2745 = vpop.f32.mrb[0].mxu0
        %2746 = vdwg.mxu0
        %v2748 = vsel %vm1259, %v2441, 0
        %v2751 = vsel %vm1259, %v2469, 0
        %2753 = vmatprep.subr.bf16.mxu0 0
        %2754 = vmatpush1.bf16.xpose.msra.mxu0 %v2751
        %2755 = vmatprep.subr.bf16.mxu0 0
        %2756 = vmatpush1.bf16.xpose.msra.mxu0 0
        %2757 = vmatprep.subr.bf16.mxu0 0
        %2758 = vmatpush1.bf16.xpose.msra.mxu0 0
        %2759 = vmatprep.subr.bf16.mxu0 0
        %2760 = vmatpush1.bf16.xpose.msra.mxu0 0
        %2761 = vmatprep.subr.bf16.mxu0 0
        %2762 = vmatpush1.bf16.xpose.msra.mxu0 0
        %2763 = vmatprep.subr.bf16.mxu0 0
        %2764 = vmatpush1.bf16.xpose.msra.mxu0 0
        %2765 = vmatprep.subr.bf16.mxu0 0
        %2766 = vmatpush1.bf16.xpose.msra.mxu0 0
        %2767 = vmatprep.subr.bf16.mxu0 0
        %2768 = vmatpush1.bf16.xpose.msra.mxu0 0
        %2769 = vmatprep.subr.bf16.mxu0 0
        %2770 = vmatpush1.bf16.xpose.msra.mxu0 0
        %2771 = vmatprep.subr.bf16.mxu0 0
        %2772 = vmatpush1.bf16.xpose.msra.mxu0 0
        %2773 = vmatprep.subr.bf16.mxu0 0
        %2774 = vmatpush1.bf16.xpose.msra.mxu0 0
        %2775 = vmatprep.subr.bf16.mxu0 0
        %2776 = vmatpush1.bf16.xpose.msra.mxu0 0
        %2777 = vmatprep.subr.bf16.mxu0 0
        %2778 = vmatpush1.bf16.xpose.msra.mxu0 0
        %2779 = vmatprep.subr.bf16.mxu0 0
        %2780 = vmatpush1.bf16.xpose.msra.mxu0 0
        %2781 = vmatprep.subr.bf16.mxu0 0
        %2782 = vmatpush1.bf16.xpose.msra.mxu0 0
        %2783 = vmatprep.subr.bf16.mxu0 0
        %2784 = vmatpush1.bf16.xpose.msra.mxu0 0
        %2785 = vmatprep.mubr.bf16.mxu0 0
        %2786 = vmatmul.mubr.bf16.gmra.mrb[0].mxu0 %v2748
        %v2787 = vpop.f32.mrb[0].mxu0
        %v2788 = vadd.f32 0.0, %v2787
        %v2789 = vpop.f32.mrb[0].mxu0
        %v2790 = vpop.f32.mrb[0].mxu0
        %v2791 = vpop.f32.mrb[0].mxu0
        %2792 = vdwg.mxu0
        %v2794 = vsel %vm1259, %v2442, 0
        %v2797 = vsel %vm1259, %v2470, 0
        %2799 = vmatprep.subr.bf16.mxu0 0
        %2800 = vmatpush1.bf16.xpose.msra.mxu0 %v2797
        %2801 = vmatprep.subr.bf16.mxu0 0
        %2802 = vmatpush1.bf16.xpose.msra.mxu0 0
        %2803 = vmatprep.subr.bf16.mxu0 0
        %2804 = vmatpush1.bf16.xpose.msra.mxu0 0
        %2805 = vmatprep.subr.bf16.mxu0 0
        %2806 = vmatpush1.bf16.xpose.msra.mxu0 0
        %2807 = vmatprep.subr.bf16.mxu0 0
        %2808 = vmatpush1.bf16.xpose.msra.mxu0 0
        %2809 = vmatprep.subr.bf16.mxu0 0
        %2810 = vmatpush1.bf16.xpose.msra.mxu0 0
        %2811 = vmatprep.subr.bf16.mxu0 0
        %2812 = vmatpush1.bf16.xpose.msra.mxu0 0
        %2813 = vmatprep.subr.bf16.mxu0 0
        %2814 = vmatpush1.bf16.xpose.msra.mxu0 0
        %2815 = vmatprep.subr.bf16.mxu0 0
        %2816 = vmatpush1.bf16.xpose.msra.mxu0 0
        %2817 = vmatprep.subr.bf16.mxu0 0
        %2818 = vmatpush1.bf16.xpose.msra.mxu0 0
        %2819 = vmatprep.subr.bf16.mxu0 0
        %2820 = vmatpush1.bf16.xpose.msra.mxu0 0
        %2821 = vmatprep.subr.bf16.mxu0 0
        %2822 = vmatpush1.bf16.xpose.msra.mxu0 0
        %2823 = vmatprep.subr.bf16.mxu0 0
        %2824 = vmatpush1.bf16.xpose.msra.mxu0 0
        %2825 = vmatprep.subr.bf16.mxu0 0
        %2826 = vmatpush1.bf16.xpose.msra.mxu0 0
        %2827 = vmatprep.subr.bf16.mxu0 0
        %2828 = vmatpush1.bf16.xpose.msra.mxu0 0
        %2829 = vmatprep.subr.bf16.mxu0 0
        %2830 = vmatpush1.bf16.xpose.msra.mxu0 0
        %2831 = vmatprep.mubr.bf16.mxu0 0
        %2832 = vmatmul.mubr.bf16.gmra.mrb[0].mxu0 %v2794
        %v2833 = vpop.f32.mrb[0].mxu0
        %v2834 = vadd.f32 0.0, %v2833
        %v2835 = vpop.f32.mrb[0].mxu0
        %v2836 = vpop.f32.mrb[0].mxu0
        %v2837 = vpop.f32.mrb[0].mxu0
        %2838 = vdwg.mxu0
        %v2839 = vsel %vm1259, %v2512, -inf
        %2840 = vmax.xlane.f32.xlu0 %v2839
        %v2841 = vpop.xlane.xlu0 %2840
        %v2842 = vsel %vm1259, %v2558, -inf
        %2843 = vmax.xlane.f32.xlu0 %v2842
        %v2844 = vpop.xlane.xlu0 %2843
        %v2845 = vsel %vm1259, %v2604, -inf
        %2846 = vmax.xlane.f32.xlu0 %v2845
        %v2847 = vpop.xlane.xlu0 %2846
        %v2848 = vsel %vm1259, %v2650, -inf
        %2849 = vmax.xlane.f32.xlu0 %v2848
        %v2850 = vpop.xlane.xlu0 %2849
        %v2851 = vsel %vm1259, %v2696, -inf
        %2852 = vmax.xlane.f32.xlu0 %v2851
        %v2853 = vpop.xlane.xlu0 %2852
        %v2854 = vsel %vm1259, %v2742, -inf
        %2855 = vmax.xlane.f32.xlu0 %v2854
        %v2856 = vpop.xlane.xlu0 %2855
        %v2857 = vsel %vm1259, %v2788, -inf
        %2858 = vmax.xlane.f32.xlu0 %v2857
        %v2859 = vpop.xlane.xlu0 %2858
        %v2860 = vsel %vm1259, %v2834, -inf
        %2861 = vmax.xlane.f32.xlu0 %v2860
        %v2862 = vpop.xlane.xlu0 %2861
        %v2863 = vsub.f32 %v2512, %v2841
        %v2864 = vsub.f32 %v2558, %v2844
        %v2865 = vsub.f32 %v2604, %v2847
        %v2866 = vsub.f32 %v2650, %v2850
        %v2867 = vsub.f32 %v2696, %v2853
        %v2868 = vsub.f32 %v2742, %v2856
        %v2869 = vsub.f32 %v2788, %v2859
        %v2870 = vsub.f32 %v2834, %v2862
        %v2871 = vmul.f32 %v2863, 1.442695
        %v2872 = vpow.pop %v2871
        %v2873 = vmul.f32 %v2864, 1.442695
        %v2874 = vpow.pop %v2873
        %v2875 = vmul.f32 %v2865, 1.442695
        %v2876 = vpow.pop %v2875
        %v2877 = vmul.f32 %v2866, 1.442695
        %v2878 = vpow.pop %v2877
        %v2879 = vmul.f32 %v2867, 1.442695
        %v2880 = vpow.pop %v2879
        %v2881 = vmul.f32 %v2868, 1.442695
        %v2882 = vpow.pop %v2881
        %v2883 = vmul.f32 %v2869, 1.442695
        %v2884 = vpow.pop %v2883
        %v2885 = vmul.f32 %v2870, 1.442695
        %v2886 = vpow.pop %v2885
        %v2887 = vsel %vm1259, %v2872, 0.0
        %2888 = vadd.xlane.f32.xlu0 %v2887
        %v2889 = vpop.xlane.xlu0 %2888
        %v2890 = vsel %vm1259, %v2874, 0.0
        %2891 = vadd.xlane.f32.xlu0 %v2890
        %v2892 = vpop.xlane.xlu0 %2891
        %v2893 = vsel %vm1259, %v2876, 0.0
        %2894 = vadd.xlane.f32.xlu0 %v2893
        %v2895 = vpop.xlane.xlu0 %2894
        %v2896 = vsel %vm1259, %v2878, 0.0
        %2897 = vadd.xlane.f32.xlu0 %v2896
        %v2898 = vpop.xlane.xlu0 %2897
        %v2899 = vsel %vm1259, %v2880, 0.0
        %2900 = vadd.xlane.f32.xlu0 %v2899
        %v2901 = vpop.xlane.xlu0 %2900
        %v2902 = vsel %vm1259, %v2882, 0.0
        %2903 = vadd.xlane.f32.xlu0 %v2902
        %v2904 = vpop.xlane.xlu0 %2903
        %v2905 = vsel %vm1259, %v2884, 0.0
        %2906 = vadd.xlane.f32.xlu0 %v2905
        %v2907 = vpop.xlane.xlu0 %2906
        %v2908 = vsel %vm1259, %v2886, 0.0
        %2909 = vadd.xlane.f32.xlu0 %v2908
        %v2910 = vpop.xlane.xlu0 %2909
        %v2911 = vrcp.pop %v2889
        %v2912 = vrcp.pop %v2892
        %v2913 = vrcp.pop %v2895
        %v2914 = vrcp.pop %v2898
        %v2915 = vrcp.pop %v2901
        %v2916 = vrcp.pop %v2904
        %v2917 = vrcp.pop %v2907
        %v2918 = vrcp.pop %v2910
        %v2919 = vmul.f32 %v2872, %v2911
        %v2920 = vmul.f32 %v2874, %v2912
        %v2921 = vmul.f32 %v2876, %v2913
        %v2922 = vmul.f32 %v2878, %v2914
        %v2923 = vmul.f32 %v2880, %v2915
        %v2924 = vmul.f32 %v2882, %v2916
        %v2925 = vmul.f32 %v2884, %v2917
        %v2926 = vmul.f32 %v2886, %v2918
        %v2927 = vpack.c.bf16 %v2919, %v2919
        %v2928 = vpack.c.bf16 %v2920, %v2920
        %v2929 = vpack.c.bf16 %v2921, %v2921
        %v2930 = vpack.c.bf16 %v2922, %v2922
        %v2931 = vpack.c.bf16 %v2923, %v2923
        %v2932 = vpack.c.bf16 %v2924, %v2924
        %v2933 = vpack.c.bf16 %v2925, %v2925
        %v2934 = vpack.c.bf16 %v2926, %v2926
        %2936 = vrot.lane.b32.xlu0 %v2463, 96
        %v2937 = vpop.permute.xlu0 %2936
        %v2939 = vsel %vm1259, %v2927, 0
        %v2942 = vsel %vm1750, %v2937, 0
        %2944 = vmatprep.subr.bf16.mxu0 0
        %2945 = vmatpush1.bf16.msra.mxu0 %v2942
        %2946 = vmatprep.subr.bf16.mxu0 0
        %2947 = vmatpush1.bf16.msra.mxu0 0
        %2948 = vmatprep.subr.bf16.mxu0 0
        %2949 = vmatpush1.bf16.msra.mxu0 0
        %2950 = vmatprep.subr.bf16.mxu0 0
        %2951 = vmatpush1.bf16.msra.mxu0 0
        %2952 = vmatprep.subr.bf16.mxu0 0
        %2953 = vmatpush1.bf16.msra.mxu0 0
        %2954 = vmatprep.subr.bf16.mxu0 0
        %2955 = vmatpush1.bf16.msra.mxu0 0
        %2956 = vmatprep.subr.bf16.mxu0 0
        %2957 = vmatpush1.bf16.msra.mxu0 0
        %2958 = vmatprep.subr.bf16.mxu0 0
        %2959 = vmatpush1.bf16.msra.mxu0 0
        %2960 = vmatprep.subr.bf16.mxu0 0
        %2961 = vmatpush1.bf16.msra.mxu0 0
        %2962 = vmatprep.subr.bf16.mxu0 0
        %2963 = vmatpush1.bf16.msra.mxu0 0
        %2964 = vmatprep.subr.bf16.mxu0 0
        %2965 = vmatpush1.bf16.msra.mxu0 0
        %2966 = vmatprep.subr.bf16.mxu0 0
        %2967 = vmatpush1.bf16.msra.mxu0 0
        %2968 = vmatprep.subr.bf16.mxu0 0
        %2969 = vmatpush1.bf16.msra.mxu0 0
        %2970 = vmatprep.subr.bf16.mxu0 0
        %2971 = vmatpush1.bf16.msra.mxu0 0
        %2972 = vmatprep.subr.bf16.mxu0 0
        %2973 = vmatpush1.bf16.msra.mxu0 0
        %2974 = vmatprep.subr.bf16.mxu0 0
        %2975 = vmatpush1.bf16.msra.mxu0 0
        %2976 = vmatprep.mubr.bf16.mxu0 0
        %2977 = vmatmul.mubr.bf16.gmra.mrb[0].mxu0 %v2939
        %v2978 = vpop.f32.mrb[0].mxu0
        %v2979 = vadd.f32 0.0, %v2978
        %v2980 = vpop.f32.mrb[0].mxu0
        %v2981 = vpop.f32.mrb[0].mxu0
        %v2982 = vpop.f32.mrb[0].mxu0
        %2983 = vdwg.mxu0
        %2985 = vrot.lane.b32.xlu0 %v2464, 96
        %v2986 = vpop.permute.xlu0 %2985
        %v2988 = vsel %vm1259, %v2928, 0
        %v2991 = vsel %vm1750, %v2986, 0
        %2993 = vmatprep.subr.bf16.mxu0 0
        %2994 = vmatpush1.bf16.msra.mxu0 %v2991
        %2995 = vmatprep.subr.bf16.mxu0 0
        %2996 = vmatpush1.bf16.msra.mxu0 0
        %2997 = vmatprep.subr.bf16.mxu0 0
        %2998 = vmatpush1.bf16.msra.mxu0 0
        %2999 = vmatprep.subr.bf16.mxu0 0
        %3000 = vmatpush1.bf16.msra.mxu0 0
        %3001 = vmatprep.subr.bf16.mxu0 0
        %3002 = vmatpush1.bf16.msra.mxu0 0
        %3003 = vmatprep.subr.bf16.mxu0 0
        %3004 = vmatpush1.bf16.msra.mxu0 0
        %3005 = vmatprep.subr.bf16.mxu0 0
        %3006 = vmatpush1.bf16.msra.mxu0 0
        %3007 = vmatprep.subr.bf16.mxu0 0
        %3008 = vmatpush1.bf16.msra.mxu0 0
        %3009 = vmatprep.subr.bf16.mxu0 0
        %3010 = vmatpush1.bf16.msra.mxu0 0
        %3011 = vmatprep.subr.bf16.mxu0 0
        %3012 = vmatpush1.bf16.msra.mxu0 0
        %3013 = vmatprep.subr.bf16.mxu0 0
        %3014 = vmatpush1.bf16.msra.mxu0 0
        %3015 = vmatprep.subr.bf16.mxu0 0
        %3016 = vmatpush1.bf16.msra.mxu0 0
        %3017 = vmatprep.subr.bf16.mxu0 0
        %3018 = vmatpush1.bf16.msra.mxu0 0
        %3019 = vmatprep.subr.bf16.mxu0 0
        %3020 = vmatpush1.bf16.msra.mxu0 0
        %3021 = vmatprep.subr.bf16.mxu0 0
        %3022 = vmatpush1.bf16.msra.mxu0 0
        %3023 = vmatprep.subr.bf16.mxu0 0
        %3024 = vmatpush1.bf16.msra.mxu0 0
        %3025 = vmatprep.mubr.bf16.mxu0 0
        %3026 = vmatmul.mubr.bf16.gmra.mrb[0].mxu0 %v2988
        %v3027 = vpop.f32.mrb[0].mxu0
        %v3028 = vadd.f32 0.0, %v3027
        %v3029 = vpop.f32.mrb[0].mxu0
        %v3030 = vpop.f32.mrb[0].mxu0
        %v3031 = vpop.f32.mrb[0].mxu0
        %3032 = vdwg.mxu0
        %3034 = vrot.lane.b32.xlu0 %v2465, 96
        %v3035 = vpop.permute.xlu0 %3034
        %v3037 = vsel %vm1259, %v2929, 0
        %v3040 = vsel %vm1750, %v3035, 0
        %3042 = vmatprep.subr.bf16.mxu0 0
        %3043 = vmatpush1.bf16.msra.mxu0 %v3040
        %3044 = vmatprep.subr.bf16.mxu0 0
        %3045 = vmatpush1.bf16.msra.mxu0 0
        %3046 = vmatprep.subr.bf16.mxu0 0
        %3047 = vmatpush1.bf16.msra.mxu0 0
        %3048 = vmatprep.subr.bf16.mxu0 0
        %3049 = vmatpush1.bf16.msra.mxu0 0
        %3050 = vmatprep.subr.bf16.mxu0 0
        %3051 = vmatpush1.bf16.msra.mxu0 0
        %3052 = vmatprep.subr.bf16.mxu0 0
        %3053 = vmatpush1.bf16.msra.mxu0 0
        %3054 = vmatprep.subr.bf16.mxu0 0
        %3055 = vmatpush1.bf16.msra.mxu0 0
        %3056 = vmatprep.subr.bf16.mxu0 0
        %3057 = vmatpush1.bf16.msra.mxu0 0
        %3058 = vmatprep.subr.bf16.mxu0 0
        %3059 = vmatpush1.bf16.msra.mxu0 0
        %3060 = vmatprep.subr.bf16.mxu0 0
        %3061 = vmatpush1.bf16.msra.mxu0 0
        %3062 = vmatprep.subr.bf16.mxu0 0
        %3063 = vmatpush1.bf16.msra.mxu0 0
        %3064 = vmatprep.subr.bf16.mxu0 0
        %3065 = vmatpush1.bf16.msra.mxu0 0
        %3066 = vmatprep.subr.bf16.mxu0 0
        %3067 = vmatpush1.bf16.msra.mxu0 0
        %3068 = vmatprep.subr.bf16.mxu0 0
        %3069 = vmatpush1.bf16.msra.mxu0 0
        %3070 = vmatprep.subr.bf16.mxu0 0
        %3071 = vmatpush1.bf16.msra.mxu0 0
        %3072 = vmatprep.subr.bf16.mxu0 0
        %3073 = vmatpush1.bf16.msra.mxu0 0
        %3074 = vmatprep.mubr.bf16.mxu0 0
        %3075 = vmatmul.mubr.bf16.gmra.mrb[0].mxu0 %v3037
        %v3076 = vpop.f32.mrb[0].mxu0
        %v3077 = vadd.f32 0.0, %v3076
        %v3078 = vpop.f32.mrb[0].mxu0
        %v3079 = vpop.f32.mrb[0].mxu0
        %v3080 = vpop.f32.mrb[0].mxu0
        %3081 = vdwg.mxu0
        %3083 = vrot.lane.b32.xlu0 %v2466, 96
        %v3084 = vpop.permute.xlu0 %3083
        %v3086 = vsel %vm1259, %v2930, 0
        %v3089 = vsel %vm1750, %v3084, 0
        %3091 = vmatprep.subr.bf16.mxu0 0
        %3092 = vmatpush1.bf16.msra.mxu0 %v3089
        %3093 = vmatprep.subr.bf16.mxu0 0
        %3094 = vmatpush1.bf16.msra.mxu0 0
        %3095 = vmatprep.subr.bf16.mxu0 0
        %3096 = vmatpush1.bf16.msra.mxu0 0
        %3097 = vmatprep.subr.bf16.mxu0 0
        %3098 = vmatpush1.bf16.msra.mxu0 0
        %3099 = vmatprep.subr.bf16.mxu0 0
        %3100 = vmatpush1.bf16.msra.mxu0 0
        %3101 = vmatprep.subr.bf16.mxu0 0
        %3102 = vmatpush1.bf16.msra.mxu0 0
        %3103 = vmatprep.subr.bf16.mxu0 0
        %3104 = vmatpush1.bf16.msra.mxu0 0
        %3105 = vmatprep.subr.bf16.mxu0 0
        %3106 = vmatpush1.bf16.msra.mxu0 0
        %3107 = vmatprep.subr.bf16.mxu0 0
        %3108 = vmatpush1.bf16.msra.mxu0 0
        %3109 = vmatprep.subr.bf16.mxu0 0
        %3110 = vmatpush1.bf16.msra.mxu0 0
        %3111 = vmatprep.subr.bf16.mxu0 0
        %3112 = vmatpush1.bf16.msra.mxu0 0
        %3113 = vmatprep.subr.bf16.mxu0 0
        %3114 = vmatpush1.bf16.msra.mxu0 0
        %3115 = vmatprep.subr.bf16.mxu0 0
        %3116 = vmatpush1.bf16.msra.mxu0 0
        %3117 = vmatprep.subr.bf16.mxu0 0
        %3118 = vmatpush1.bf16.msra.mxu0 0
        %3119 = vmatprep.subr.bf16.mxu0 0
        %3120 = vmatpush1.bf16.msra.mxu0 0
        %3121 = vmatprep.subr.bf16.mxu0 0
        %3122 = vmatpush1.bf16.msra.mxu0 0
        %3123 = vmatprep.mubr.bf16.mxu0 0
        %3124 = vmatmul.mubr.bf16.gmra.mrb[0].mxu0 %v3086
        %v3125 = vpop.f32.mrb[0].mxu0
        %v3126 = vadd.f32 0.0, %v3125
        %v3127 = vpop.f32.mrb[0].mxu0
        %v3128 = vpop.f32.mrb[0].mxu0
        %v3129 = vpop.f32.mrb[0].mxu0
        %3130 = vdwg.mxu0
        %3132 = vrot.lane.b32.xlu0 %v2467, 96
        %v3133 = vpop.permute.xlu0 %3132
        %v3135 = vsel %vm1259, %v2931, 0
        %v3138 = vsel %vm1750, %v3133, 0
        %3140 = vmatprep.subr.bf16.mxu0 0
        %3141 = vmatpush1.bf16.msra.mxu0 %v3138
        %3142 = vmatprep.subr.bf16.mxu0 0
        %3143 = vmatpush1.bf16.msra.mxu0 0
        %3144 = vmatprep.subr.bf16.mxu0 0
        %3145 = vmatpush1.bf16.msra.mxu0 0
        %3146 = vmatprep.subr.bf16.mxu0 0
        %3147 = vmatpush1.bf16.msra.mxu0 0
        %3148 = vmatprep.subr.bf16.mxu0 0
        %3149 = vmatpush1.bf16.msra.mxu0 0
        %3150 = vmatprep.subr.bf16.mxu0 0
        %3151 = vmatpush1.bf16.msra.mxu0 0
        %3152 = vmatprep.subr.bf16.mxu0 0
        %3153 = vmatpush1.bf16.msra.mxu0 0
        %3154 = vmatprep.subr.bf16.mxu0 0
        %3155 = vmatpush1.bf16.msra.mxu0 0
        %3156 = vmatprep.subr.bf16.mxu0 0
        %3157 = vmatpush1.bf16.msra.mxu0 0
        %3158 = vmatprep.subr.bf16.mxu0 0
        %3159 = vmatpush1.bf16.msra.mxu0 0
        %3160 = vmatprep.subr.bf16.mxu0 0
        %3161 = vmatpush1.bf16.msra.mxu0 0
        %3162 = vmatprep.subr.bf16.mxu0 0
        %3163 = vmatpush1.bf16.msra.mxu0 0
        %3164 = vmatprep.subr.bf16.mxu0 0
        %3165 = vmatpush1.bf16.msra.mxu0 0
        %3166 = vmatprep.subr.bf16.mxu0 0
        %3167 = vmatpush1.bf16.msra.mxu0 0
        %3168 = vmatprep.subr.bf16.mxu0 0
        %3169 = vmatpush1.bf16.msra.mxu0 0
        %3170 = vmatprep.subr.bf16.mxu0 0
        %3171 = vmatpush1.bf16.msra.mxu0 0
        %3172 = vmatprep.mubr.bf16.mxu0 0
        %3173 = vmatmul.mubr.bf16.gmra.mrb[0].mxu0 %v3135
        %v3174 = vpop.f32.mrb[0].mxu0
        %v3175 = vadd.f32 0.0, %v3174
        %v3176 = vpop.f32.mrb[0].mxu0
        %v3177 = vpop.f32.mrb[0].mxu0
        %v3178 = vpop.f32.mrb[0].mxu0
        %3179 = vdwg.mxu0
        %3181 = vrot.lane.b32.xlu0 %v2468, 96
        %v3182 = vpop.permute.xlu0 %3181
        %v3184 = vsel %vm1259, %v2932, 0
        %v3187 = vsel %vm1750, %v3182, 0
        %3189 = vmatprep.subr.bf16.mxu0 0
        %3190 = vmatpush1.bf16.msra.mxu0 %v3187
        %3191 = vmatprep.subr.bf16.mxu0 0
        %3192 = vmatpush1.bf16.msra.mxu0 0
        %3193 = vmatprep.subr.bf16.mxu0 0
        %3194 = vmatpush1.bf16.msra.mxu0 0
        %3195 = vmatprep.subr.bf16.mxu0 0
        %3196 = vmatpush1.bf16.msra.mxu0 0
        %3197 = vmatprep.subr.bf16.mxu0 0
        %3198 = vmatpush1.bf16.msra.mxu0 0
        %3199 = vmatprep.subr.bf16.mxu0 0
        %3200 = vmatpush1.bf16.msra.mxu0 0
        %3201 = vmatprep.subr.bf16.mxu0 0
        %3202 = vmatpush1.bf16.msra.mxu0 0
        %3203 = vmatprep.subr.bf16.mxu0 0
        %3204 = vmatpush1.bf16.msra.mxu0 0
        %3205 = vmatprep.subr.bf16.mxu0 0
        %3206 = vmatpush1.bf16.msra.mxu0 0
        %3207 = vmatprep.subr.bf16.mxu0 0
        %3208 = vmatpush1.bf16.msra.mxu0 0
        %3209 = vmatprep.subr.bf16.mxu0 0
        %3210 = vmatpush1.bf16.msra.mxu0 0
        %3211 = vmatprep.subr.bf16.mxu0 0
        %3212 = vmatpush1.bf16.msra.mxu0 0
        %3213 = vmatprep.subr.bf16.mxu0 0
        %3214 = vmatpush1.bf16.msra.mxu0 0
        %3215 = vmatprep.subr.bf16.mxu0 0
        %3216 = vmatpush1.bf16.msra.mxu0 0
        %3217 = vmatprep.subr.bf16.mxu0 0
        %3218 = vmatpush1.bf16.msra.mxu0 0
        %3219 = vmatprep.subr.bf16.mxu0 0
        %3220 = vmatpush1.bf16.msra.mxu0 0
        %3221 = vmatprep.mubr.bf16.mxu0 0
        %3222 = vmatmul.mubr.bf16.gmra.mrb[0].mxu0 %v3184
        %v3223 = vpop.f32.mrb[0].mxu0
        %v3224 = vadd.f32 0.0, %v3223
        %v3225 = vpop.f32.mrb[0].mxu0
        %v3226 = vpop.f32.mrb[0].mxu0
        %v3227 = vpop.f32.mrb[0].mxu0
        %3228 = vdwg.mxu0
        %3230 = vrot.lane.b32.xlu0 %v2469, 96
        %v3231 = vpop.permute.xlu0 %3230
        %v3233 = vsel %vm1259, %v2933, 0
        %v3236 = vsel %vm1750, %v3231, 0
        %3238 = vmatprep.subr.bf16.mxu0 0
        %3239 = vmatpush1.bf16.msra.mxu0 %v3236
        %3240 = vmatprep.subr.bf16.mxu0 0
        %3241 = vmatpush1.bf16.msra.mxu0 0
        %3242 = vmatprep.subr.bf16.mxu0 0
        %3243 = vmatpush1.bf16.msra.mxu0 0
        %3244 = vmatprep.subr.bf16.mxu0 0
        %3245 = vmatpush1.bf16.msra.mxu0 0
        %3246 = vmatprep.subr.bf16.mxu0 0
        %3247 = vmatpush1.bf16.msra.mxu0 0
        %3248 = vmatprep.subr.bf16.mxu0 0
        %3249 = vmatpush1.bf16.msra.mxu0 0
        %3250 = vmatprep.subr.bf16.mxu0 0
        %3251 = vmatpush1.bf16.msra.mxu0 0
        %3252 = vmatprep.subr.bf16.mxu0 0
        %3253 = vmatpush1.bf16.msra.mxu0 0
        %3254 = vmatprep.subr.bf16.mxu0 0
        %3255 = vmatpush1.bf16.msra.mxu0 0
        %3256 = vmatprep.subr.bf16.mxu0 0
        %3257 = vmatpush1.bf16.msra.mxu0 0
        %3258 = vmatprep.subr.bf16.mxu0 0
        %3259 = vmatpush1.bf16.msra.mxu0 0
        %3260 = vmatprep.subr.bf16.mxu0 0
        %3261 = vmatpush1.bf16.msra.mxu0 0
        %3262 = vmatprep.subr.bf16.mxu0 0
        %3263 = vmatpush1.bf16.msra.mxu0 0
        %3264 = vmatprep.subr.bf16.mxu0 0
        %3265 = vmatpush1.bf16.msra.mxu0 0
        %3266 = vmatprep.subr.bf16.mxu0 0
        %3267 = vmatpush1.bf16.msra.mxu0 0
        %3268 = vmatprep.subr.bf16.mxu0 0
        %3269 = vmatpush1.bf16.msra.mxu0 0
        %3270 = vmatprep.mubr.bf16.mxu0 0
        %3271 = vmatmul.mubr.bf16.gmra.mrb[0].mxu0 %v3233
        %v3272 = vpop.f32.mrb[0].mxu0
        %v3273 = vadd.f32 0.0, %v3272
        %v3274 = vpop.f32.mrb[0].mxu0
        %v3275 = vpop.f32.mrb[0].mxu0
        %v3276 = vpop.f32.mrb[0].mxu0
        %3277 = vdwg.mxu0
        %3279 = vrot.lane.b32.xlu0 %v2470, 96
        %v3280 = vpop.permute.xlu0 %3279
        %v3282 = vsel %vm1259, %v2934, 0
        %v3285 = vsel %vm1750, %v3280, 0
        %3287 = vmatprep.subr.bf16.mxu0 0
        %3288 = vmatpush1.bf16.msra.mxu0 %v3285
        %3289 = vmatprep.subr.bf16.mxu0 0
        %3290 = vmatpush1.bf16.msra.mxu0 0
        %3291 = vmatprep.subr.bf16.mxu0 0
        %3292 = vmatpush1.bf16.msra.mxu0 0
        %3293 = vmatprep.subr.bf16.mxu0 0
        %3294 = vmatpush1.bf16.msra.mxu0 0
        %3295 = vmatprep.subr.bf16.mxu0 0
        %3296 = vmatpush1.bf16.msra.mxu0 0
        %3297 = vmatprep.subr.bf16.mxu0 0
        %3298 = vmatpush1.bf16.msra.mxu0 0
        %3299 = vmatprep.subr.bf16.mxu0 0
        %3300 = vmatpush1.bf16.msra.mxu0 0
        %3301 = vmatprep.subr.bf16.mxu0 0
        %3302 = vmatpush1.bf16.msra.mxu0 0
        %3303 = vmatprep.subr.bf16.mxu0 0
        %3304 = vmatpush1.bf16.msra.mxu0 0
        %3305 = vmatprep.subr.bf16.mxu0 0
        %3306 = vmatpush1.bf16.msra.mxu0 0
        %3307 = vmatprep.subr.bf16.mxu0 0
        %3308 = vmatpush1.bf16.msra.mxu0 0
        %3309 = vmatprep.subr.bf16.mxu0 0
        %3310 = vmatpush1.bf16.msra.mxu0 0
        %3311 = vmatprep.subr.bf16.mxu0 0
        %3312 = vmatpush1.bf16.msra.mxu0 0
        %3313 = vmatprep.subr.bf16.mxu0 0
        %3314 = vmatpush1.bf16.msra.mxu0 0
        %3315 = vmatprep.subr.bf16.mxu0 0
        %3316 = vmatpush1.bf16.msra.mxu0 0
        %3317 = vmatprep.subr.bf16.mxu0 0
        %3318 = vmatpush1.bf16.msra.mxu0 0
        %3319 = vmatprep.mubr.bf16.mxu0 0
        %3320 = vmatmul.mubr.bf16.gmra.mrb[0].mxu0 %v3282
        %v3321 = vpop.f32.mrb[0].mxu0
        %v3322 = vadd.f32 0.0, %v3321
        %v3323 = vpop.f32.mrb[0].mxu0
        %v3324 = vpop.f32.mrb[0].mxu0
        %v3325 = vpop.f32.mrb[0].mxu0
        %3326 = vdwg.mxu0
        %3329 = vrot.lane.b32.xlu0 %v3077, 8
        %v3330 = vpop.permute.xlu0 %3329
        %3331 = vrot.lane.b32.xlu0 %v3126, 8
        %v3332 = vpop.permute.xlu0 %3331
        %3337 = vrot.lane.b32.xlu0 %v3175, 16
        %v3338 = vpop.permute.xlu0 %3337
        %3339 = vrot.lane.b32.xlu0 %v3224, 16
        %v3340 = vpop.permute.xlu0 %3339
        %3345 = vrot.lane.b32.xlu0 %v3273, 24
        %v3346 = vpop.permute.xlu0 %3345
        %3347 = vrot.lane.b32.xlu0 %v3322, 24
        %v3348 = vpop.permute.xlu0 %3347
        %v3351 = vsel %vm1259, %v2979, %v3330
        %v3352 = vsel %vm1259, %v3028, %v3332
        %v3353 = vsel %vm2156, %v3351, %v3338
        %v3354 = vsel %vm2156, %v3352, %v3340
        %v3355 = vsel %vm2159, %v3353, %v3346
        %v3356 = vsel %vm2159, %v3354, %v3348
        %v3357 = vld [vmem:[%s1052] sm:$0xf]
        %v3358 = vld [vmem:[%s1052 + $0x4] sm:$0xf]
        %v3359 = vld [vmem:[%s1052 + $0x8] sm:$0xf]
        %v3360 = vld [vmem:[%s1052 + $0xc] sm:$0xf]
        %v3361 = vld [vmem:[%s1055] sm:$0x1]
        %v3362 = vpack.c.bf16 %v3356, %v3355
        %v3364 = vlaneseq
        %v3365 = vshrl.u32 %v3364, 7
        %v3366 = vsub.s32 0, %v3365
        %v3367 = vrot.slane %v3361, %v3366
        %v3373 = vunpack.c.l.b16 %v3357
        %v3374 = vunpack.c.l.b16 %v3358
        %v3375 = vunpack.c.l.b16 %v3359
        %v3376 = vunpack.c.l.b16 %v3360
        %v3377 = vpack.c.b16 %v3374, %v3373
        %v3378 = vpack.c.b16 %v3376, %v3375
        %v3382 = vsel %vm1153, %v3362, 0
        %3384 = vmatprep.subr.bf16.mxu0 0
        %3385 = vmatpush1.bf16.msra.mxu0 %v3377
        %3386 = vmatprep.subr.bf16.mxu0 0
        %3387 = vmatpush1.bf16.msra.mxu0 %v3378
        %3388 = vmatprep.subr.bf16.mxu0 0
        %3389 = vmatpush1.bf16.msra.mxu0 0
        %3390 = vmatprep.subr.bf16.mxu0 0
        %3391 = vmatpush1.bf16.msra.mxu0 0
        %3392 = vmatprep.subr.bf16.mxu0 0
        %3393 = vmatpush1.bf16.msra.mxu0 0
        %3394 = vmatprep.subr.bf16.mxu0 0
        %3395 = vmatpush1.bf16.msra.mxu0 0
        %3396 = vmatprep.subr.bf16.mxu0 0
        %3397 = vmatpush1.bf16.msra.mxu0 0
        %3398 = vmatprep.subr.bf16.mxu0 0
        %3399 = vmatpush1.bf16.msra.mxu0 0
        %3400 = vmatprep.subr.bf16.mxu0 0
        %3401 = vmatpush1.bf16.msra.mxu0 0
        %3402 = vmatprep.subr.bf16.mxu0 0
        %3403 = vmatpush1.bf16.msra.mxu0 0
        %3404 = vmatprep.subr.bf16.mxu0 0
        %3405 = vmatpush1.bf16.msra.mxu0 0
        %3406 = vmatprep.subr.bf16.mxu0 0
        %3407 = vmatpush1.bf16.msra.mxu0 0
        %3408 = vmatprep.subr.bf16.mxu0 0
        %3409 = vmatpush1.bf16.msra.mxu0 0
        %3410 = vmatprep.subr.bf16.mxu0 0
        %3411 = vmatpush1.bf16.msra.mxu0 0
        %3412 = vmatprep.subr.bf16.mxu0 0
        %3413 = vmatpush1.bf16.msra.mxu0 0
        %3414 = vmatprep.subr.bf16.mxu0 0
        %3415 = vmatpush1.bf16.msra.mxu0 0
        %3416 = vmatprep.mubr.bf16.mxu0 0
        %3417 = vmatmul.mubr.bf16.gmra.mrb[0].mxu0 %v3382
        %v3418 = vpop.f32.mrb[0].mxu0
        %v3419 = vadd.f32 %v3367, %v3418
        %v3420 = vpop.f32.mrb[0].mxu0
        %v3421 = vpop.f32.mrb[0].mxu0
        %v3422 = vadd.f32 %v3367, %v3421
        %v3423 = vpop.f32.mrb[0].mxu0
        %3424 = vdwg.mxu0
        %v3425 = vadd.f32 %v2275, %v3419
        %v3426 = vadd.f32 %v2276, %v3422
        %v3427 = vld [vmem:[%s1058] sm:$0x1]
        %v3428 = vld [vmem:[%s1061] sm:$0x1]
        %v3429 = vsel %vm1153, %v3425, 0.0
        %3430 = vadd.xlane.f32.xlu0 %v3429
        %v3431 = vpop.xlane.xlu0 %3430
        %v3432 = vsel %vm1153, %v3426, 0.0
        %3433 = vadd.xlane.f32.xlu0 %v3432
        %v3434 = vpop.xlane.xlu0 %3433
        %v3435 = vmul.f32 %v3431, %v2240
        %v3436 = vmul.f32 %v3434, %v2240
        %v3437 = vsub.f32 %v3425, %v3435
        %v3438 = vsub.f32 %v3426, %v3436
        %v3439 = vmul.f32 %v3437, %v3437
        %v3440 = vmul.f32 %v3438, %v3438
        %v3441 = vsel %vm1153, %v3439, 0.0
        %3442 = vadd.xlane.f32.xlu0 %v3441
        %v3443 = vpop.xlane.xlu0 %3442
        %v3444 = vsel %vm1153, %v3440, 0.0
        %3445 = vadd.xlane.f32.xlu0 %v3444
        %v3446 = vpop.xlane.xlu0 %3445
        %v3447 = vmul.f32 %v3443, %v2240
        %v3448 = vmul.f32 %v3446, %v2240
        %v3449 = vadd.f32 %v3447, 1e-05
        %v3450 = vadd.f32 %v3448, 1e-05
        %v3451 = vrsqrt.pop %v3449
        %v3452 = vrsqrt.pop %v3450
        %v3453 = vmul.f32 %v3437, %v3451
        %v3454 = vmul.f32 %v3438, %v3452
        %v3456 = vlaneseq
        %v3457 = vshrl.u32 %v3456, 7
        %v3458 = vsub.s32 0, %v3457
        %v3459 = vrot.slane %v3427, %v3458
        %v3461 = vmul.f32 %v3453, %v3459
        %v3462 = vmul.f32 %v3454, %v3459
        %v3464 = vlaneseq
        %v3465 = vshrl.u32 %v3464, 7
        %v3466 = vsub.s32 0, %v3465
        %v3467 = vrot.slane %v3428, %v3466
        %v3469 = vadd.f32 %v3461, %v3467
        %v3470 = vadd.f32 %v3462, %v3467
        %v3471 = vpack.c.bf16 %v3470, %v3469
        %v3472 = vld [vmem:[%s1066] sm:$0xff]
        %v3473 = vld [vmem:[%s1066 + $0x8] sm:$0xff]
        %v3474 = vld [vmem:[%s1066 + $0x40] sm:$0xff]
        %v3475 = vld [vmem:[%s1066 + $0x48] sm:$0xff]
        %v3476 = vld [vmem:[%s1066 + $0x80] sm:$0xff]
        %v3477 = vld [vmem:[%s1066 + $0x88] sm:$0xff]
        %v3478 = vld [vmem:[%s1066 + $0xc0] sm:$0xff]
        %v3479 = vld [vmem:[%s1066 + $0xc8] sm:$0xff]
        %v3480 = vld [vmem:[%s1070] sm:$0xf]
        %v3482 = vlaneseq
        %v3483 = vshrl.u32 %v3482, 7
        %v3484 = vsub.s32 0, %v3483
        %v3485 = vrot.slane %v3480, %v3484
        %v3486 = vlaneseq
        %v3487 = vshrl.u32 %v3486, 7
        %v3488 = vsub.s32 1, %v3487
        %v3489 = vrot.slane %v3480, %v3488
        %v3490 = vlaneseq
        %v3491 = vshrl.u32 %v3490, 7
        %v3492 = vsub.s32 2, %v3491
        %v3493 = vrot.slane %v3480, %v3492
        %v3494 = vlaneseq
        %v3495 = vshrl.u32 %v3494, 7
        %v3496 = vsub.s32 3, %v3495
        %v3497 = vrot.slane %v3480, %v3496
        %v3510 = vunpack.c.l.b16 %v3472
        %v3511 = vunpack.c.h.b16 %v3472
        %v3512 = vunpack.c.l.b16 %v3473
        %v3513 = vunpack.c.h.b16 %v3473
        %v3514 = vunpack.c.l.b16 %v3474
        %v3515 = vunpack.c.h.b16 %v3474
        %v3516 = vunpack.c.l.b16 %v3475
        %v3517 = vunpack.c.h.b16 %v3475
        %v3518 = vunpack.c.l.b16 %v3476
        %v3519 = vunpack.c.h.b16 %v3476
        %v3520 = vunpack.c.l.b16 %v3477
        %v3521 = vunpack.c.h.b16 %v3477
        %v3522 = vunpack.c.l.b16 %v3478
        %v3523 = vunpack.c.h.b16 %v3478
        %v3524 = vunpack.c.l.b16 %v3479
        %v3525 = vunpack.c.h.b16 %v3479
        %v3526 = vpack.c.b16 %v3514, %v3510
        %v3527 = vpack.c.b16 %v3515, %v3511
        %v3528 = vpack.c.b16 %v3516, %v3512
        %v3529 = vpack.c.b16 %v3517, %v3513
        %v3530 = vpack.c.b16 %v3522, %v3518
        %v3531 = vpack.c.b16 %v3523, %v3519
        %v3532 = vpack.c.b16 %v3524, %v3520
        %v3533 = vpack.c.b16 %v3525, %v3521
        %v3543 = vsel %vm1153, %v3471, 0
        %3545 = vmatprep.subr.bf16.mxu0 %v3527
        %3546 = vmatpush1.bf16.msra.mxu0 %v3526
        %3547 = vmatprep.subr.bf16.mxu0 %v3531
        %3548 = vmatpush1.bf16.msra.mxu0 %v3530
        %3549 = vmatprep.subr.bf16.mxu0 0
        %3550 = vmatpush1.bf16.msra.mxu0 0
        %3551 = vmatprep.subr.bf16.mxu0 0
        %3552 = vmatpush1.bf16.msra.mxu0 0
        %3553 = vmatprep.subr.bf16.mxu0 0
        %3554 = vmatpush1.bf16.msra.mxu0 0
        %3555 = vmatprep.subr.bf16.mxu0 0
        %3556 = vmatpush1.bf16.msra.mxu0 0
        %3557 = vmatprep.subr.bf16.mxu0 0
        %3558 = vmatpush1.bf16.msra.mxu0 0
        %3559 = vmatprep.subr.bf16.mxu0 0
        %3560 = vmatpush1.bf16.msra.mxu0 0
        %3561 = vmatprep.subr.bf16.mxu0 0
        %3562 = vmatpush1.bf16.msra.mxu0 0
        %3563 = vmatprep.subr.bf16.mxu0 0
        %3564 = vmatpush1.bf16.msra.mxu0 0
        %3565 = vmatprep.subr.bf16.mxu0 0
        %3566 = vmatpush1.bf16.msra.mxu0 0
        %3567 = vmatprep.subr.bf16.mxu0 0
        %3568 = vmatpush1.bf16.msra.mxu0 0
        %3569 = vmatprep.subr.bf16.mxu0 0
        %3570 = vmatpush1.bf16.msra.mxu0 0
        %3571 = vmatprep.subr.bf16.mxu0 0
        %3572 = vmatpush1.bf16.msra.mxu0 0
        %3573 = vmatprep.subr.bf16.mxu0 0
        %3574 = vmatpush1.bf16.msra.mxu0 0
        %3575 = vmatprep.subr.bf16.mxu0 0
        %3576 = vmatpush1.bf16.msra.mxu0 0
        %3577 = vmatprep.mubr.bf16.mxu0 0
        %3578 = vmatmul.mubr.bf16.gmra.mrb[0].mxu0 %v3543
        %v3579 = vpop.f32.mrb[0].mxu0
        %v3580 = vadd.f32 %v3485, %v3579
        %v3581 = vpop.f32.mrb[0].mxu0
        %v3582 = vadd.f32 %v3489, %v3581
        %v3583 = vpop.f32.mrb[0].mxu0
        %v3584 = vadd.f32 %v3485, %v3583
        %v3585 = vpop.f32.mrb[0].mxu0
        %v3586 = vadd.f32 %v3489, %v3585
        %3587 = vdwg.mxu0
        %3588 = vmatprep.subr.bf16.mxu0 %v3529
        %3589 = vmatpush1.bf16.msra.mxu0 %v3528
        %3590 = vmatprep.subr.bf16.mxu0 %v3533
        %3591 = vmatpush1.bf16.msra.mxu0 %v3532
        %3592 = vmatprep.subr.bf16.mxu0 0
        %3593 = vmatpush1.bf16.msra.mxu0 0
        %3594 = vmatprep.subr.bf16.mxu0 0
        %3595 = vmatpush1.bf16.msra.mxu0 0
        %3596 = vmatprep.subr.bf16.mxu0 0
        %3597 = vmatpush1.bf16.msra.mxu0 0
        %3598 = vmatprep.subr.bf16.mxu0 0
        %3599 = vmatpush1.bf16.msra.mxu0 0
        %3600 = vmatprep.subr.bf16.mxu0 0
        %3601 = vmatpush1.bf16.msra.mxu0 0
        %3602 = vmatprep.subr.bf16.mxu0 0
        %3603 = vmatpush1.bf16.msra.mxu0 0
        %3604 = vmatprep.subr.bf16.mxu0 0
        %3605 = vmatpush1.bf16.msra.mxu0 0
        %3606 = vmatprep.subr.bf16.mxu0 0
        %3607 = vmatpush1.bf16.msra.mxu0 0
        %3608 = vmatprep.subr.bf16.mxu0 0
        %3609 = vmatpush1.bf16.msra.mxu0 0
        %3610 = vmatprep.subr.bf16.mxu0 0
        %3611 = vmatpush1.bf16.msra.mxu0 0
        %3612 = vmatprep.subr.bf16.mxu0 0
        %3613 = vmatpush1.bf16.msra.mxu0 0
        %3614 = vmatprep.subr.bf16.mxu0 0
        %3615 = vmatpush1.bf16.msra.mxu0 0
        %3616 = vmatprep.subr.bf16.mxu0 0
        %3617 = vmatpush1.bf16.msra.mxu0 0
        %3618 = vmatprep.subr.bf16.mxu0 0
        %3619 = vmatpush1.bf16.msra.mxu0 0
        %3620 = vmatprep.mubr.bf16.mxu0 0
        %3621 = vmatmul.mubr.bf16.gmra.mrb[0].mxu0 %v3543
        %v3622 = vpop.f32.mrb[0].mxu0
        %v3623 = vadd.f32 %v3493, %v3622
        %v3624 = vpop.f32.mrb[0].mxu0
        %v3625 = vadd.f32 %v3497, %v3624
        %v3626 = vpop.f32.mrb[0].mxu0
        %v3627 = vadd.f32 %v3493, %v3626
        %v3628 = vpop.f32.mrb[0].mxu0
        %v3629 = vadd.f32 %v3497, %v3628
        %3630 = vdwg.mxu0
        %v3631 = vmax.f32 %v3580, 0.0
        %v3632 = vmax.f32 %v3582, 0.0
        %v3633 = vmax.f32 %v3623, 0.0
        %v3634 = vmax.f32 %v3625, 0.0
        %v3635 = vmax.f32 %v3584, 0.0
        %v3636 = vmax.f32 %v3586, 0.0
        %v3637 = vmax.f32 %v3627, 0.0
        %v3638 = vmax.f32 %v3629, 0.0
        %v3639 = vpack.c.bf16 %v3635, %v3631
        %v3640 = vpack.c.bf16 %v3636, %v3632
        %v3641 = vpack.c.bf16 %v3637, %v3633
        %v3642 = vpack.c.bf16 %v3638, %v3634
        %v3643 = vld [vmem:[%s1075] sm:$0xf]
        %v3644 = vld [vmem:[%s1075 + $0x4] sm:$0xf]
        %v3645 = vld [vmem:[%s1075 + $0x8] sm:$0xf]
        %v3646 = vld [vmem:[%s1075 + $0xc] sm:$0xf]
        %v3647 = vld [vmem:[%s1075 + $0x10] sm:$0xf]
        %v3648 = vld [vmem:[%s1075 + $0x14] sm:$0xf]
        %v3649 = vld [vmem:[%s1075 + $0x18] sm:$0xf]
        %v3650 = vld [vmem:[%s1075 + $0x1c] sm:$0xf]
        %v3651 = vld [vmem:[%s1075 + $0x20] sm:$0xf]
        %v3652 = vld [vmem:[%s1075 + $0x24] sm:$0xf]
        %v3653 = vld [vmem:[%s1075 + $0x28] sm:$0xf]
        %v3654 = vld [vmem:[%s1075 + $0x2c] sm:$0xf]
        %v3655 = vld [vmem:[%s1075 + $0x30] sm:$0xf]
        %v3656 = vld [vmem:[%s1075 + $0x34] sm:$0xf]
        %v3657 = vld [vmem:[%s1075 + $0x38] sm:$0xf]
        %v3658 = vld [vmem:[%s1075 + $0x3c] sm:$0xf]
        %v3659 = vld [vmem:[%s1075 + $0x40] sm:$0xf]
        %v3660 = vld [vmem:[%s1075 + $0x44] sm:$0xf]
        %v3661 = vld [vmem:[%s1075 + $0x48] sm:$0xf]
        %v3662 = vld [vmem:[%s1075 + $0x4c] sm:$0xf]
        %v3663 = vld [vmem:[%s1075 + $0x50] sm:$0xf]
        %v3664 = vld [vmem:[%s1075 + $0x54] sm:$0xf]
        %v3665 = vld [vmem:[%s1075 + $0x58] sm:$0xf]
        %v3666 = vld [vmem:[%s1075 + $0x5c] sm:$0xf]
        %v3667 = vld [vmem:[%s1075 + $0x60] sm:$0xf]
        %v3668 = vld [vmem:[%s1075 + $0x64] sm:$0xf]
        %v3669 = vld [vmem:[%s1075 + $0x68] sm:$0xf]
        %v3670 = vld [vmem:[%s1075 + $0x6c] sm:$0xf]
        %v3671 = vld [vmem:[%s1075 + $0x70] sm:$0xf]
        %v3672 = vld [vmem:[%s1075 + $0x74] sm:$0xf]
        %v3673 = vld [vmem:[%s1075 + $0x78] sm:$0xf]
        %v3674 = vld [vmem:[%s1075 + $0x7c] sm:$0xf]
        %v3675 = vld [vmem:[%s1075 + $0x80] sm:$0xf]
        %v3676 = vld [vmem:[%s1075 + $0x84] sm:$0xf]
        %v3677 = vld [vmem:[%s1075 + $0x88] sm:$0xf]
        %v3678 = vld [vmem:[%s1075 + $0x8c] sm:$0xf]
        %v3679 = vld [vmem:[%s1075 + $0x90] sm:$0xf]
        %v3680 = vld [vmem:[%s1075 + $0x94] sm:$0xf]
        %v3681 = vld [vmem:[%s1075 + $0x98] sm:$0xf]
        %v3682 = vld [vmem:[%s1075 + $0x9c] sm:$0xf]
        %v3683 = vld [vmem:[%s1075 + $0xa0] sm:$0xf]
        %v3684 = vld [vmem:[%s1075 + $0xa4] sm:$0xf]
        %v3685 = vld [vmem:[%s1075 + $0xa8] sm:$0xf]
        %v3686 = vld [vmem:[%s1075 + $0xac] sm:$0xf]
        %v3687 = vld [vmem:[%s1075 + $0xb0] sm:$0xf]
        %v3688 = vld [vmem:[%s1075 + $0xb4] sm:$0xf]
        %v3689 = vld [vmem:[%s1075 + $0xb8] sm:$0xf]
        %v3690 = vld [vmem:[%s1075 + $0xbc] sm:$0xf]
        %v3691 = vld [vmem:[%s1075 + $0xc0] sm:$0xf]
        %v3692 = vld [vmem:[%s1075 + $0xc4] sm:$0xf]
        %v3693 = vld [vmem:[%s1075 + $0xc8] sm:$0xf]
        %v3694 = vld [vmem:[%s1075 + $0xcc] sm:$0xf]
        %v3695 = vld [vmem:[%s1075 + $0xd0] sm:$0xf]
        %v3696 = vld [vmem:[%s1075 + $0xd4] sm:$0xf]
        %v3697 = vld [vmem:[%s1075 + $0xd8] sm:$0xf]
        %v3698 = vld [vmem:[%s1075 + $0xdc] sm:$0xf]
        %v3699 = vld [vmem:[%s1075 + $0xe0] sm:$0xf]
        %v3700 = vld [vmem:[%s1075 + $0xe4] sm:$0xf]
        %v3701 = vld [vmem:[%s1075 + $0xe8] sm:$0xf]
        %v3702 = vld [vmem:[%s1075 + $0xec] sm:$0xf]
        %v3703 = vld [vmem:[%s1075 + $0xf0] sm:$0xf]
        %v3704 = vld [vmem:[%s1075 + $0xf4] sm:$0xf]
        %v3705 = vld [vmem:[%s1075 + $0xf8] sm:$0xf]
        %v3706 = vld [vmem:[%s1075 + $0xfc] sm:$0xf]
        %v3707 = vld [vmem:[%s1066 + $0x10] sm:$0xff]
        %v3708 = vld [vmem:[%s1066 + $0x18] sm:$0xff]
        %v3709 = vld [vmem:[%s1066 + $0x50] sm:$0xff]
        %v3710 = vld [vmem:[%s1066 + $0x58] sm:$0xff]
        %v3711 = vld [vmem:[%s1066 + $0x90] sm:$0xff]
        %v3712 = vld [vmem:[%s1066 + $0x98] sm:$0xff]
        %v3713 = vld [vmem:[%s1066 + $0xd0] sm:$0xff]
        %v3714 = vld [vmem:[%s1066 + $0xd8] sm:$0xff]
        %v3715 = vld [vmem:[%s1070 + $0x4] sm:$0xf]
        %v3717 = vlaneseq
        %v3718 = vshrl.u32 %v3717, 7
        %v3719 = vsub.s32 0, %v3718
        %v3720 = vrot.slane %v3715, %v3719
        %v3721 = vlaneseq
        %v3722 = vshrl.u32 %v3721, 7
        %v3723 = vsub.s32 1, %v3722
        %v3724 = vrot.slane %v3715, %v3723
        %v3725 = vlaneseq
        %v3726 = vshrl.u32 %v3725, 7
        %v3727 = vsub.s32 2, %v3726
        %v3728 = vrot.slane %v3715, %v3727
        %v3729 = vlaneseq
        %v3730 = vshrl.u32 %v3729, 7
        %v3731 = vsub.s32 3, %v3730
        %v3732 = vrot.slane %v3715, %v3731
        %v3745 = vunpack.c.l.b16 %v3707
        %v3746 = vunpack.c.h.b16 %v3707
        %v3747 = vunpack.c.l.b16 %v3708
        %v3748 = vunpack.c.h.b16 %v3708
        %v3749 = vunpack.c.l.b16 %v3709
        %v3750 = vunpack.c.h.b16 %v3709
        %v3751 = vunpack.c.l.b16 %v3710
        %v3752 = vunpack.c.h.b16 %v3710
        %v3753 = vunpack.c.l.b16 %v3711
        %v3754 = vunpack.c.h.b16 %v3711
        %v3755 = vunpack.c.l.b16 %v3712
        %v3756 = vunpack.c.h.b16 %v3712
        %v3757 = vunpack.c.l.b16 %v3713
        %v3758 = vunpack.c.h.b16 %v3713
        %v3759 = vunpack.c.l.b16 %v3714
        %v3760 = vunpack.c.h.b16 %v3714
        %v3761 = vpack.c.b16 %v3749, %v3745
        %v3762 = vpack.c.b16 %v3750, %v3746
        %v3763 = vpack.c.b16 %v3751, %v3747
        %v3764 = vpack.c.b16 %v3752, %v3748
        %v3765 = vpack.c.b16 %v3757, %v3753
        %v3766 = vpack.c.b16 %v3758, %v3754
        %v3767 = vpack.c.b16 %v3759, %v3755
        %v3768 = vpack.c.b16 %v3760, %v3756
        %3777 = vmatprep.subr.bf16.mxu0 %v3762
        %3778 = vmatpush1.bf16.msra.mxu0 %v3761
        %3779 = vmatprep.subr.bf16.mxu0 %v3766
        %3780 = vmatpush1.bf16.msra.mxu0 %v3765
        %3781 = vmatprep.subr.bf16.mxu0 0
        %3782 = vmatpush1.bf16.msra.mxu0 0
        %3783 = vmatprep.subr.bf16.mxu0 0
        %3784 = vmatpush1.bf16.msra.mxu0 0
        %3785 = vmatprep.subr.bf16.mxu0 0
        %3786 = vmatpush1.bf16.msra.mxu0 0
        %3787 = vmatprep.subr.bf16.mxu0 0
        %3788 = vmatpush1.bf16.msra.mxu0 0
        %3789 = vmatprep.subr.bf16.mxu0 0
        %3790 = vmatpush1.bf16.msra.mxu0 0
        %3791 = vmatprep.subr.bf16.mxu0 0
        %3792 = vmatpush1.bf16.msra.mxu0 0
        %3793 = vmatprep.subr.bf16.mxu0 0
        %3794 = vmatpush1.bf16.msra.mxu0 0
        %3795 = vmatprep.subr.bf16.mxu0 0
        %3796 = vmatpush1.bf16.msra.mxu0 0
        %3797 = vmatprep.subr.bf16.mxu0 0
        %3798 = vmatpush1.bf16.msra.mxu0 0
        %3799 = vmatprep.subr.bf16.mxu0 0
        %3800 = vmatpush1.bf16.msra.mxu0 0
        %3801 = vmatprep.subr.bf16.mxu0 0
        %3802 = vmatpush1.bf16.msra.mxu0 0
        %3803 = vmatprep.subr.bf16.mxu0 0
        %3804 = vmatpush1.bf16.msra.mxu0 0
        %3805 = vmatprep.subr.bf16.mxu0 0
        %3806 = vmatpush1.bf16.msra.mxu0 0
        %3807 = vmatprep.subr.bf16.mxu0 0
        %3808 = vmatpush1.bf16.msra.mxu0 0
        %3809 = vmatprep.mubr.bf16.mxu0 0
        %3810 = vmatmul.mubr.bf16.gmra.mrb[0].mxu0 %v3543
        %v3811 = vpop.f32.mrb[0].mxu0
        %v3812 = vadd.f32 %v3720, %v3811
        %v3813 = vpop.f32.mrb[0].mxu0
        %v3814 = vadd.f32 %v3724, %v3813
        %v3815 = vpop.f32.mrb[0].mxu0
        %v3816 = vadd.f32 %v3720, %v3815
        %v3817 = vpop.f32.mrb[0].mxu0
        %v3818 = vadd.f32 %v3724, %v3817
        %3819 = vdwg.mxu0
        %3820 = vmatprep.subr.bf16.mxu0 %v3764
        %3821 = vmatpush1.bf16.msra.mxu0 %v3763
        %3822 = vmatprep.subr.bf16.mxu0 %v3768
        %3823 = vmatpush1.bf16.msra.mxu0 %v3767
        %3824 = vmatprep.subr.bf16.mxu0 0
        %3825 = vmatpush1.bf16.msra.mxu0 0
        %3826 = vmatprep.subr.bf16.mxu0 0
        %3827 = vmatpush1.bf16.msra.mxu0 0
        %3828 = vmatprep.subr.bf16.mxu0 0
        %3829 = vmatpush1.bf16.msra.mxu0 0
        %3830 = vmatprep.subr.bf16.mxu0 0
        %3831 = vmatpush1.bf16.msra.mxu0 0
        %3832 = vmatprep.subr.bf16.mxu0 0
        %3833 = vmatpush1.bf16.msra.mxu0 0
        %3834 = vmatprep.subr.bf16.mxu0 0
        %3835 = vmatpush1.bf16.msra.mxu0 0
        %3836 = vmatprep.subr.bf16.mxu0 0
        %3837 = vmatpush1.bf16.msra.mxu0 0
        %3838 = vmatprep.subr.bf16.mxu0 0
        %3839 = vmatpush1.bf16.msra.mxu0 0
        %3840 = vmatprep.subr.bf16.mxu0 0
        %3841 = vmatpush1.bf16.msra.mxu0 0
        %3842 = vmatprep.subr.bf16.mxu0 0
        %3843 = vmatpush1.bf16.msra.mxu0 0
        %3844 = vmatprep.subr.bf16.mxu0 0
        %3845 = vmatpush1.bf16.msra.mxu0 0
        %3846 = vmatprep.subr.bf16.mxu0 0
        %3847 = vmatpush1.bf16.msra.mxu0 0
        %3848 = vmatprep.subr.bf16.mxu0 0
        %3849 = vmatpush1.bf16.msra.mxu0 0
        %3850 = vmatprep.subr.bf16.mxu0 0
        %3851 = vmatpush1.bf16.msra.mxu0 0
        %3852 = vmatprep.mubr.bf16.mxu0 0
        %3853 = vmatmul.mubr.bf16.gmra.mrb[0].mxu0 %v3543
        %v3854 = vpop.f32.mrb[0].mxu0
        %v3855 = vadd.f32 %v3728, %v3854
        %v3856 = vpop.f32.mrb[0].mxu0
        %v3857 = vadd.f32 %v3732, %v3856
        %v3858 = vpop.f32.mrb[0].mxu0
        %v3859 = vadd.f32 %v3728, %v3858
        %v3860 = vpop.f32.mrb[0].mxu0
        %v3861 = vadd.f32 %v3732, %v3860
        %3862 = vdwg.mxu0
        %v3863 = vmax.f32 %v3812, 0.0
        %v3864 = vmax.f32 %v3814, 0.0
        %v3865 = vmax.f32 %v3855, 0.0
        %v3866 = vmax.f32 %v3857, 0.0
        %v3867 = vmax.f32 %v3816, 0.0
        %v3868 = vmax.f32 %v3818, 0.0
        %v3869 = vmax.f32 %v3859, 0.0
        %v3870 = vmax.f32 %v3861, 0.0
        %v3871 = vpack.c.bf16 %v3867, %v3863
        %v3872 = vpack.c.bf16 %v3868, %v3864
        %v3873 = vpack.c.bf16 %v3869, %v3865
        %v3874 = vpack.c.bf16 %v3870, %v3866
        %v3875 = vld [vmem:[%s1075 + $0x100] sm:$0xf]
        %v3876 = vld [vmem:[%s1075 + $0x104] sm:$0xf]
        %v3877 = vld [vmem:[%s1075 + $0x108] sm:$0xf]
        %v3878 = vld [vmem:[%s1075 + $0x10c] sm:$0xf]
        %v3879 = vld [vmem:[%s1075 + $0x110] sm:$0xf]
        %v3880 = vld [vmem:[%s1075 + $0x114] sm:$0xf]
        %v3881 = vld [vmem:[%s1075 + $0x118] sm:$0xf]
        %v3882 = vld [vmem:[%s1075 + $0x11c] sm:$0xf]
        %v3883 = vld [vmem:[%s1075 + $0x120] sm:$0xf]
        %v3884 = vld [vmem:[%s1075 + $0x124] sm:$0xf]
        %v3885 = vld [vmem:[%s1075 + $0x128] sm:$0xf]
        %v3886 = vld [vmem:[%s1075 + $0x12c] sm:$0xf]
        %v3887 = vld [vmem:[%s1075 + $0x130] sm:$0xf]
        %v3888 = vld [vmem:[%s1075 + $0x134] sm:$0xf]
        %v3889 = vld [vmem:[%s1075 + $0x138] sm:$0xf]
        %v3890 = vld [vmem:[%s1075 + $0x13c] sm:$0xf]
        %v3891 = vld [vmem:[%s1075 + $0x140] sm:$0xf]
        %v3892 = vld [vmem:[%s1075 + $0x144] sm:$0xf]
        %v3893 = vld [vmem:[%s1075 + $0x148] sm:$0xf]
        %v3894 = vld [vmem:[%s1075 + $0x14c] sm:$0xf]
        %v3895 = vld [vmem:[%s1075 + $0x150] sm:$0xf]
        %v3896 = vld [vmem:[%s1075 + $0x154] sm:$0xf]
        %v3897 = vld [vmem:[%s1075 + $0x158] sm:$0xf]
        %v3898 = vld [vmem:[%s1075 + $0x15c] sm:$0xf]
        %v3899 = vld [vmem:[%s1075 + $0x160] sm:$0xf]
        %v3900 = vld [vmem:[%s1075 + $0x164] sm:$0xf]
        %v3901 = vld [vmem:[%s1075 + $0x168] sm:$0xf]
        %v3902 = vld [vmem:[%s1075 + $0x16c] sm:$0xf]
        %v3903 = vld [vmem:[%s1075 + $0x170] sm:$0xf]
        %v3904 = vld [vmem:[%s1075 + $0x174] sm:$0xf]
        %v3905 = vld [vmem:[%s1075 + $0x178] sm:$0xf]
        %v3906 = vld [vmem:[%s1075 + $0x17c] sm:$0xf]
        %v3907 = vld [vmem:[%s1075 + $0x180] sm:$0xf]
        %v3908 = vld [vmem:[%s1075 + $0x184] sm:$0xf]
        %v3909 = vld [vmem:[%s1075 + $0x188] sm:$0xf]
        %v3910 = vld [vmem:[%s1075 + $0x18c] sm:$0xf]
        %v3911 = vld [vmem:[%s1075 + $0x190] sm:$0xf]
        %v3912 = vld [vmem:[%s1075 + $0x194] sm:$0xf]
        %v3913 = vld [vmem:[%s1075 + $0x198] sm:$0xf]
        %v3914 = vld [vmem:[%s1075 + $0x19c] sm:$0xf]
        %v3915 = vld [vmem:[%s1075 + $0x1a0] sm:$0xf]
        %v3916 = vld [vmem:[%s1075 + $0x1a4] sm:$0xf]
        %v3917 = vld [vmem:[%s1075 + $0x1a8] sm:$0xf]
        %v3918 = vld [vmem:[%s1075 + $0x1ac] sm:$0xf]
        %v3919 = vld [vmem:[%s1075 + $0x1b0] sm:$0xf]
        %v3920 = vld [vmem:[%s1075 + $0x1b4] sm:$0xf]
        %v3921 = vld [vmem:[%s1075 + $0x1b8] sm:$0xf]
        %v3922 = vld [vmem:[%s1075 + $0x1bc] sm:$0xf]
        %v3923 = vld [vmem:[%s1075 + $0x1c0] sm:$0xf]
        %v3924 = vld [vmem:[%s1075 + $0x1c4] sm:$0xf]
        %v3925 = vld [vmem:[%s1075 + $0x1c8] sm:$0xf]
        %v3926 = vld [vmem:[%s1075 + $0x1cc] sm:$0xf]
        %v3927 = vld [vmem:[%s1075 + $0x1d0] sm:$0xf]
        %v3928 = vld [vmem:[%s1075 + $0x1d4] sm:$0xf]
        %v3929 = vld [vmem:[%s1075 + $0x1d8] sm:$0xf]
        %v3930 = vld [vmem:[%s1075 + $0x1dc] sm:$0xf]
        %v3931 = vld [vmem:[%s1075 + $0x1e0] sm:$0xf]
        %v3932 = vld [vmem:[%s1075 + $0x1e4] sm:$0xf]
        %v3933 = vld [vmem:[%s1075 + $0x1e8] sm:$0xf]
        %v3934 = vld [vmem:[%s1075 + $0x1ec] sm:$0xf]
        %v3935 = vld [vmem:[%s1075 + $0x1f0] sm:$0xf]
        %v3936 = vld [vmem:[%s1075 + $0x1f4] sm:$0xf]
        %v3937 = vld [vmem:[%s1075 + $0x1f8] sm:$0xf]
        %v3938 = vld [vmem:[%s1075 + $0x1fc] sm:$0xf]
        %v4003 = vunpack.c.l.b16 %v3875
        %v4004 = vunpack.c.l.b16 %v3876
        %v4005 = vunpack.c.l.b16 %v3877
        %v4006 = vunpack.c.l.b16 %v3878
        %v4007 = vunpack.c.l.b16 %v3879
        %v4008 = vunpack.c.l.b16 %v3880
        %v4009 = vunpack.c.l.b16 %v3881
        %v4010 = vunpack.c.l.b16 %v3882
        %v4011 = vunpack.c.l.b16 %v3883
        %v4012 = vunpack.c.l.b16 %v3884
        %v4013 = vunpack.c.l.b16 %v3885
        %v4014 = vunpack.c.l.b16 %v3886
        %v4015 = vunpack.c.l.b16 %v3887
        %v4016 = vunpack.c.l.b16 %v3888
        %v4017 = vunpack.c.l.b16 %v3889
        %v4018 = vunpack.c.l.b16 %v3890
        %v4019 = vunpack.c.l.b16 %v3891
        %v4020 = vunpack.c.l.b16 %v3892
        %v4021 = vunpack.c.l.b16 %v3893
        %v4022 = vunpack.c.l.b16 %v3894
        %v4023 = vunpack.c.l.b16 %v3895
        %v4024 = vunpack.c.l.b16 %v3896
        %v4025 = vunpack.c.l.b16 %v3897
        %v4026 = vunpack.c.l.b16 %v3898
        %v4027 = vunpack.c.l.b16 %v3899
        %v4028 = vunpack.c.l.b16 %v3900
        %v4029 = vunpack.c.l.b16 %v3901
        %v4030 = vunpack.c.l.b16 %v3902
        %v4031 = vunpack.c.l.b16 %v3903
        %v4032 = vunpack.c.l.b16 %v3904
        %v4033 = vunpack.c.l.b16 %v3905
        %v4034 = vunpack.c.l.b16 %v3906
        %v4035 = vunpack.c.l.b16 %v3907
        %v4036 = vunpack.c.l.b16 %v3908
        %v4037 = vunpack.c.l.b16 %v3909
        %v4038 = vunpack.c.l.b16 %v3910
        %v4039 = vunpack.c.l.b16 %v3911
        %v4040 = vunpack.c.l.b16 %v3912
        %v4041 = vunpack.c.l.b16 %v3913
        %v4042 = vunpack.c.l.b16 %v3914
        %v4043 = vunpack.c.l.b16 %v3915
        %v4044 = vunpack.c.l.b16 %v3916
        %v4045 = vunpack.c.l.b16 %v3917
        %v4046 = vunpack.c.l.b16 %v3918
        %v4047 = vunpack.c.l.b16 %v3919
        %v4048 = vunpack.c.l.b16 %v3920
        %v4049 = vunpack.c.l.b16 %v3921
        %v4050 = vunpack.c.l.b16 %v3922
        %v4051 = vunpack.c.l.b16 %v3923
        %v4052 = vunpack.c.l.b16 %v3924
        %v4053 = vunpack.c.l.b16 %v3925
        %v4054 = vunpack.c.l.b16 %v3926
        %v4055 = vunpack.c.l.b16 %v3927
        %v4056 = vunpack.c.l.b16 %v3928
        %v4057 = vunpack.c.l.b16 %v3929
        %v4058 = vunpack.c.l.b16 %v3930
        %v4059 = vunpack.c.l.b16 %v3931
        %v4060 = vunpack.c.l.b16 %v3932
        %v4061 = vunpack.c.l.b16 %v3933
        %v4062 = vunpack.c.l.b16 %v3934
        %v4063 = vunpack.c.l.b16 %v3935
        %v4064 = vunpack.c.l.b16 %v3936
        %v4065 = vunpack.c.l.b16 %v3937
        %v4066 = vunpack.c.l.b16 %v3938
        %v4067 = vpack.c.b16 %v4004, %v4003
        %v4068 = vpack.c.b16 %v4006, %v4005
        %v4069 = vpack.c.b16 %v4008, %v4007
        %v4070 = vpack.c.b16 %v4010, %v4009
        %v4071 = vpack.c.b16 %v4012, %v4011
        %v4072 = vpack.c.b16 %v4014, %v4013
        %v4073 = vpack.c.b16 %v4016, %v4015
        %v4074 = vpack.c.b16 %v4018, %v4017
        %v4075 = vpack.c.b16 %v4020, %v4019
        %v4076 = vpack.c.b16 %v4022, %v4021
        %v4077 = vpack.c.b16 %v4024, %v4023
        %v4078 = vpack.c.b16 %v4026, %v4025
        %v4079 = vpack.c.b16 %v4028, %v4027
        %v4080 = vpack.c.b16 %v4030, %v4029
        %v4081 = vpack.c.b16 %v4032, %v4031
        %v4082 = vpack.c.b16 %v4034, %v4033
        %v4083 = vpack.c.b16 %v4036, %v4035
        %v4084 = vpack.c.b16 %v4038, %v4037
        %v4085 = vpack.c.b16 %v4040, %v4039
        %v4086 = vpack.c.b16 %v4042, %v4041
        %v4087 = vpack.c.b16 %v4044, %v4043
        %v4088 = vpack.c.b16 %v4046, %v4045
        %v4089 = vpack.c.b16 %v4048, %v4047
        %v4090 = vpack.c.b16 %v4050, %v4049
        %v4091 = vpack.c.b16 %v4052, %v4051
        %v4092 = vpack.c.b16 %v4054, %v4053
        %v4093 = vpack.c.b16 %v4056, %v4055
        %v4094 = vpack.c.b16 %v4058, %v4057
        %v4095 = vpack.c.b16 %v4060, %v4059
        %v4096 = vpack.c.b16 %v4062, %v4061
        %v4097 = vpack.c.b16 %v4064, %v4063
        %v4098 = vpack.c.b16 %v4066, %v4065
        %4131 = vmatprep.subr.bf16.mxu0 0
        %4132 = vmatpush1.bf16.msra.mxu0 %v4067
        %4133 = vmatprep.subr.bf16.mxu0 0
        %4134 = vmatpush1.bf16.msra.mxu0 %v4068
        %4135 = vmatprep.subr.bf16.mxu0 0
        %4136 = vmatpush1.bf16.msra.mxu0 %v4069
        %4137 = vmatprep.subr.bf16.mxu0 0
        %4138 = vmatpush1.bf16.msra.mxu0 %v4070
        %4139 = vmatprep.subr.bf16.mxu0 0
        %4140 = vmatpush1.bf16.msra.mxu0 %v4071
        %4141 = vmatprep.subr.bf16.mxu0 0
        %4142 = vmatpush1.bf16.msra.mxu0 %v4072
        %4143 = vmatprep.subr.bf16.mxu0 0
        %4144 = vmatpush1.bf16.msra.mxu0 %v4073
        %4145 = vmatprep.subr.bf16.mxu0 0
        %4146 = vmatpush1.bf16.msra.mxu0 %v4074
        %4147 = vmatprep.subr.bf16.mxu0 0
        %4148 = vmatpush1.bf16.msra.mxu0 %v4075
        %4149 = vmatprep.subr.bf16.mxu0 0
        %4150 = vmatpush1.bf16.msra.mxu0 %v4076
        %4151 = vmatprep.subr.bf16.mxu0 0
        %4152 = vmatpush1.bf16.msra.mxu0 %v4077
        %4153 = vmatprep.subr.bf16.mxu0 0
        %4154 = vmatpush1.bf16.msra.mxu0 %v4078
        %4155 = vmatprep.subr.bf16.mxu0 0
        %4156 = vmatpush1.bf16.msra.mxu0 %v4079
        %4157 = vmatprep.subr.bf16.mxu0 0
        %4158 = vmatpush1.bf16.msra.mxu0 %v4080
        %4159 = vmatprep.subr.bf16.mxu0 0
        %4160 = vmatpush1.bf16.msra.mxu0 %v4081
        %4161 = vmatprep.subr.bf16.mxu0 0
        %4162 = vmatpush1.bf16.msra.mxu0 %v4082
        %4163 = vmatprep.mubr.bf16.mxu0 %v3872
        %4164 = vmatmul.mubr.bf16.gmra.mrb[0].mxu0 %v3871
        %v4165 = vpop.f32.mrb[0].mxu0
        %v4166 = vadd.f32 0.0, %v4165
        %v4167 = vpop.f32.mrb[0].mxu0
        %v4168 = vpop.f32.mrb[0].mxu0
        %v4169 = vadd.f32 0.0, %v4168
        %v4170 = vpop.f32.mrb[0].mxu0
        %4171 = vdwg.mxu0
        %4172 = vmatprep.subr.bf16.mxu0 0
        %4173 = vmatpush1.bf16.msra.mxu0 %v4083
        %4174 = vmatprep.subr.bf16.mxu0 0
        %4175 = vmatpush1.bf16.msra.mxu0 %v4084
        %4176 = vmatprep.subr.bf16.mxu0 0
        %4177 = vmatpush1.bf16.msra.mxu0 %v4085
        %4178 = vmatprep.subr.bf16.mxu0 0
        %4179 = vmatpush1.bf16.msra.mxu0 %v4086
        %4180 = vmatprep.subr.bf16.mxu0 0
        %4181 = vmatpush1.bf16.msra.mxu0 %v4087
        %4182 = vmatprep.subr.bf16.mxu0 0
        %4183 = vmatpush1.bf16.msra.mxu0 %v4088
        %4184 = vmatprep.subr.bf16.mxu0 0
        %4185 = vmatpush1.bf16.msra.mxu0 %v4089
        %4186 = vmatprep.subr.bf16.mxu0 0
        %4187 = vmatpush1.bf16.msra.mxu0 %v4090
        %4188 = vmatprep.subr.bf16.mxu0 0
        %4189 = vmatpush1.bf16.msra.mxu0 %v4091
        %4190 = vmatprep.subr.bf16.mxu0 0
        %4191 = vmatpush1.bf16.msra.mxu0 %v4092
        %4192 = vmatprep.subr.bf16.mxu0 0
        %4193 = vmatpush1.bf16.msra.mxu0 %v4093
        %4194 = vmatprep.subr.bf16.mxu0 0
        %4195 = vmatpush1.bf16.msra.mxu0 %v4094
        %4196 = vmatprep.subr.bf16.mxu0 0
        %4197 = vmatpush1.bf16.msra.mxu0 %v4095
        %4198 = vmatprep.subr.bf16.mxu0 0
        %4199 = vmatpush1.bf16.msra.mxu0 %v4096
        %4200 = vmatprep.subr.bf16.mxu0 0
        %4201 = vmatpush1.bf16.msra.mxu0 %v4097
        %4202 = vmatprep.subr.bf16.mxu0 0
        %4203 = vmatpush1.bf16.msra.mxu0 %v4098
        %4204 = vmatprep.mubr.bf16.mxu0 %v3874
        %4205 = vmatmul.mubr.bf16.gmra.mrb[0].mxu0 %v3873
        %v4206 = vpop.f32.mrb[0].mxu0
        %v4207 = vadd.f32 %v4166, %v4206
        %v4208 = vpop.f32.mrb[0].mxu0
        %v4209 = vpop.f32.mrb[0].mxu0
        %v4210 = vadd.f32 %v4169, %v4209
        %v4211 = vpop.f32.mrb[0].mxu0
        %4212 = vdwg.mxu0
        %v4277 = vunpack.c.l.b16 %v3643
        %v4278 = vunpack.c.l.b16 %v3644
        %v4279 = vunpack.c.l.b16 %v3645
        %v4280 = vunpack.c.l.b16 %v3646
        %v4281 = vunpack.c.l.b16 %v3647
        %v4282 = vunpack.c.l.b16 %v3648
        %v4283 = vunpack.c.l.b16 %v3649
        %v4284 = vunpack.c.l.b16 %v3650
        %v4285 = vunpack.c.l.b16 %v3651
        %v4286 = vunpack.c.l.b16 %v3652
        %v4287 = vunpack.c.l.b16 %v3653
        %v4288 = vunpack.c.l.b16 %v3654
        %v4289 = vunpack.c.l.b16 %v3655
        %v4290 = vunpack.c.l.b16 %v3656
        %v4291 = vunpack.c.l.b16 %v3657
        %v4292 = vunpack.c.l.b16 %v3658
        %v4293 = vunpack.c.l.b16 %v3659
        %v4294 = vunpack.c.l.b16 %v3660
        %v4295 = vunpack.c.l.b16 %v3661
        %v4296 = vunpack.c.l.b16 %v3662
        %v4297 = vunpack.c.l.b16 %v3663
        %v4298 = vunpack.c.l.b16 %v3664
        %v4299 = vunpack.c.l.b16 %v3665
        %v4300 = vunpack.c.l.b16 %v3666
        %v4301 = vunpack.c.l.b16 %v3667
        %v4302 = vunpack.c.l.b16 %v3668
        %v4303 = vunpack.c.l.b16 %v3669
        %v4304 = vunpack.c.l.b16 %v3670
        %v4305 = vunpack.c.l.b16 %v3671
        %v4306 = vunpack.c.l.b16 %v3672
        %v4307 = vunpack.c.l.b16 %v3673
        %v4308 = vunpack.c.l.b16 %v3674
        %v4309 = vunpack.c.l.b16 %v3675
        %v4310 = vunpack.c.l.b16 %v3676
        %v4311 = vunpack.c.l.b16 %v3677
        %v4312 = vunpack.c.l.b16 %v3678
        %v4313 = vunpack.c.l.b16 %v3679
        %v4314 = vunpack.c.l.b16 %v3680
        %v4315 = vunpack.c.l.b16 %v3681
        %v4316 = vunpack.c.l.b16 %v3682
        %v4317 = vunpack.c.l.b16 %v3683
        %v4318 = vunpack.c.l.b16 %v3684
        %v4319 = vunpack.c.l.b16 %v3685
        %v4320 = vunpack.c.l.b16 %v3686
        %v4321 = vunpack.c.l.b16 %v3687
        %v4322 = vunpack.c.l.b16 %v3688
        %v4323 = vunpack.c.l.b16 %v3689
        %v4324 = vunpack.c.l.b16 %v3690
        %v4325 = vunpack.c.l.b16 %v3691
        %v4326 = vunpack.c.l.b16 %v3692
        %v4327 = vunpack.c.l.b16 %v3693
        %v4328 = vunpack.c.l.b16 %v3694
        %v4329 = vunpack.c.l.b16 %v3695
        %v4330 = vunpack.c.l.b16 %v3696
        %v4331 = vunpack.c.l.b16 %v3697
        %v4332 = vunpack.c.l.b16 %v3698
        %v4333 = vunpack.c.l.b16 %v3699
        %v4334 = vunpack.c.l.b16 %v3700
        %v4335 = vunpack.c.l.b16 %v3701
        %v4336 = vunpack.c.l.b16 %v3702
        %v4337 = vunpack.c.l.b16 %v3703
        %v4338 = vunpack.c.l.b16 %v3704
        %v4339 = vunpack.c.l.b16 %v3705
        %v4340 = vunpack.c.l.b16 %v3706
        %v4341 = vpack.c.b16 %v4278, %v4277
        %v4342 = vpack.c.b16 %v4280, %v4279
        %v4343 = vpack.c.b16 %v4282, %v4281
        %v4344 = vpack.c.b16 %v4284, %v4283
        %v4345 = vpack.c.b16 %v4286, %v4285
        %v4346 = vpack.c.b16 %v4288, %v4287
        %v4347 = vpack.c.b16 %v4290, %v4289
        %v4348 = vpack.c.b16 %v4292, %v4291
        %v4349 = vpack.c.b16 %v4294, %v4293
        %v4350 = vpack.c.b16 %v4296, %v4295
        %v4351 = vpack.c.b16 %v4298, %v4297
        %v4352 = vpack.c.b16 %v4300, %v4299
        %v4353 = vpack.c.b16 %v4302, %v4301
        %v4354 = vpack.c.b16 %v4304, %v4303
        %v4355 = vpack.c.b16 %v4306, %v4305
        %v4356 = vpack.c.b16 %v4308, %v4307
        %v4357 = vpack.c.b16 %v4310, %v4309
        %v4358 = vpack.c.b16 %v4312, %v4311
        %v4359 = vpack.c.b16 %v4314, %v4313
        %v4360 = vpack.c.b16 %v4316, %v4315
        %v4361 = vpack.c.b16 %v4318, %v4317
        %v4362 = vpack.c.b16 %v4320, %v4319
        %v4363 = vpack.c.b16 %v4322, %v4321
        %v4364 = vpack.c.b16 %v4324, %v4323
        %v4365 = vpack.c.b16 %v4326, %v4325
        %v4366 = vpack.c.b16 %v4328, %v4327
        %v4367 = vpack.c.b16 %v4330, %v4329
        %v4368 = vpack.c.b16 %v4332, %v4331
        %v4369 = vpack.c.b16 %v4334, %v4333
        %v4370 = vpack.c.b16 %v4336, %v4335
        %v4371 = vpack.c.b16 %v4338, %v4337
        %v4372 = vpack.c.b16 %v4340, %v4339
        %4405 = vmatprep.subr.bf16.mxu0 0
        %4406 = vmatpush1.bf16.msra.mxu0 %v4341
        %4407 = vmatprep.subr.bf16.mxu0 0
        %4408 = vmatpush1.bf16.msra.mxu0 %v4342
        %4409 = vmatprep.subr.bf16.mxu0 0
        %4410 = vmatpush1.bf16.msra.mxu0 %v4343
        %4411 = vmatprep.subr.bf16.mxu0 0
        %4412 = vmatpush1.bf16.msra.mxu0 %v4344
        %4413 = vmatprep.subr.bf16.mxu0 0
        %4414 = vmatpush1.bf16.msra.mxu0 %v4345
        %4415 = vmatprep.subr.bf16.mxu0 0
        %4416 = vmatpush1.bf16.msra.mxu0 %v4346
        %4417 = vmatprep.subr.bf16.mxu0 0
        %4418 = vmatpush1.bf16.msra.mxu0 %v4347
        %4419 = vmatprep.subr.bf16.mxu0 0
        %4420 = vmatpush1.bf16.msra.mxu0 %v4348
        %4421 = vmatprep.subr.bf16.mxu0 0
        %4422 = vmatpush1.bf16.msra.mxu0 %v4349
        %4423 = vmatprep.subr.bf16.mxu0 0
        %4424 = vmatpush1.bf16.msra.mxu0 %v4350
        %4425 = vmatprep.subr.bf16.mxu0 0
        %4426 = vmatpush1.bf16.msra.mxu0 %v4351
        %4427 = vmatprep.subr.bf16.mxu0 0
        %4428 = vmatpush1.bf16.msra.mxu0 %v4352
        %4429 = vmatprep.subr.bf16.mxu0 0
        %4430 = vmatpush1.bf16.msra.mxu0 %v4353
        %4431 = vmatprep.subr.bf16.mxu0 0
        %4432 = vmatpush1.bf16.msra.mxu0 %v4354
        %4433 = vmatprep.subr.bf16.mxu0 0
        %4434 = vmatpush1.bf16.msra.mxu0 %v4355
        %4435 = vmatprep.subr.bf16.mxu0 0
        %4436 = vmatpush1.bf16.msra.mxu0 %v4356
        %4437 = vmatprep.mubr.bf16.mxu0 %v3640
        %4438 = vmatmul.mubr.bf16.gmra.mrb[0].mxu0 %v3639
        %v4439 = vpop.f32.mrb[0].mxu0
        %v4440 = vadd.f32 %v4207, %v4439
        %v4441 = vpop.f32.mrb[0].mxu0
        %v4442 = vpop.f32.mrb[0].mxu0
        %v4443 = vadd.f32 %v4210, %v4442
        %v4444 = vpop.f32.mrb[0].mxu0
        %4445 = vdwg.mxu0
        %4446 = vmatprep.subr.bf16.mxu0 0
        %4447 = vmatpush1.bf16.msra.mxu0 %v4357
        %4448 = vmatprep.subr.bf16.mxu0 0
        %4449 = vmatpush1.bf16.msra.mxu0 %v4358
        %4450 = vmatprep.subr.bf16.mxu0 0
        %4451 = vmatpush1.bf16.msra.mxu0 %v4359
        %4452 = vmatprep.subr.bf16.mxu0 0
        %4453 = vmatpush1.bf16.msra.mxu0 %v4360
        %4454 = vmatprep.subr.bf16.mxu0 0
        %4455 = vmatpush1.bf16.msra.mxu0 %v4361
        %4456 = vmatprep.subr.bf16.mxu0 0
        %4457 = vmatpush1.bf16.msra.mxu0 %v4362
        %4458 = vmatprep.subr.bf16.mxu0 0
        %4459 = vmatpush1.bf16.msra.mxu0 %v4363
        %4460 = vmatprep.subr.bf16.mxu0 0
        %4461 = vmatpush1.bf16.msra.mxu0 %v4364
        %4462 = vmatprep.subr.bf16.mxu0 0
        %4463 = vmatpush1.bf16.msra.mxu0 %v4365
        %4464 = vmatprep.subr.bf16.mxu0 0
        %4465 = vmatpush1.bf16.msra.mxu0 %v4366
        %4466 = vmatprep.subr.bf16.mxu0 0
        %4467 = vmatpush1.bf16.msra.mxu0 %v4367
        %4468 = vmatprep.subr.bf16.mxu0 0
        %4469 = vmatpush1.bf16.msra.mxu0 %v4368
        %4470 = vmatprep.subr.bf16.mxu0 0
        %4471 = vmatpush1.bf16.msra.mxu0 %v4369
        %4472 = vmatprep.subr.bf16.mxu0 0
        %4473 = vmatpush1.bf16.msra.mxu0 %v4370
        %4474 = vmatprep.subr.bf16.mxu0 0
        %4475 = vmatpush1.bf16.msra.mxu0 %v4371
        %4476 = vmatprep.subr.bf16.mxu0 0
        %4477 = vmatpush1.bf16.msra.mxu0 %v4372
        %4478 = vmatprep.mubr.bf16.mxu0 %v3642
        %4479 = vmatmul.mubr.bf16.gmra.mrb[0].mxu0 %v3641
        %v4480 = vpop.f32.mrb[0].mxu0
        %v4481 = vadd.f32 %v4440, %v4480
        %v4482 = vpop.f32.mrb[0].mxu0
        %v4483 = vpop.f32.mrb[0].mxu0
        %v4484 = vadd.f32 %v4443, %v4483
        %v4485 = vpop.f32.mrb[0].mxu0
        %4486 = vdwg.mxu0
        %v4487 = vld [vmem:[%s1066 + $0x20] sm:$0xff]
        %v4488 = vld [vmem:[%s1066 + $0x28] sm:$0xff]
        %v4489 = vld [vmem:[%s1066 + $0x60] sm:$0xff]
        %v4490 = vld [vmem:[%s1066 + $0x68] sm:$0xff]
        %v4491 = vld [vmem:[%s1066 + $0xa0] sm:$0xff]
        %v4492 = vld [vmem:[%s1066 + $0xa8] sm:$0xff]
        %v4493 = vld [vmem:[%s1066 + $0xe0] sm:$0xff]
        %v4494 = vld [vmem:[%s1066 + $0xe8] sm:$0xff]
        %v4495 = vld [vmem:[%s1070 + $0x8] sm:$0xf]
        %v4497 = vlaneseq
        %v4498 = vshrl.u32 %v4497, 7
        %v4499 = vsub.s32 0, %v4498
        %v4500 = vrot.slane %v4495, %v4499
        %v4501 = vlaneseq
        %v4502 = vshrl.u32 %v4501, 7
        %v4503 = vsub.s32 1, %v4502
        %v4504 = vrot.slane %v4495, %v4503
        %v4505 = vlaneseq
        %v4506 = vshrl.u32 %v4505, 7
        %v4507 = vsub.s32 2, %v4506
        %v4508 = vrot.slane %v4495, %v4507
        %v4509 = vlaneseq
        %v4510 = vshrl.u32 %v4509, 7
        %v4511 = vsub.s32 3, %v4510
        %v4512 = vrot.slane %v4495, %v4511
        %v4525 = vunpack.c.l.b16 %v4487
        %v4526 = vunpack.c.h.b16 %v4487
        %v4527 = vunpack.c.l.b16 %v4488
        %v4528 = vunpack.c.h.b16 %v4488
        %v4529 = vunpack.c.l.b16 %v4489
        %v4530 = vunpack.c.h.b16 %v4489
        %v4531 = vunpack.c.l.b16 %v4490
        %v4532 = vunpack.c.h.b16 %v4490
        %v4533 = vunpack.c.l.b16 %v4491
        %v4534 = vunpack.c.h.b16 %v4491
        %v4535 = vunpack.c.l.b16 %v4492
        %v4536 = vunpack.c.h.b16 %v4492
        %v4537 = vunpack.c.l.b16 %v4493
        %v4538 = vunpack.c.h.b16 %v4493
        %v4539 = vunpack.c.l.b16 %v4494
        %v4540 = vunpack.c.h.b16 %v4494
        %v4541 = vpack.c.b16 %v4529, %v4525
        %v4542 = vpack.c.b16 %v4530, %v4526
        %v4543 = vpack.c.b16 %v4531, %v4527
        %v4544 = vpack.c.b16 %v4532, %v4528
        %v4545 = vpack.c.b16 %v4537, %v4533
        %v4546 = vpack.c.b16 %v4538, %v4534
        %v4547 = vpack.c.b16 %v4539, %v4535
        %v4548 = vpack.c.b16 %v4540, %v4536
        %4557 = vmatprep.subr.bf16.mxu0 %v4542
        %4558 = vmatpush1.bf16.msra.mxu0 %v4541
        %4559 = vmatprep.subr.bf16.mxu0 %v4546
        %4560 = vmatpush1.bf16.msra.mxu0 %v4545
        %4561 = vmatprep.subr.bf16.mxu0 0
        %4562 = vmatpush1.bf16.msra.mxu0 0
        %4563 = vmatprep.subr.bf16.mxu0 0
        %4564 = vmatpush1.bf16.msra.mxu0 0
        %4565 = vmatprep.subr.bf16.mxu0 0
        %4566 = vmatpush1.bf16.msra.mxu0 0
        %4567 = vmatprep.subr.bf16.mxu0 0
        %4568 = vmatpush1.bf16.msra.mxu0 0
        %4569 = vmatprep.subr.bf16.mxu0 0
        %4570 = vmatpush1.bf16.msra.mxu0 0
        %4571 = vmatprep.subr.bf16.mxu0 0
        %4572 = vmatpush1.bf16.msra.mxu0 0
        %4573 = vmatprep.subr.bf16.mxu0 0
        %4574 = vmatpush1.bf16.msra.mxu0 0
        %4575 = vmatprep.subr.bf16.mxu0 0
        %4576 = vmatpush1.bf16.msra.mxu0 0
        %4577 = vmatprep.subr.bf16.mxu0 0
        %4578 = vmatpush1.bf16.msra.mxu0 0
        %4579 = vmatprep.subr.bf16.mxu0 0
        %4580 = vmatpush1.bf16.msra.mxu0 0
        %4581 = vmatprep.subr.bf16.mxu0 0
        %4582 = vmatpush1.bf16.msra.mxu0 0
        %4583 = vmatprep.subr.bf16.mxu0 0
        %4584 = vmatpush1.bf16.msra.mxu0 0
        %4585 = vmatprep.subr.bf16.mxu0 0
        %4586 = vmatpush1.bf16.msra.mxu0 0
        %4587 = vmatprep.subr.bf16.mxu0 0
        %4588 = vmatpush1.bf16.msra.mxu0 0
        %4589 = vmatprep.mubr.bf16.mxu0 0
        %4590 = vmatmul.mubr.bf16.gmra.mrb[0].mxu0 %v3543
        %v4591 = vpop.f32.mrb[0].mxu0
        %v4592 = vadd.f32 %v4500, %v4591
        %v4593 = vpop.f32.mrb[0].mxu0
        %v4594 = vadd.f32 %v4504, %v4593
        %v4595 = vpop.f32.mrb[0].mxu0
        %v4596 = vadd.f32 %v4500, %v4595
        %v4597 = vpop.f32.mrb[0].mxu0
        %v4598 = vadd.f32 %v4504, %v4597
        %4599 = vdwg.mxu0
        %4600 = vmatprep.subr.bf16.mxu0 %v4544
        %4601 = vmatpush1.bf16.msra.mxu0 %v4543
        %4602 = vmatprep.subr.bf16.mxu0 %v4548
        %4603 = vmatpush1.bf16.msra.mxu0 %v4547
        %4604 = vmatprep.subr.bf16.mxu0 0
        %4605 = vmatpush1.bf16.msra.mxu0 0
        %4606 = vmatprep.subr.bf16.mxu0 0
        %4607 = vmatpush1.bf16.msra.mxu0 0
        %4608 = vmatprep.subr.bf16.mxu0 0
        %4609 = vmatpush1.bf16.msra.mxu0 0
        %4610 = vmatprep.subr.bf16.mxu0 0
        %4611 = vmatpush1.bf16.msra.mxu0 0
        %4612 = vmatprep.subr.bf16.mxu0 0
        %4613 = vmatpush1.bf16.msra.mxu0 0
        %4614 = vmatprep.subr.bf16.mxu0 0
        %4615 = vmatpush1.bf16.msra.mxu0 0
        %4616 = vmatprep.subr.bf16.mxu0 0
        %4617 = vmatpush1.bf16.msra.mxu0 0
        %4618 = vmatprep.subr.bf16.mxu0 0
        %4619 = vmatpush1.bf16.msra.mxu0 0
        %4620 = vmatprep.subr.bf16.mxu0 0
        %4621 = vmatpush1.bf16.msra.mxu0 0
        %4622 = vmatprep.subr.bf16.mxu0 0
        %4623 = vmatpush1.bf16.msra.mxu0 0
        %4624 = vmatprep.subr.bf16.mxu0 0
        %4625 = vmatpush1.bf16.msra.mxu0 0
        %4626 = vmatprep.subr.bf16.mxu0 0
        %4627 = vmatpush1.bf16.msra.mxu0 0
        %4628 = vmatprep.subr.bf16.mxu0 0
        %4629 = vmatpush1.bf16.msra.mxu0 0
        %4630 = vmatprep.subr.bf16.mxu0 0
        %4631 = vmatpush1.bf16.msra.mxu0 0
        %4632 = vmatprep.mubr.bf16.mxu0 0
        %4633 = vmatmul.mubr.bf16.gmra.mrb[0].mxu0 %v3543
        %v4634 = vpop.f32.mrb[0].mxu0
        %v4635 = vadd.f32 %v4508, %v4634
        %v4636 = vpop.f32.mrb[0].mxu0
        %v4637 = vadd.f32 %v4512, %v4636
        %v4638 = vpop.f32.mrb[0].mxu0
        %v4639 = vadd.f32 %v4508, %v4638
        %v4640 = vpop.f32.mrb[0].mxu0
        %v4641 = vadd.f32 %v4512, %v4640
        %4642 = vdwg.mxu0
        %v4643 = vmax.f32 %v4592, 0.0
        %v4644 = vmax.f32 %v4594, 0.0
        %v4645 = vmax.f32 %v4635, 0.0
        %v4646 = vmax.f32 %v4637, 0.0
        %v4647 = vmax.f32 %v4596, 0.0
        %v4648 = vmax.f32 %v4598, 0.0
        %v4649 = vmax.f32 %v4639, 0.0
        %v4650 = vmax.f32 %v4641, 0.0
        %v4651 = vpack.c.bf16 %v4647, %v4643
        %v4652 = vpack.c.bf16 %v4648, %v4644
        %v4653 = vpack.c.bf16 %v4649, %v4645
        %v4654 = vpack.c.bf16 %v4650, %v4646
        %v4655 = vld [vmem:[%s1075 + $0x200] sm:$0xf]
        %v4656 = vld [vmem:[%s1075 + $0x204] sm:$0xf]
        %v4657 = vld [vmem:[%s1075 + $0x208] sm:$0xf]
        %v4658 = vld [vmem:[%s1075 + $0x20c] sm:$0xf]
        %v4659 = vld [vmem:[%s1075 + $0x210] sm:$0xf]
        %v4660 = vld [vmem:[%s1075 + $0x214] sm:$0xf]
        %v4661 = vld [vmem:[%s1075 + $0x218] sm:$0xf]
        %v4662 = vld [vmem:[%s1075 + $0x21c] sm:$0xf]
        %v4663 = vld [vmem:[%s1075 + $0x220] sm:$0xf]
        %v4664 = vld [vmem:[%s1075 + $0x224] sm:$0xf]
        %v4665 = vld [vmem:[%s1075 + $0x228] sm:$0xf]
        %v4666 = vld [vmem:[%s1075 + $0x22c] sm:$0xf]
        %v4667 = vld [vmem:[%s1075 + $0x230] sm:$0xf]
        %v4668 = vld [vmem:[%s1075 + $0x234] sm:$0xf]
        %v4669 = vld [vmem:[%s1075 + $0x238] sm:$0xf]
        %v4670 = vld [vmem:[%s1075 + $0x23c] sm:$0xf]
        %v4671 = vld [vmem:[%s1075 + $0x240] sm:$0xf]
        %v4672 = vld [vmem:[%s1075 + $0x244] sm:$0xf]
        %v4673 = vld [vmem:[%s1075 + $0x248] sm:$0xf]
        %v4674 = vld [vmem:[%s1075 + $0x24c] sm:$0xf]
        %v4675 = vld [vmem:[%s1075 + $0x250] sm:$0xf]
        %v4676 = vld [vmem:[%s1075 + $0x254] sm:$0xf]
        %v4677 = vld [vmem:[%s1075 + $0x258] sm:$0xf]
        %v4678 = vld [vmem:[%s1075 + $0x25c] sm:$0xf]
        %v4679 = vld [vmem:[%s1075 + $0x260] sm:$0xf]
        %v4680 = vld [vmem:[%s1075 + $0x264] sm:$0xf]
        %v4681 = vld [vmem:[%s1075 + $0x268] sm:$0xf]
        %v4682 = vld [vmem:[%s1075 + $0x26c] sm:$0xf]
        %v4683 = vld [vmem:[%s1075 + $0x270] sm:$0xf]
        %v4684 = vld [vmem:[%s1075 + $0x274] sm:$0xf]
        %v4685 = vld [vmem:[%s1075 + $0x278] sm:$0xf]
        %v4686 = vld [vmem:[%s1075 + $0x27c] sm:$0xf]
        %v4687 = vld [vmem:[%s1075 + $0x280] sm:$0xf]
        %v4688 = vld [vmem:[%s1075 + $0x284] sm:$0xf]
        %v4689 = vld [vmem:[%s1075 + $0x288] sm:$0xf]
        %v4690 = vld [vmem:[%s1075 + $0x28c] sm:$0xf]
        %v4691 = vld [vmem:[%s1075 + $0x290] sm:$0xf]
        %v4692 = vld [vmem:[%s1075 + $0x294] sm:$0xf]
        %v4693 = vld [vmem:[%s1075 + $0x298] sm:$0xf]
        %v4694 = vld [vmem:[%s1075 + $0x29c] sm:$0xf]
        %v4695 = vld [vmem:[%s1075 + $0x2a0] sm:$0xf]
        %v4696 = vld [vmem:[%s1075 + $0x2a4] sm:$0xf]
        %v4697 = vld [vmem:[%s1075 + $0x2a8] sm:$0xf]
        %v4698 = vld [vmem:[%s1075 + $0x2ac] sm:$0xf]
        %v4699 = vld [vmem:[%s1075 + $0x2b0] sm:$0xf]
        %v4700 = vld [vmem:[%s1075 + $0x2b4] sm:$0xf]
        %v4701 = vld [vmem:[%s1075 + $0x2b8] sm:$0xf]
        %v4702 = vld [vmem:[%s1075 + $0x2bc] sm:$0xf]
        %v4703 = vld [vmem:[%s1075 + $0x2c0] sm:$0xf]
        %v4704 = vld [vmem:[%s1075 + $0x2c4] sm:$0xf]
        %v4705 = vld [vmem:[%s1075 + $0x2c8] sm:$0xf]
        %v4706 = vld [vmem:[%s1075 + $0x2cc] sm:$0xf]
        %v4707 = vld [vmem:[%s1075 + $0x2d0] sm:$0xf]
        %v4708 = vld [vmem:[%s1075 + $0x2d4] sm:$0xf]
        %v4709 = vld [vmem:[%s1075 + $0x2d8] sm:$0xf]
        %v4710 = vld [vmem:[%s1075 + $0x2dc] sm:$0xf]
        %v4711 = vld [vmem:[%s1075 + $0x2e0] sm:$0xf]
        %v4712 = vld [vmem:[%s1075 + $0x2e4] sm:$0xf]
        %v4713 = vld [vmem:[%s1075 + $0x2e8] sm:$0xf]
        %v4714 = vld [vmem:[%s1075 + $0x2ec] sm:$0xf]
        %v4715 = vld [vmem:[%s1075 + $0x2f0] sm:$0xf]
        %v4716 = vld [vmem:[%s1075 + $0x2f4] sm:$0xf]
        %v4717 = vld [vmem:[%s1075 + $0x2f8] sm:$0xf]
        %v4718 = vld [vmem:[%s1075 + $0x2fc] sm:$0xf]
        %v4783 = vunpack.c.l.b16 %v4655
        %v4784 = vunpack.c.l.b16 %v4656
        %v4785 = vunpack.c.l.b16 %v4657
        %v4786 = vunpack.c.l.b16 %v4658
        %v4787 = vunpack.c.l.b16 %v4659
        %v4788 = vunpack.c.l.b16 %v4660
        %v4789 = vunpack.c.l.b16 %v4661
        %v4790 = vunpack.c.l.b16 %v4662
        %v4791 = vunpack.c.l.b16 %v4663
        %v4792 = vunpack.c.l.b16 %v4664
        %v4793 = vunpack.c.l.b16 %v4665
        %v4794 = vunpack.c.l.b16 %v4666
        %v4795 = vunpack.c.l.b16 %v4667
        %v4796 = vunpack.c.l.b16 %v4668
        %v4797 = vunpack.c.l.b16 %v4669
        %v4798 = vunpack.c.l.b16 %v4670
        %v4799 = vunpack.c.l.b16 %v4671
        %v4800 = vunpack.c.l.b16 %v4672
        %v4801 = vunpack.c.l.b16 %v4673
        %v4802 = vunpack.c.l.b16 %v4674
        %v4803 = vunpack.c.l.b16 %v4675
        %v4804 = vunpack.c.l.b16 %v4676
        %v4805 = vunpack.c.l.b16 %v4677
        %v4806 = vunpack.c.l.b16 %v4678
        %v4807 = vunpack.c.l.b16 %v4679
        %v4808 = vunpack.c.l.b16 %v4680
        %v4809 = vunpack.c.l.b16 %v4681
        %v4810 = vunpack.c.l.b16 %v4682
        %v4811 = vunpack.c.l.b16 %v4683
        %v4812 = vunpack.c.l.b16 %v4684
        %v4813 = vunpack.c.l.b16 %v4685
        %v4814 = vunpack.c.l.b16 %v4686
        %v4815 = vunpack.c.l.b16 %v4687
        %v4816 = vunpack.c.l.b16 %v4688
        %v4817 = vunpack.c.l.b16 %v4689
        %v4818 = vunpack.c.l.b16 %v4690
        %v4819 = vunpack.c.l.b16 %v4691
        %v4820 = vunpack.c.l.b16 %v4692
        %v4821 = vunpack.c.l.b16 %v4693
        %v4822 = vunpack.c.l.b16 %v4694
        %v4823 = vunpack.c.l.b16 %v4695
        %v4824 = vunpack.c.l.b16 %v4696
        %v4825 = vunpack.c.l.b16 %v4697
        %v4826 = vunpack.c.l.b16 %v4698
        %v4827 = vunpack.c.l.b16 %v4699
        %v4828 = vunpack.c.l.b16 %v4700
        %v4829 = vunpack.c.l.b16 %v4701
        %v4830 = vunpack.c.l.b16 %v4702
        %v4831 = vunpack.c.l.b16 %v4703
        %v4832 = vunpack.c.l.b16 %v4704
        %v4833 = vunpack.c.l.b16 %v4705
        %v4834 = vunpack.c.l.b16 %v4706
        %v4835 = vunpack.c.l.b16 %v4707
        %v4836 = vunpack.c.l.b16 %v4708
        %v4837 = vunpack.c.l.b16 %v4709
        %v4838 = vunpack.c.l.b16 %v4710
        %v4839 = vunpack.c.l.b16 %v4711
        %v4840 = vunpack.c.l.b16 %v4712
        %v4841 = vunpack.c.l.b16 %v4713
        %v4842 = vunpack.c.l.b16 %v4714
        %v4843 = vunpack.c.l.b16 %v4715
        %v4844 = vunpack.c.l.b16 %v4716
        %v4845 = vunpack.c.l.b16 %v4717
        %v4846 = vunpack.c.l.b16 %v4718
        %v4847 = vpack.c.b16 %v4784, %v4783
        %v4848 = vpack.c.b16 %v4786, %v4785
        %v4849 = vpack.c.b16 %v4788, %v4787
        %v4850 = vpack.c.b16 %v4790, %v4789
        %v4851 = vpack.c.b16 %v4792, %v4791
        %v4852 = vpack.c.b16 %v4794, %v4793
        %v4853 = vpack.c.b16 %v4796, %v4795
        %v4854 = vpack.c.b16 %v4798, %v4797
        %v4855 = vpack.c.b16 %v4800, %v4799
        %v4856 = vpack.c.b16 %v4802, %v4801
        %v4857 = vpack.c.b16 %v4804, %v4803
        %v4858 = vpack.c.b16 %v4806, %v4805
        %v4859 = vpack.c.b16 %v4808, %v4807
        %v4860 = vpack.c.b16 %v4810, %v4809
        %v4861 = vpack.c.b16 %v4812, %v4811
        %v4862 = vpack.c.b16 %v4814, %v4813
        %v4863 = vpack.c.b16 %v4816, %v4815
        %v4864 = vpack.c.b16 %v4818, %v4817
        %v4865 = vpack.c.b16 %v4820, %v4819
        %v4866 = vpack.c.b16 %v4822, %v4821
        %v4867 = vpack.c.b16 %v4824, %v4823
        %v4868 = vpack.c.b16 %v4826, %v4825
        %v4869 = vpack.c.b16 %v4828, %v4827
        %v4870 = vpack.c.b16 %v4830, %v4829
        %v4871 = vpack.c.b16 %v4832, %v4831
        %v4872 = vpack.c.b16 %v4834, %v4833
        %v4873 = vpack.c.b16 %v4836, %v4835
        %v4874 = vpack.c.b16 %v4838, %v4837
        %v4875 = vpack.c.b16 %v4840, %v4839
        %v4876 = vpack.c.b16 %v4842, %v4841
        %v4877 = vpack.c.b16 %v4844, %v4843
        %v4878 = vpack.c.b16 %v4846, %v4845
        %4911 = vmatprep.subr.bf16.mxu0 0
        %4912 = vmatpush1.bf16.msra.mxu0 %v4847
        %4913 = vmatprep.subr.bf16.mxu0 0
        %4914 = vmatpush1.bf16.msra.mxu0 %v4848
        %4915 = vmatprep.subr.bf16.mxu0 0
        %4916 = vmatpush1.bf16.msra.mxu0 %v4849
        %4917 = vmatprep.subr.bf16.mxu0 0
        %4918 = vmatpush1.bf16.msra.mxu0 %v4850
        %4919 = vmatprep.subr.bf16.mxu0 0
        %4920 = vmatpush1.bf16.msra.mxu0 %v4851
        %4921 = vmatprep.subr.bf16.mxu0 0
        %4922 = vmatpush1.bf16.msra.mxu0 %v4852
        %4923 = vmatprep.subr.bf16.mxu0 0
        %4924 = vmatpush1.bf16.msra.mxu0 %v4853
        %4925 = vmatprep.subr.bf16.mxu0 0
        %4926 = vmatpush1.bf16.msra.mxu0 %v4854
        %4927 = vmatprep.subr.bf16.mxu0 0
        %4928 = vmatpush1.bf16.msra.mxu0 %v4855
        %4929 = vmatprep.subr.bf16.mxu0 0
        %4930 = vmatpush1.bf16.msra.mxu0 %v4856
        %4931 = vmatprep.subr.bf16.mxu0 0
        %4932 = vmatpush1.bf16.msra.mxu0 %v4857
        %4933 = vmatprep.subr.bf16.mxu0 0
        %4934 = vmatpush1.bf16.msra.mxu0 %v4858
        %4935 = vmatprep.subr.bf16.mxu0 0
        %4936 = vmatpush1.bf16.msra.mxu0 %v4859
        %4937 = vmatprep.subr.bf16.mxu0 0
        %4938 = vmatpush1.bf16.msra.mxu0 %v4860
        %4939 = vmatprep.subr.bf16.mxu0 0
        %4940 = vmatpush1.bf16.msra.mxu0 %v4861
        %4941 = vmatprep.subr.bf16.mxu0 0
        %4942 = vmatpush1.bf16.msra.mxu0 %v4862
        %4943 = vmatprep.mubr.bf16.mxu0 %v4652
        %4944 = vmatmul.mubr.bf16.gmra.mrb[0].mxu0 %v4651
        %v4945 = vpop.f32.mrb[0].mxu0
        %v4946 = vadd.f32 0.0, %v4945
        %v4947 = vpop.f32.mrb[0].mxu0
        %v4948 = vpop.f32.mrb[0].mxu0
        %v4949 = vadd.f32 0.0, %v4948
        %v4950 = vpop.f32.mrb[0].mxu0
        %4951 = vdwg.mxu0
        %4952 = vmatprep.subr.bf16.mxu0 0
        %4953 = vmatpush1.bf16.msra.mxu0 %v4863
        %4954 = vmatprep.subr.bf16.mxu0 0
        %4955 = vmatpush1.bf16.msra.mxu0 %v4864
        %4956 = vmatprep.subr.bf16.mxu0 0
        %4957 = vmatpush1.bf16.msra.mxu0 %v4865
        %4958 = vmatprep.subr.bf16.mxu0 0
        %4959 = vmatpush1.bf16.msra.mxu0 %v4866
        %4960 = vmatprep.subr.bf16.mxu0 0
        %4961 = vmatpush1.bf16.msra.mxu0 %v4867
        %4962 = vmatprep.subr.bf16.mxu0 0
        %4963 = vmatpush1.bf16.msra.mxu0 %v4868
        %4964 = vmatprep.subr.bf16.mxu0 0
        %4965 = vmatpush1.bf16.msra.mxu0 %v4869
        %4966 = vmatprep.subr.bf16.mxu0 0
        %4967 = vmatpush1.bf16.msra.mxu0 %v4870
        %4968 = vmatprep.subr.bf16.mxu0 0
        %4969 = vmatpush1.bf16.msra.mxu0 %v4871
        %4970 = vmatprep.subr.bf16.mxu0 0
        %4971 = vmatpush1.bf16.msra.mxu0 %v4872
        %4972 = vmatprep.subr.bf16.mxu0 0
        %4973 = vmatpush1.bf16.msra.mxu0 %v4873
        %4974 = vmatprep.subr.bf16.mxu0 0
        %4975 = vmatpush1.bf16.msra.mxu0 %v4874
        %4976 = vmatprep.subr.bf16.mxu0 0
        %4977 = vmatpush1.bf16.msra.mxu0 %v4875
        %4978 = vmatprep.subr.bf16.mxu0 0
        %4979 = vmatpush1.bf16.msra.mxu0 %v4876
        %4980 = vmatprep.subr.bf16.mxu0 0
        %4981 = vmatpush1.bf16.msra.mxu0 %v4877
        %4982 = vmatprep.subr.bf16.mxu0 0
        %4983 = vmatpush1.bf16.msra.mxu0 %v4878
        %4984 = vmatprep.mubr.bf16.mxu0 %v4654
        %4985 = vmatmul.mubr.bf16.gmra.mrb[0].mxu0 %v4653
        %v4986 = vpop.f32.mrb[0].mxu0
        %v4987 = vadd.f32 %v4946, %v4986
        %v4988 = vpop.f32.mrb[0].mxu0
        %v4989 = vpop.f32.mrb[0].mxu0
        %v4990 = vadd.f32 %v4949, %v4989
        %v4991 = vpop.f32.mrb[0].mxu0
        %4992 = vdwg.mxu0
        %v4993 = vadd.f32 %v4481, %v4987
        %v4994 = vadd.f32 %v4484, %v4990
        %v4995 = vld [vmem:[%s1066 + $0x30] sm:$0xff]
        %v4996 = vld [vmem:[%s1066 + $0x38] sm:$0xff]
        %v4997 = vld [vmem:[%s1066 + $0x70] sm:$0xff]
        %v4998 = vld [vmem:[%s1066 + $0x78] sm:$0xff]
        %v4999 = vld [vmem:[%s1066 + $0xb0] sm:$0xff]
        %v5000 = vld [vmem:[%s1066 + $0xb8] sm:$0xff]
        %v5001 = vld [vmem:[%s1066 + $0xf0] sm:$0xff]
        %v5002 = vld [vmem:[%s1066 + $0xf8] sm:$0xff]
        %v5003 = vld [vmem:[%s1070 + $0xc] sm:$0xf]
        %v5005 = vlaneseq
        %v5006 = vshrl.u32 %v5005, 7
        %v5007 = vsub.s32 0, %v5006
        %v5008 = vrot.slane %v5003, %v5007
        %v5009 = vlaneseq
        %v5010 = vshrl.u32 %v5009, 7
        %v5011 = vsub.s32 1, %v5010
        %v5012 = vrot.slane %v5003, %v5011
        %v5013 = vlaneseq
        %v5014 = vshrl.u32 %v5013, 7
        %v5015 = vsub.s32 2, %v5014
        %v5016 = vrot.slane %v5003, %v5015
        %v5017 = vlaneseq
        %v5018 = vshrl.u32 %v5017, 7
        %v5019 = vsub.s32 3, %v5018
        %v5020 = vrot.slane %v5003, %v5019
        %v5033 = vunpack.c.l.b16 %v4995
        %v5034 = vunpack.c.h.b16 %v4995
        %v5035 = vunpack.c.l.b16 %v4996
        %v5036 = vunpack.c.h.b16 %v4996
        %v5037 = vunpack.c.l.b16 %v4997
        %v5038 = vunpack.c.h.b16 %v4997
        %v5039 = vunpack.c.l.b16 %v4998
        %v5040 = vunpack.c.h.b16 %v4998
        %v5041 = vunpack.c.l.b16 %v4999
        %v5042 = vunpack.c.h.b16 %v4999
        %v5043 = vunpack.c.l.b16 %v5000
        %v5044 = vunpack.c.h.b16 %v5000
        %v5045 = vunpack.c.l.b16 %v5001
        %v5046 = vunpack.c.h.b16 %v5001
        %v5047 = vunpack.c.l.b16 %v5002
        %v5048 = vunpack.c.h.b16 %v5002
        %v5049 = vpack.c.b16 %v5037, %v5033
        %v5050 = vpack.c.b16 %v5038, %v5034
        %v5051 = vpack.c.b16 %v5039, %v5035
        %v5052 = vpack.c.b16 %v5040, %v5036
        %v5053 = vpack.c.b16 %v5045, %v5041
        %v5054 = vpack.c.b16 %v5046, %v5042
        %v5055 = vpack.c.b16 %v5047, %v5043
        %v5056 = vpack.c.b16 %v5048, %v5044
        %5065 = vmatprep.subr.bf16.mxu0 %v5050
        %5066 = vmatpush1.bf16.msra.mxu0 %v5049
        %5067 = vmatprep.subr.bf16.mxu0 %v5054
        %5068 = vmatpush1.bf16.msra.mxu0 %v5053
        %5069 = vmatprep.subr.bf16.mxu0 0
        %5070 = vmatpush1.bf16.msra.mxu0 0
        %5071 = vmatprep.subr.bf16.mxu0 0
        %5072 = vmatpush1.bf16.msra.mxu0 0
        %5073 = vmatprep.subr.bf16.mxu0 0
        %5074 = vmatpush1.bf16.msra.mxu0 0
        %5075 = vmatprep.subr.bf16.mxu0 0
        %5076 = vmatpush1.bf16.msra.mxu0 0
        %5077 = vmatprep.subr.bf16.mxu0 0
        %5078 = vmatpush1.bf16.msra.mxu0 0
        %5079 = vmatprep.subr.bf16.mxu0 0
        %5080 = vmatpush1.bf16.msra.mxu0 0
        %5081 = vmatprep.subr.bf16.mxu0 0
        %5082 = vmatpush1.bf16.msra.mxu0 0
        %5083 = vmatprep.subr.bf16.mxu0 0
        %5084 = vmatpush1.bf16.msra.mxu0 0
        %5085 = vmatprep.subr.bf16.mxu0 0
        %5086 = vmatpush1.bf16.msra.mxu0 0
        %5087 = vmatprep.subr.bf16.mxu0 0
        %5088 = vmatpush1.bf16.msra.mxu0 0
        %5089 = vmatprep.subr.bf16.mxu0 0
        %5090 = vmatpush1.bf16.msra.mxu0 0
        %5091 = vmatprep.subr.bf16.mxu0 0
        %5092 = vmatpush1.bf16.msra.mxu0 0
        %5093 = vmatprep.subr.bf16.mxu0 0
        %5094 = vmatpush1.bf16.msra.mxu0 0
        %5095 = vmatprep.subr.bf16.mxu0 0
        %5096 = vmatpush1.bf16.msra.mxu0 0
        %5097 = vmatprep.mubr.bf16.mxu0 0
        %5098 = vmatmul.mubr.bf16.gmra.mrb[0].mxu0 %v3543
        %v5099 = vpop.f32.mrb[0].mxu0
        %v5100 = vadd.f32 %v5008, %v5099
        %v5101 = vpop.f32.mrb[0].mxu0
        %v5102 = vadd.f32 %v5012, %v5101
        %v5103 = vpop.f32.mrb[0].mxu0
        %v5104 = vadd.f32 %v5008, %v5103
        %v5105 = vpop.f32.mrb[0].mxu0
        %v5106 = vadd.f32 %v5012, %v5105
        %5107 = vdwg.mxu0
        %5108 = vmatprep.subr.bf16.mxu0 %v5052
        %5109 = vmatpush1.bf16.msra.mxu0 %v5051
        %5110 = vmatprep.subr.bf16.mxu0 %v5056
        %5111 = vmatpush1.bf16.msra.mxu0 %v5055
        %5112 = vmatprep.subr.bf16.mxu0 0
        %5113 = vmatpush1.bf16.msra.mxu0 0
        %5114 = vmatprep.subr.bf16.mxu0 0
        %5115 = vmatpush1.bf16.msra.mxu0 0
        %5116 = vmatprep.subr.bf16.mxu0 0
        %5117 = vmatpush1.bf16.msra.mxu0 0
        %5118 = vmatprep.subr.bf16.mxu0 0
        %5119 = vmatpush1.bf16.msra.mxu0 0
        %5120 = vmatprep.subr.bf16.mxu0 0
        %5121 = vmatpush1.bf16.msra.mxu0 0
        %5122 = vmatprep.subr.bf16.mxu0 0
        %5123 = vmatpush1.bf16.msra.mxu0 0
        %5124 = vmatprep.subr.bf16.mxu0 0
        %5125 = vmatpush1.bf16.msra.mxu0 0
        %5126 = vmatprep.subr.bf16.mxu0 0
        %5127 = vmatpush1.bf16.msra.mxu0 0
        %5128 = vmatprep.subr.bf16.mxu0 0
        %5129 = vmatpush1.bf16.msra.mxu0 0
        %5130 = vmatprep.subr.bf16.mxu0 0
        %5131 = vmatpush1.bf16.msra.mxu0 0
        %5132 = vmatprep.subr.bf16.mxu0 0
        %5133 = vmatpush1.bf16.msra.mxu0 0
        %5134 = vmatprep.subr.bf16.mxu0 0
        %5135 = vmatpush1.bf16.msra.mxu0 0
        %5136 = vmatprep.subr.bf16.mxu0 0
        %5137 = vmatpush1.bf16.msra.mxu0 0
        %5138 = vmatprep.subr.bf16.mxu0 0
        %5139 = vmatpush1.bf16.msra.mxu0 0
        %5140 = vmatprep.mubr.bf16.mxu0 0
        %5141 = vmatmul.mubr.bf16.gmra.mrb[0].mxu0 %v3543
        %v5142 = vpop.f32.mrb[0].mxu0
        %v5143 = vadd.f32 %v5016, %v5142
        %v5144 = vpop.f32.mrb[0].mxu0
        %v5145 = vadd.f32 %v5020, %v5144
        %v5146 = vpop.f32.mrb[0].mxu0
        %v5147 = vadd.f32 %v5016, %v5146
        %v5148 = vpop.f32.mrb[0].mxu0
        %v5149 = vadd.f32 %v5020, %v5148
        %5150 = vdwg.mxu0
        %v5151 = vmax.f32 %v5100, 0.0
        %v5152 = vmax.f32 %v5102, 0.0
        %v5153 = vmax.f32 %v5143, 0.0
        %v5154 = vmax.f32 %v5145, 0.0
        %v5155 = vmax.f32 %v5104, 0.0
        %v5156 = vmax.f32 %v5106, 0.0
        %v5157 = vmax.f32 %v5147, 0.0
        %v5158 = vmax.f32 %v5149, 0.0
        %v5159 = vpack.c.bf16 %v5155, %v5151
        %v5160 = vpack.c.bf16 %v5156, %v5152
        %v5161 = vpack.c.bf16 %v5157, %v5153
        %v5162 = vpack.c.bf16 %v5158, %v5154
        %v5163 = vld [vmem:[%s1075 + $0x300] sm:$0xf]
        %v5164 = vld [vmem:[%s1075 + $0x304] sm:$0xf]
        %v5165 = vld [vmem:[%s1075 + $0x308] sm:$0xf]
        %v5166 = vld [vmem:[%s1075 + $0x30c] sm:$0xf]
        %v5167 = vld [vmem:[%s1075 + $0x310] sm:$0xf]
        %v5168 = vld [vmem:[%s1075 + $0x314] sm:$0xf]
        %v5169 = vld [vmem:[%s1075 + $0x318] sm:$0xf]
        %v5170 = vld [vmem:[%s1075 + $0x31c] sm:$0xf]
        %v5171 = vld [vmem:[%s1075 + $0x320] sm:$0xf]
        %v5172 = vld [vmem:[%s1075 + $0x324] sm:$0xf]
        %v5173 = vld [vmem:[%s1075 + $0x328] sm:$0xf]
        %v5174 = vld [vmem:[%s1075 + $0x32c] sm:$0xf]
        %v5175 = vld [vmem:[%s1075 + $0x330] sm:$0xf]
        %v5176 = vld [vmem:[%s1075 + $0x334] sm:$0xf]
        %v5177 = vld [vmem:[%s1075 + $0x338] sm:$0xf]
        %v5178 = vld [vmem:[%s1075 + $0x33c] sm:$0xf]
        %v5179 = vld [vmem:[%s1075 + $0x340] sm:$0xf]
        %v5180 = vld [vmem:[%s1075 + $0x344] sm:$0xf]
        %v5181 = vld [vmem:[%s1075 + $0x348] sm:$0xf]
        %v5182 = vld [vmem:[%s1075 + $0x34c] sm:$0xf]
        %v5183 = vld [vmem:[%s1075 + $0x350] sm:$0xf]
        %v5184 = vld [vmem:[%s1075 + $0x354] sm:$0xf]
        %v5185 = vld [vmem:[%s1075 + $0x358] sm:$0xf]
        %v5186 = vld [vmem:[%s1075 + $0x35c] sm:$0xf]
        %v5187 = vld [vmem:[%s1075 + $0x360] sm:$0xf]
        %v5188 = vld [vmem:[%s1075 + $0x364] sm:$0xf]
        %v5189 = vld [vmem:[%s1075 + $0x368] sm:$0xf]
        %v5190 = vld [vmem:[%s1075 + $0x36c] sm:$0xf]
        %v5191 = vld [vmem:[%s1075 + $0x370] sm:$0xf]
        %v5192 = vld [vmem:[%s1075 + $0x374] sm:$0xf]
        %v5193 = vld [vmem:[%s1075 + $0x378] sm:$0xf]
        %v5194 = vld [vmem:[%s1075 + $0x37c] sm:$0xf]
        %v5195 = vld [vmem:[%s1075 + $0x380] sm:$0xf]
        %v5196 = vld [vmem:[%s1075 + $0x384] sm:$0xf]
        %v5197 = vld [vmem:[%s1075 + $0x388] sm:$0xf]
        %v5198 = vld [vmem:[%s1075 + $0x38c] sm:$0xf]
        %v5199 = vld [vmem:[%s1075 + $0x390] sm:$0xf]
        %v5200 = vld [vmem:[%s1075 + $0x394] sm:$0xf]
        %v5201 = vld [vmem:[%s1075 + $0x398] sm:$0xf]
        %v5202 = vld [vmem:[%s1075 + $0x39c] sm:$0xf]
        %v5203 = vld [vmem:[%s1075 + $0x3a0] sm:$0xf]
        %v5204 = vld [vmem:[%s1075 + $0x3a4] sm:$0xf]
        %v5205 = vld [vmem:[%s1075 + $0x3a8] sm:$0xf]
        %v5206 = vld [vmem:[%s1075 + $0x3ac] sm:$0xf]
        %v5207 = vld [vmem:[%s1075 + $0x3b0] sm:$0xf]
        %v5208 = vld [vmem:[%s1075 + $0x3b4] sm:$0xf]
        %v5209 = vld [vmem:[%s1075 + $0x3b8] sm:$0xf]
        %v5210 = vld [vmem:[%s1075 + $0x3bc] sm:$0xf]
        %v5211 = vld [vmem:[%s1075 + $0x3c0] sm:$0xf]
        %v5212 = vld [vmem:[%s1075 + $0x3c4] sm:$0xf]
        %v5213 = vld [vmem:[%s1075 + $0x3c8] sm:$0xf]
        %v5214 = vld [vmem:[%s1075 + $0x3cc] sm:$0xf]
        %v5215 = vld [vmem:[%s1075 + $0x3d0] sm:$0xf]
        %v5216 = vld [vmem:[%s1075 + $0x3d4] sm:$0xf]
        %v5217 = vld [vmem:[%s1075 + $0x3d8] sm:$0xf]
        %v5218 = vld [vmem:[%s1075 + $0x3dc] sm:$0xf]
        %v5219 = vld [vmem:[%s1075 + $0x3e0] sm:$0xf]
        %v5220 = vld [vmem:[%s1075 + $0x3e4] sm:$0xf]
        %v5221 = vld [vmem:[%s1075 + $0x3e8] sm:$0xf]
        %v5222 = vld [vmem:[%s1075 + $0x3ec] sm:$0xf]
        %v5223 = vld [vmem:[%s1075 + $0x3f0] sm:$0xf]
        %v5224 = vld [vmem:[%s1075 + $0x3f4] sm:$0xf]
        %v5225 = vld [vmem:[%s1075 + $0x3f8] sm:$0xf]
        %v5226 = vld [vmem:[%s1075 + $0x3fc] sm:$0xf]
        %v5291 = vunpack.c.l.b16 %v5163
        %v5292 = vunpack.c.l.b16 %v5164
        %v5293 = vunpack.c.l.b16 %v5165
        %v5294 = vunpack.c.l.b16 %v5166
        %v5295 = vunpack.c.l.b16 %v5167
        %v5296 = vunpack.c.l.b16 %v5168
        %v5297 = vunpack.c.l.b16 %v5169
        %v5298 = vunpack.c.l.b16 %v5170
        %v5299 = vunpack.c.l.b16 %v5171
        %v5300 = vunpack.c.l.b16 %v5172
        %v5301 = vunpack.c.l.b16 %v5173
        %v5302 = vunpack.c.l.b16 %v5174
        %v5303 = vunpack.c.l.b16 %v5175
        %v5304 = vunpack.c.l.b16 %v5176
        %v5305 = vunpack.c.l.b16 %v5177
        %v5306 = vunpack.c.l.b16 %v5178
        %v5307 = vunpack.c.l.b16 %v5179
        %v5308 = vunpack.c.l.b16 %v5180
        %v5309 = vunpack.c.l.b16 %v5181
        %v5310 = vunpack.c.l.b16 %v5182
        %v5311 = vunpack.c.l.b16 %v5183
        %v5312 = vunpack.c.l.b16 %v5184
        %v5313 = vunpack.c.l.b16 %v5185
        %v5314 = vunpack.c.l.b16 %v5186
        %v5315 = vunpack.c.l.b16 %v5187
        %v5316 = vunpack.c.l.b16 %v5188
        %v5317 = vunpack.c.l.b16 %v5189
        %v5318 = vunpack.c.l.b16 %v5190
        %v5319 = vunpack.c.l.b16 %v5191
        %v5320 = vunpack.c.l.b16 %v5192
        %v5321 = vunpack.c.l.b16 %v5193
        %v5322 = vunpack.c.l.b16 %v5194
        %v5323 = vunpack.c.l.b16 %v5195
        %v5324 = vunpack.c.l.b16 %v5196
        %v5325 = vunpack.c.l.b16 %v5197
        %v5326 = vunpack.c.l.b16 %v5198
        %v5327 = vunpack.c.l.b16 %v5199
        %v5328 = vunpack.c.l.b16 %v5200
        %v5329 = vunpack.c.l.b16 %v5201
        %v5330 = vunpack.c.l.b16 %v5202
        %v5331 = vunpack.c.l.b16 %v5203
        %v5332 = vunpack.c.l.b16 %v5204
        %v5333 = vunpack.c.l.b16 %v5205
        %v5334 = vunpack.c.l.b16 %v5206
        %v5335 = vunpack.c.l.b16 %v5207
        %v5336 = vunpack.c.l.b16 %v5208
        %v5337 = vunpack.c.l.b16 %v5209
        %v5338 = vunpack.c.l.b16 %v5210
        %v5339 = vunpack.c.l.b16 %v5211
        %v5340 = vunpack.c.l.b16 %v5212
        %v5341 = vunpack.c.l.b16 %v5213
        %v5342 = vunpack.c.l.b16 %v5214
        %v5343 = vunpack.c.l.b16 %v5215
        %v5344 = vunpack.c.l.b16 %v5216
        %v5345 = vunpack.c.l.b16 %v5217
        %v5346 = vunpack.c.l.b16 %v5218
        %v5347 = vunpack.c.l.b16 %v5219
        %v5348 = vunpack.c.l.b16 %v5220
        %v5349 = vunpack.c.l.b16 %v5221
        %v5350 = vunpack.c.l.b16 %v5222
        %v5351 = vunpack.c.l.b16 %v5223
        %v5352 = vunpack.c.l.b16 %v5224
        %v5353 = vunpack.c.l.b16 %v5225
        %v5354 = vunpack.c.l.b16 %v5226
        %v5355 = vpack.c.b16 %v5292, %v5291
        %v5356 = vpack.c.b16 %v5294, %v5293
        %v5357 = vpack.c.b16 %v5296, %v5295
        %v5358 = vpack.c.b16 %v5298, %v5297
        %v5359 = vpack.c.b16 %v5300, %v5299
        %v5360 = vpack.c.b16 %v5302, %v5301
        %v5361 = vpack.c.b16 %v5304, %v5303
        %v5362 = vpack.c.b16 %v5306, %v5305
        %v5363 = vpack.c.b16 %v5308, %v5307
        %v5364 = vpack.c.b16 %v5310, %v5309
        %v5365 = vpack.c.b16 %v5312, %v5311
        %v5366 = vpack.c.b16 %v5314, %v5313
        %v5367 = vpack.c.b16 %v5316, %v5315
        %v5368 = vpack.c.b16 %v5318, %v5317
        %v5369 = vpack.c.b16 %v5320, %v5319
        %v5370 = vpack.c.b16 %v5322, %v5321
        %v5371 = vpack.c.b16 %v5324, %v5323
        %v5372 = vpack.c.b16 %v5326, %v5325
        %v5373 = vpack.c.b16 %v5328, %v5327
        %v5374 = vpack.c.b16 %v5330, %v5329
        %v5375 = vpack.c.b16 %v5332, %v5331
        %v5376 = vpack.c.b16 %v5334, %v5333
        %v5377 = vpack.c.b16 %v5336, %v5335
        %v5378 = vpack.c.b16 %v5338, %v5337
        %v5379 = vpack.c.b16 %v5340, %v5339
        %v5380 = vpack.c.b16 %v5342, %v5341
        %v5381 = vpack.c.b16 %v5344, %v5343
        %v5382 = vpack.c.b16 %v5346, %v5345
        %v5383 = vpack.c.b16 %v5348, %v5347
        %v5384 = vpack.c.b16 %v5350, %v5349
        %v5385 = vpack.c.b16 %v5352, %v5351
        %v5386 = vpack.c.b16 %v5354, %v5353
        %5419 = vmatprep.subr.bf16.mxu0 0
        %5420 = vmatpush1.bf16.msra.mxu0 %v5355
        %5421 = vmatprep.subr.bf16.mxu0 0
        %5422 = vmatpush1.bf16.msra.mxu0 %v5356
        %5423 = vmatprep.subr.bf16.mxu0 0
        %5424 = vmatpush1.bf16.msra.mxu0 %v5357
        %5425 = vmatprep.subr.bf16.mxu0 0
        %5426 = vmatpush1.bf16.msra.mxu0 %v5358
        %5427 = vmatprep.subr.bf16.mxu0 0
        %5428 = vmatpush1.bf16.msra.mxu0 %v5359
        %5429 = vmatprep.subr.bf16.mxu0 0
        %5430 = vmatpush1.bf16.msra.mxu0 %v5360
        %5431 = vmatprep.subr.bf16.mxu0 0
        %5432 = vmatpush1.bf16.msra.mxu0 %v5361
        %5433 = vmatprep.subr.bf16.mxu0 0
        %5434 = vmatpush1.bf16.msra.mxu0 %v5362
        %5435 = vmatprep.subr.bf16.mxu0 0
        %5436 = vmatpush1.bf16.msra.mxu0 %v5363
        %5437 = vmatprep.subr.bf16.mxu0 0
        %5438 = vmatpush1.bf16.msra.mxu0 %v5364
        %5439 = vmatprep.subr.bf16.mxu0 0
        %5440 = vmatpush1.bf16.msra.mxu0 %v5365
        %5441 = vmatprep.subr.bf16.mxu0 0
        %5442 = vmatpush1.bf16.msra.mxu0 %v5366
        %5443 = vmatprep.subr.bf16.mxu0 0
        %5444 = vmatpush1.bf16.msra.mxu0 %v5367
        %5445 = vmatprep.subr.bf16.mxu0 0
        %5446 = vmatpush1.bf16.msra.mxu0 %v5368
        %5447 = vmatprep.subr.bf16.mxu0 0
        %5448 = vmatpush1.bf16.msra.mxu0 %v5369
        %5449 = vmatprep.subr.bf16.mxu0 0
        %5450 = vmatpush1.bf16.msra.mxu0 %v5370
        %5451 = vmatprep.mubr.bf16.mxu0 %v5160
        %5452 = vmatmul.mubr.bf16.gmra.mrb[0].mxu0 %v5159
        %v5453 = vpop.f32.mrb[0].mxu0
        %v5454 = vadd.f32 0.0, %v5453
        %v5455 = vpop.f32.mrb[0].mxu0
        %v5456 = vpop.f32.mrb[0].mxu0
        %v5457 = vadd.f32 0.0, %v5456
        %v5458 = vpop.f32.mrb[0].mxu0
        %5459 = vdwg.mxu0
        %5460 = vmatprep.subr.bf16.mxu0 0
        %5461 = vmatpush1.bf16.msra.mxu0 %v5371
        %5462 = vmatprep.subr.bf16.mxu0 0
        %5463 = vmatpush1.bf16.msra.mxu0 %v5372
        %5464 = vmatprep.subr.bf16.mxu0 0
        %5465 = vmatpush1.bf16.msra.mxu0 %v5373
        %5466 = vmatprep.subr.bf16.mxu0 0
        %5467 = vmatpush1.bf16.msra.mxu0 %v5374
        %5468 = vmatprep.subr.bf16.mxu0 0
        %5469 = vmatpush1.bf16.msra.mxu0 %v5375
        %5470 = vmatprep.subr.bf16.mxu0 0
        %5471 = vmatpush1.bf16.msra.mxu0 %v5376
        %5472 = vmatprep.subr.bf16.mxu0 0
        %5473 = vmatpush1.bf16.msra.mxu0 %v5377
        %5474 = vmatprep.subr.bf16.mxu0 0
        %5475 = vmatpush1.bf16.msra.mxu0 %v5378
        %5476 = vmatprep.subr.bf16.mxu0 0
        %5477 = vmatpush1.bf16.msra.mxu0 %v5379
        %5478 = vmatprep.subr.bf16.mxu0 0
        %5479 = vmatpush1.bf16.msra.mxu0 %v5380
        %5480 = vmatprep.subr.bf16.mxu0 0
        %5481 = vmatpush1.bf16.msra.mxu0 %v5381
        %5482 = vmatprep.subr.bf16.mxu0 0
        %5483 = vmatpush1.bf16.msra.mxu0 %v5382
        %5484 = vmatprep.subr.bf16.mxu0 0
        %5485 = vmatpush1.bf16.msra.mxu0 %v5383
        %5486 = vmatprep.subr.bf16.mxu0 0
        %5487 = vmatpush1.bf16.msra.mxu0 %v5384
        %5488 = vmatprep.subr.bf16.mxu0 0
        %5489 = vmatpush1.bf16.msra.mxu0 %v5385
        %5490 = vmatprep.subr.bf16.mxu0 0
        %5491 = vmatpush1.bf16.msra.mxu0 %v5386
        %5492 = vmatprep.mubr.bf16.mxu0 %v5162
        %5493 = vmatmul.mubr.bf16.gmra.mrb[0].mxu0 %v5161
        %v5494 = vpop.f32.mrb[0].mxu0
        %v5495 = vadd.f32 %v5454, %v5494
        %v5496 = vpop.f32.mrb[0].mxu0
        %v5497 = vpop.f32.mrb[0].mxu0
        %v5498 = vadd.f32 %v5457, %v5497
        %v5499 = vpop.f32.mrb[0].mxu0
        %5500 = vdwg.mxu0
        %v5501 = vadd.f32 %v4993, %v5495
        %v5502 = vadd.f32 %v4994, %v5498
        %v5503 = vld [vmem:[%s1078] sm:$0x1]
        %v5505 = vlaneseq
        %v5506 = vshrl.u32 %v5505, 7
        %v5507 = vsub.s32 0, %v5506
        %v5508 = vrot.slane %v5503, %v5507
        %v5510 = vadd.f32 %v5501, %v5508
        %v5511 = vadd.f32 %v5502, %v5508
        %v5512 = vadd.f32 %v3469, %v5510
        %v5513 = vadd.f32 %v3470, %v5511
        %v5514 = vld [vmem:[%s1081] sm:$0x1]
        %v5515 = vld [vmem:[%s1084] sm:$0x1]
        %v5516 = vsel %vm1153, %v5512, 0.0
        %5517 = vadd.xlane.f32.xlu0 %v5516
        %v5518 = vpop.xlane.xlu0 %5517
        %v5519 = vsel %vm1153, %v5513, 0.0
        %5520 = vadd.xlane.f32.xlu0 %v5519
        %v5521 = vpop.xlane.xlu0 %5520
        %v5522 = vmul.f32 %v5518, %v2240
        %v5523 = vmul.f32 %v5521, %v2240
        %v5524 = vsub.f32 %v5512, %v5522
        %v5525 = vsub.f32 %v5513, %v5523
        %v5526 = vmul.f32 %v5524, %v5524
        %v5527 = vmul.f32 %v5525, %v5525
        %v5528 = vsel %vm1153, %v5526, 0.0
        %5529 = vadd.xlane.f32.xlu0 %v5528
        %v5530 = vpop.xlane.xlu0 %5529
        %v5531 = vsel %vm1153, %v5527, 0.0
        %5532 = vadd.xlane.f32.xlu0 %v5531
        %v5533 = vpop.xlane.xlu0 %5532
        %v5534 = vmul.f32 %v5530, %v2240
        %v5535 = vmul.f32 %v5533, %v2240
        %v5536 = vadd.f32 %v5534, 1e-05
        %v5537 = vadd.f32 %v5535, 1e-05
        %v5538 = vrsqrt.pop %v5536
        %v5539 = vrsqrt.pop %v5537
        %v5540 = vmul.f32 %v5524, %v5538
        %v5541 = vmul.f32 %v5525, %v5539
        %v5543 = vlaneseq
        %v5544 = vshrl.u32 %v5543, 7
        %v5545 = vsub.s32 0, %v5544
        %v5546 = vrot.slane %v5514, %v5545
        %v5548 = vmul.f32 %v5540, %v5546
        %v5549 = vmul.f32 %v5541, %v5546
        %v5551 = vlaneseq
        %v5552 = vshrl.u32 %v5551, 7
        %v5553 = vsub.s32 0, %v5552
        %v5554 = vrot.slane %v5515, %v5553
        %v5556 = vadd.f32 %v5548, %v5554
        %v5557 = vadd.f32 %v5549, %v5554
        %5558 = vst.msk [vmem:[#allocation2] sm:$0xff] %vm1153, %v5556
        %5559 = vst.msk [vmem:[#allocation2 + $0x8] sm:$0xff] %vm1153, %v5557
        %p5560 = scmp.eq.s32.totalorder %s40, 1
        // Predicated region
        $region117: #{tpu_custom_call.1} parent=111 // pred_check
          %p5561 = pneg %p5560
        $region118: #{tpu_custom_call.1} parent=111 // pred_check_branch
          %5563 = sbr.rel (%p5561) target = $region120
        $region119: #{tpu_custom_call.1} parent=111 // pred_region
          %5564 = vst.msk [vmem:[#allocation4] sm:$0xff] %vm1153, %v5556
          %5565 = vst.msk [vmem:[#allocation4 + $0x8] sm:$0xff] %vm1153, %v5557
        $region120: #{tpu_custom_call.1} parent=111 // pred_fallthru
          _
        // Predicated region
        $region121: #{tpu_custom_call.1} parent=111 // pred_check
          %p5566 = pneg %p663
        $region122: #{tpu_custom_call.1} parent=111 // pred_check_branch
          %5568 = sbr.rel (%p5566) target = $region124
        $region123: #{tpu_custom_call.1} parent=111 // pred_region
          %s5569 = smul.u32 2, %s39
          %s5571 = ssub.s32 256, 256
          %5572 = vsyncadd [#allocation5], %s5571
          %s5573 = smul.addr %s5569, 128
          %s5574 = scalar_lea.hbm %s23, %s5573
          %s5575 = sshll.u32 [#allocation4], 4
          %s5576 = int_to_ptr.vmem [resolvable:$true] %s5575
          %5581 = dma.vmem_to_hbm [thread:$0]  %s5576, 256, %s5574, [#allocation5], 128, 128, 8
        $region124: #{tpu_custom_call.1} parent=111 // pred_fallthru
          _
        // Predicated region
        $region125: #{tpu_custom_call.1} parent=111 // pred_check
          %p5582 = pneg %p663
        $region126: #{tpu_custom_call.1} parent=111 // pred_check_branch
          %5584 = sbr.rel (%p5582) target = $region128
        $region127: #{tpu_custom_call.1} parent=111 // pred_region
          %5585 = dma.done [#allocation5], 256
        $region128: #{tpu_custom_call.1} parent=111 // pred_fallthru
          _
      $region112: #{tpu_custom_call.1} parent=5 // pred_fallthru
        _
      %p5586 = scmp.le.s32.totalorder 2, %s30
      // Predicated region
      $region129: #{tpu_custom_call.1} parent=5 // pred_check
        %p5587 = pneg %p5586
      $region130: #{tpu_custom_call.1} parent=5 // pred_check_branch
        %5589 = sbr.rel (%p5587) target = $region132
      $region131: #{tpu_custom_call.1} parent=5 // pred_region
        %s5590 = ssub.s32 %s30, 2
      $region132: #{tpu_custom_call.1} parent=5 // pred_fallthru
        _
    $region6: #{tpu_custom_call.1} parent=1 // loop_footer
      %s34 = sadd.s32 1, %s30
    $region7: #{tpu_custom_call.1} parent=1 // loop_footer_branch
      %29 = sbr.rel target = $region3
    $region8: #{tpu_custom_call.1} parent=1 // loop_exit
      _
    %5591 = vsyncpa [#allocation5], 1
    %s5592 = scalar_lea.sflag [#allocation5], 1
    %5593 = vsyncpa %s5592, 1

</llo_original>
